<compile_context>
chip_gen: v5e
topology: v5e:2x2
jax: 0.10.0
libtpu: 0.0.40
codegen_flags: <defaults>
</compile_context>

<pallas_src>
import functools

import jax
import jax.numpy as jnp
from jax.experimental import pallas as pl
from jax.experimental.pallas import tpu as pltpu

KERNEL_DIM = 100
KERNEL_SIZES = (30, 40, 50)
OUTPUT_SIZE = 2


def _round_up(x, m):
    return ((x + m - 1) // m) * m


def _cnn_kernel(kernel_sizes, t_outs, t_pad, o_pad,
                x_ref, w0, b0, f0, w1, b1, f1, w2, b2, f2, fcb_ref,
                out_ref, r_ref):
    """One batch row: in-kernel im2col + conv(MXU) + bias + ReLU + max-pool + FC."""
    branches = ((w0, b0, f0), (w1, b1, f1), (w2, b2, f2))
    t_idx = jax.lax.broadcasted_iota(jnp.int32, (1, t_pad), 1)
    acc = jnp.zeros((1, o_pad), jnp.float32)

    for K, T, (w_ref, b_ref, f_ref) in zip(kernel_sizes, t_outs, branches):
        # In-kernel im2col: scratch row k holds x[b, k : k + T_pad], so that
        # r[k, t] = x[b, t + k].  Rows k >= K are zeroed (matching the zero
        # weight columns), keeping the contraction padded to K_pad with no NaNs.
        r_ref[...] = jnp.zeros_like(r_ref)
        for k in range(K):
            r_ref[k:k + 1, :] = x_ref[0, :, k:k + t_pad]

        # conv[c, t] = sum_k w[k, c] * x[b, t + k]  -- MXU-native bf16 matmul,
        # f32 accumulation.
        conv = jnp.dot(w_ref[...], r_ref[...].astype(jnp.bfloat16),
                       preferred_element_type=jnp.float32)
        conv = jnp.maximum(conv + b_ref[...], 0.0)        # bias + ReLU (f32, VPU)
        conv = jnp.where(t_idx < T, conv, 0.0)            # mask t >= T (safe: post-ReLU >= 0)
        pooled = jnp.max(conv, axis=1, keepdims=True)     # (C_pad, 1) max over time

        # FC partial for this branch on the VPU: out[o] += sum_c pooled[c] * W[c, o].
        # (replaces concat + single matmul; FLOP-identical, no lane relayout)
        acc = acc + jnp.sum(pooled * f_ref[...], axis=0, keepdims=True)

    out_ref[0, :, :] = (acc + fcb_ref[...]).astype(out_ref.dtype)   # lane-dense (1, 128)


def cnn_classifier_forward(x, params):
    B, L = x.shape
    k_max = max(KERNEL_SIZES)
    t_outs = tuple(L - K + 1 for K in KERNEL_SIZES)
    assert min(t_outs) >= 1, "sequence length must be >= max kernel size"

    C_PAD = _round_up(KERNEL_DIM, 128)          # 128 channels on lanes
    O_PAD = _round_up(OUTPUT_SIZE, 128)         # lane-dense output row
    K_PAD = _round_up(k_max, 64)                # common padded contraction
    T_PAD = _round_up(max(t_outs), 128)         # time positions on lanes
    L_PAD = _round_up(max(L, (k_max - 1) + T_PAD), 128)   # windows always in-bounds

    x_pad = jnp.pad(x, ((0, 0), (0, L_PAD - L))).reshape(B, 1, L_PAD)

    # Pad / transpose weights into the kernel layout; padding is zero everywhere
    # so padded channels / taps / outputs contribute exactly 0.
    w_ts, biases, fc_ws = [], [], []
    for i, K in enumerate(KERNEL_SIZES):
        w_t = jnp.zeros((C_PAD, K_PAD), jnp.float32)
        w_t = w_t.at[:KERNEL_DIM, :K].set(params["conv_w"][i].T)
        w_ts.append(w_t.astype(jnp.bfloat16))                       # MXU operand
        b = jnp.zeros((C_PAD, 1), jnp.float32)
        biases.append(b.at[:KERNEL_DIM, 0].set(params["conv_b"][i]))
        fw = jnp.zeros((C_PAD, O_PAD), jnp.float32)
        fc_ws.append(fw.at[:KERNEL_DIM, :OUTPUT_SIZE].set(
            params["fc_w"][i * KERNEL_DIM:(i + 1) * KERNEL_DIM, :]))
    fc_b = jnp.zeros((1, O_PAD), jnp.float32).at[0, :OUTPUT_SIZE].set(params["fc_b"])

    inputs = [x_pad]
    for i in range(len(KERNEL_SIZES)):
        inputs += [w_ts[i], biases[i], fc_ws[i]]
    inputs.append(fc_b)

    const = lambda b: (0, 0)                     # weights: VMEM-resident across steps
    in_specs = [pl.BlockSpec((1, 1, L_PAD), lambda b: (b, 0, 0))]
    for _ in KERNEL_SIZES:
        in_specs += [pl.BlockSpec((C_PAD, K_PAD), const),
                     pl.BlockSpec((C_PAD, 1), const),
                     pl.BlockSpec((C_PAD, O_PAD), const)]
    in_specs.append(pl.BlockSpec((1, O_PAD), const))

    nb = len(KERNEL_SIZES)
    flops = int(B * (nb * 2 * C_PAD * K_PAD * T_PAD + nb * 2 * C_PAD * O_PAD))
    bytes_accessed = int(x_pad.size * 4 + sum(w.size * 2 for w in w_ts)
                         + sum(b.size * 4 for b in biases)
                         + sum(f.size * 4 for f in fc_ws)
                         + fc_b.size * 4 + B * O_PAD * 4)

    kernel = functools.partial(_cnn_kernel, KERNEL_SIZES, t_outs, T_PAD, O_PAD)

    out = pl.pallas_call(
        kernel,
        out_shape=jax.ShapeDtypeStruct((B, 1, O_PAD), jnp.float32),
        grid=(B,),
        in_specs=in_specs,
        out_specs=pl.BlockSpec((1, 1, O_PAD), lambda b: (b, 0, 0)),
        scratch_shapes=[pltpu.VMEM((K_PAD, T_PAD), jnp.float32)],
        compiler_params=pltpu.CompilerParams(
            dimension_semantics=("parallel",),
            vmem_limit_bytes=32 * 1024 * 1024),
        cost_estimate=pl.CostEstimate(flops=flops, transcendentals=0,
                                      bytes_accessed=bytes_accessed),
    )(*inputs)
    return out.reshape(B, O_PAD)[:, :OUTPUT_SIZE]


def init_params(key):
    """Deterministic init mimicking PyTorch default uniform(-1/sqrt(fan_in), +)."""
    params = {"conv_w": [], "conv_b": []}
    for K in KERNEL_SIZES:
        key, k1, k2 = jax.random.split(key, 3)
        bound = 1.0 / (K ** 0.5)                 # fan_in = in_channels(1) * K * 1
        params["conv_w"].append(
            jax.random.uniform(k1, (K, KERNEL_DIM), jnp.float32, -bound, bound))
        params["conv_b"].append(
            jax.random.uniform(k2, (KERNEL_DIM,), jnp.float32, -bound, bound))
    key, k1, k2 = jax.random.split(key, 3)
    in_f = len(KERNEL_SIZES) * KERNEL_DIM
    bound = 1.0 / (in_f ** 0.5)
    # stored already transposed: (in_features, out_features)
    params["fc_w"] = jax.random.uniform(k1, (in_f, OUTPUT_SIZE), jnp.float32, -bound, bound)
    params["fc_b"] = jax.random.uniform(k2, (OUTPUT_SIZE,), jnp.float32, -bound, bound)
    return params


def reference_forward(x, params):
    """Pure-JAX f32 reference of the PyTorch forward (sanity check)."""
    pooled = []
    for i, K in enumerate(KERNEL_SIZES):
        T = x.shape[1] - K + 1
        idx = jnp.arange(T)[:, None] + jnp.arange(K)[None, :]      # (T, K)
        patches = x[:, idx]                                        # (B, T, K)
        conv = jnp.einsum("btk,kc->btc", patches, params["conv_w"][i],
                          precision=jax.lax.Precision.HIGHEST)
        conv = jnp.maximum(conv + params["conv_b"][i], 0.0)
        pooled.append(jnp.max(conv, axis=1))                       # (B, C)
    cat = jnp.concatenate(pooled, axis=1)
    return jnp.dot(cat, params["fc_w"],
                   precision=jax.lax.Precision.HIGHEST) + params["fc_b"]


if __name__ == "__main__":
    key = jax.random.PRNGKey(0)
    kx, kp = jax.random.split(key)

    B, L = 2, 64  # L must be >= max(KERNEL_SIZES)
    x = jax.random.normal(kx, (B, L), jnp.float32)
    params = init_params(kp)

    out = jax.block_until_ready(cnn_classifier_forward(x, params))
    ref = reference_forward(x, params)

    assert out.shape == (B, OUTPUT_SIZE)
    # bf16 MXU operands with f32 accumulation -> slightly looser tolerance than f32.
    assert jnp.allclose(out, ref, rtol=2e-2, atol=2e-2), (out, ref)

    print("KERNEL_OK")
</pallas_src>

<mosaic_0001>
module attributes {stable_mosaic.version = 11 : i64} {
  func.func @_cnn_kernel(%arg0: i32, %arg1: memref<1x1x256xf32, #tpu.memory_space<vmem>>, %arg2: memref<128x64xbf16, #tpu.memory_space<vmem>>, %arg3: memref<128x1xf32, #tpu.memory_space<vmem>>, %arg4: memref<128x128xf32, #tpu.memory_space<vmem>>, %arg5: memref<128x64xbf16, #tpu.memory_space<vmem>>, %arg6: memref<128x1xf32, #tpu.memory_space<vmem>>, %arg7: memref<128x128xf32, #tpu.memory_space<vmem>>, %arg8: memref<128x64xbf16, #tpu.memory_space<vmem>>, %arg9: memref<128x1xf32, #tpu.memory_space<vmem>>, %arg10: memref<128x128xf32, #tpu.memory_space<vmem>>, %arg11: memref<1x128xf32, #tpu.memory_space<vmem>>, %arg12: memref<1x1x128xf32, #tpu.memory_space<vmem>>, %arg13: memref<64x128xf32, #tpu.memory_space<vmem>>) attributes {dimension_semantics = [#tpu.dimension_semantics<parallel>], iteration_bounds = array<i64: 2>, scalar_prefetch = 0 : i64, scratch_operands = 1 : i64, tpu.core_type = #tpu.core_type<tc>, window_params = [{transform_indices = @transform_0, window_bounds = array<i64: 1, 1, 256>}, {pipeline_mode = #tpu.pipeline_mode<synchronous>, transform_indices = @transform_1, window_bounds = array<i64: 128, 64>}, {pipeline_mode = #tpu.pipeline_mode<synchronous>, transform_indices = @transform_2, window_bounds = array<i64: 128, 1>}, {pipeline_mode = #tpu.pipeline_mode<synchronous>, transform_indices = @transform_3, window_bounds = array<i64: 128, 128>}, {pipeline_mode = #tpu.pipeline_mode<synchronous>, transform_indices = @transform_4, window_bounds = array<i64: 128, 64>}, {pipeline_mode = #tpu.pipeline_mode<synchronous>, transform_indices = @transform_5, window_bounds = array<i64: 128, 1>}, {pipeline_mode = #tpu.pipeline_mode<synchronous>, transform_indices = @transform_6, window_bounds = array<i64: 128, 128>}, {pipeline_mode = #tpu.pipeline_mode<synchronous>, transform_indices = @transform_7, window_bounds = array<i64: 128, 64>}, {pipeline_mode = #tpu.pipeline_mode<synchronous>, transform_indices = @transform_8, window_bounds = array<i64: 128, 1>}, {pipeline_mode = #tpu.pipeline_mode<synchronous>, transform_indices = @transform_9, window_bounds = array<i64: 128, 128>}, {pipeline_mode = #tpu.pipeline_mode<synchronous>, transform_indices = @transform_10, window_bounds = array<i64: 1, 128>}, {transform_indices = @transform_11, window_bounds = array<i64: 1, 1, 128>}]} {
    %0 = tpu.iota {dimensions = array<i32: 1>} : vector<1x128xi32>
    %cst = arith.constant 0.000000e+00 : f32
    %1 = vector.broadcast %cst : f32 to vector<1x128xf32>
    %cst_0 = arith.constant 0.000000e+00 : f32
    %2 = vector.broadcast %cst_0 : f32 to vector<64x128xf32>
    %c0 = arith.constant 0 : index
    %c0_1 = arith.constant 0 : index
    %3 = vector.load %arg13[%c0, %c0_1] : memref<64x128xf32, #tpu.memory_space<vmem>>, vector<64x128xf32>
    tpu.vector_store %arg13[%c0, %c0_1], %2 {strides = array<i32>} : memref<64x128xf32, #tpu.memory_space<vmem>>, vector<64x128xf32>,
    %c0_2 = arith.constant 0 : index
    %c0_3 = arith.constant 0 : index
    %c0_4 = arith.constant 0 : index
    %4 = vector.load %arg1[%c0_2, %c0_3, %c0_4] : memref<1x1x256xf32, #tpu.memory_space<vmem>>, vector<1x1x128xf32>
    %5 = vector.shape_cast %4 : vector<1x1x128xf32> to vector<1x128xf32>
    %c0_5 = arith.constant 0 : index
    %c0_6 = arith.constant 0 : index
    %6 = vector.load %arg13[%c0_5, %c0_6] : memref<64x128xf32, #tpu.memory_space<vmem>>, vector<1x128xf32>
    tpu.vector_store %arg13[%c0_5, %c0_6], %5 {strides = array<i32>} : memref<64x128xf32, #tpu.memory_space<vmem>>, vector<1x128xf32>,
    %c0_7 = arith.constant 0 : index
    %c0_8 = arith.constant 0 : index
    %c1 = arith.constant 1 : index
    %7 = vector.load %arg1[%c0_7, %c0_8, %c1] : memref<1x1x256xf32, #tpu.memory_space<vmem>>, vector<1x1x128xf32>
    %8 = vector.shape_cast %7 : vector<1x1x128xf32> to vector<1x128xf32>
    %c1_9 = arith.constant 1 : index
    %c0_10 = arith.constant 0 : index
    %9 = vector.load %arg13[%c1_9, %c0_10] : memref<64x128xf32, #tpu.memory_space<vmem>>, vector<1x128xf32>
    tpu.vector_store %arg13[%c1_9, %c0_10], %8 {strides = array<i32>} : memref<64x128xf32, #tpu.memory_space<vmem>>, vector<1x128xf32>,
    %c0_11 = arith.constant 0 : index
    %c0_12 = arith.constant 0 : index
    %c2 = arith.constant 2 : index
    %10 = vector.load %arg1[%c0_11, %c0_12, %c2] : memref<1x1x256xf32, #tpu.memory_space<vmem>>, vector<1x1x128xf32>
    %11 = vector.shape_cast %10 : vector<1x1x128xf32> to vector<1x128xf32>
    %c2_13 = arith.constant 2 : index
    %c0_14 = arith.constant 0 : index
    %12 = vector.load %arg13[%c2_13, %c0_14] : memref<64x128xf32, #tpu.memory_space<vmem>>, vector<1x128xf32>
    tpu.vector_store %arg13[%c2_13, %c0_14], %11 {strides = array<i32>} : memref<64x128xf32, #tpu.memory_space<vmem>>, vector<1x128xf32>,
    %c0_15 = arith.constant 0 : index
    %c0_16 = arith.constant 0 : index
    %c3 = arith.constant 3 : index
    %13 = vector.load %arg1[%c0_15, %c0_16, %c3] : memref<1x1x256xf32, #tpu.memory_space<vmem>>, vector<1x1x128xf32>
    %14 = vector.shape_cast %13 : vector<1x1x128xf32> to vector<1x128xf32>
    %c3_17 = arith.constant 3 : index
    %c0_18 = arith.constant 0 : index
    %15 = vector.load %arg13[%c3_17, %c0_18] : memref<64x128xf32, #tpu.memory_space<vmem>>, vector<1x128xf32>
    tpu.vector_store %arg13[%c3_17, %c0_18], %14 {strides = array<i32>} : memref<64x128xf32, #tpu.memory_space<vmem>>, vector<1x128xf32>,
    %c0_19 = arith.constant 0 : index
    %c0_20 = arith.constant 0 : index
    %c4 = arith.constant 4 : index
    %16 = vector.load %arg1[%c0_19, %c0_20, %c4] : memref<1x1x256xf32, #tpu.memory_space<vmem>>, vector<1x1x128xf32>
    %17 = vector.shape_cast %16 : vector<1x1x128xf32> to vector<1x128xf32>
    %c4_21 = arith.constant 4 : index
    %c0_22 = arith.constant 0 : index
    %18 = vector.load %arg13[%c4_21, %c0_22] : memref<64x128xf32, #tpu.memory_space<vmem>>, vector<1x128xf32>
    tpu.vector_store %arg13[%c4_21, %c0_22], %17 {strides = array<i32>} : memref<64x128xf32, #tpu.memory_space<vmem>>, vector<1x128xf32>,
    %c0_23 = arith.constant 0 : index
    %c0_24 = arith.constant 0 : index
    %c5 = arith.constant 5 : index
    %19 = vector.load %arg1[%c0_23, %c0_24, %c5] : memref<1x1x256xf32, #tpu.memory_space<vmem>>, vector<1x1x128xf32>
    %20 = vector.shape_cast %19 : vector<1x1x128xf32> to vector<1x128xf32>
    %c5_25 = arith.constant 5 : index
    %c0_26 = arith.constant 0 : index
    %21 = vector.load %arg13[%c5_25, %c0_26] : memref<64x128xf32, #tpu.memory_space<vmem>>, vector<1x128xf32>
    tpu.vector_store %arg13[%c5_25, %c0_26], %20 {strides = array<i32>} : memref<64x128xf32, #tpu.memory_space<vmem>>, vector<1x128xf32>,
    %c0_27 = arith.constant 0 : index
    %c0_28 = arith.constant 0 : index
    %c6 = arith.constant 6 : index
    %22 = vector.load %arg1[%c0_27, %c0_28, %c6] : memref<1x1x256xf32, #tpu.memory_space<vmem>>, vector<1x1x128xf32>
    %23 = vector.shape_cast %22 : vector<1x1x128xf32> to vector<1x128xf32>
    %c6_29 = arith.constant 6 : index
    %c0_30 = arith.constant 0 : index
    %24 = vector.load %arg13[%c6_29, %c0_30] : memref<64x128xf32, #tpu.memory_space<vmem>>, vector<1x128xf32>
    tpu.vector_store %arg13[%c6_29, %c0_30], %23 {strides = array<i32>} : memref<64x128xf32, #tpu.memory_space<vmem>>, vector<1x128xf32>,
    %c0_31 = arith.constant 0 : index
    %c0_32 = arith.constant 0 : index
    %c7 = arith.constant 7 : index
    %25 = vector.load %arg1[%c0_31, %c0_32, %c7] : memref<1x1x256xf32, #tpu.memory_space<vmem>>, vector<1x1x128xf32>
    %26 = vector.shape_cast %25 : vector<1x1x128xf32> to vector<1x128xf32>
    %c7_33 = arith.constant 7 : index
    %c0_34 = arith.constant 0 : index
    %27 = vector.load %arg13[%c7_33, %c0_34] : memref<64x128xf32, #tpu.memory_space<vmem>>, vector<1x128xf32>
    tpu.vector_store %arg13[%c7_33, %c0_34], %26 {strides = array<i32>} : memref<64x128xf32, #tpu.memory_space<vmem>>, vector<1x128xf32>,
    %c0_35 = arith.constant 0 : index
    %c0_36 = arith.constant 0 : index
    %c8 = arith.constant 8 : index
    %28 = vector.load %arg1[%c0_35, %c0_36, %c8] : memref<1x1x256xf32, #tpu.memory_space<vmem>>, vector<1x1x128xf32>
    %29 = vector.shape_cast %28 : vector<1x1x128xf32> to vector<1x128xf32>
    %c8_37 = arith.constant 8 : index
    %c0_38 = arith.constant 0 : index
    %30 = vector.load %arg13[%c8_37, %c0_38] : memref<64x128xf32, #tpu.memory_space<vmem>>, vector<1x128xf32>
    tpu.vector_store %arg13[%c8_37, %c0_38], %29 {strides = array<i32>} : memref<64x128xf32, #tpu.memory_space<vmem>>, vector<1x128xf32>,
    %c0_39 = arith.constant 0 : index
    %c0_40 = arith.constant 0 : index
    %c9 = arith.constant 9 : index
    %31 = vector.load %arg1[%c0_39, %c0_40, %c9] : memref<1x1x256xf32, #tpu.memory_space<vmem>>, vector<1x1x128xf32>
    %32 = vector.shape_cast %31 : vector<1x1x128xf32> to vector<1x128xf32>
    %c9_41 = arith.constant 9 : index
    %c0_42 = arith.constant 0 : index
    %33 = vector.load %arg13[%c9_41, %c0_42] : memref<64x128xf32, #tpu.memory_space<vmem>>, vector<1x128xf32>
    tpu.vector_store %arg13[%c9_41, %c0_42], %32 {strides = array<i32>} : memref<64x128xf32, #tpu.memory_space<vmem>>, vector<1x128xf32>,
    %c0_43 = arith.constant 0 : index
    %c0_44 = arith.constant 0 : index
    %c10 = arith.constant 10 : index
    %34 = vector.load %arg1[%c0_43, %c0_44, %c10] : memref<1x1x256xf32, #tpu.memory_space<vmem>>, vector<1x1x128xf32>
    %35 = vector.shape_cast %34 : vector<1x1x128xf32> to vector<1x128xf32>
    %c10_45 = arith.constant 10 : index
    %c0_46 = arith.constant 0 : index
    %36 = vector.load %arg13[%c10_45, %c0_46] : memref<64x128xf32, #tpu.memory_space<vmem>>, vector<1x128xf32>
    tpu.vector_store %arg13[%c10_45, %c0_46], %35 {strides = array<i32>} : memref<64x128xf32, #tpu.memory_space<vmem>>, vector<1x128xf32>,
    %c0_47 = arith.constant 0 : index
    %c0_48 = arith.constant 0 : index
    %c11 = arith.constant 11 : index
    %37 = vector.load %arg1[%c0_47, %c0_48, %c11] : memref<1x1x256xf32, #tpu.memory_space<vmem>>, vector<1x1x128xf32>
    %38 = vector.shape_cast %37 : vector<1x1x128xf32> to vector<1x128xf32>
    %c11_49 = arith.constant 11 : index
    %c0_50 = arith.constant 0 : index
    %39 = vector.load %arg13[%c11_49, %c0_50] : memref<64x128xf32, #tpu.memory_space<vmem>>, vector<1x128xf32>
    tpu.vector_store %arg13[%c11_49, %c0_50], %38 {strides = array<i32>} : memref<64x128xf32, #tpu.memory_space<vmem>>, vector<1x128xf32>,
    %c0_51 = arith.constant 0 : index
    %c0_52 = arith.constant 0 : index
    %c12 = arith.constant 12 : index
    %40 = vector.load %arg1[%c0_51, %c0_52, %c12] : memref<1x1x256xf32, #tpu.memory_space<vmem>>, vector<1x1x128xf32>
    %41 = vector.shape_cast %40 : vector<1x1x128xf32> to vector<1x128xf32>
    %c12_53 = arith.constant 12 : index
    %c0_54 = arith.constant 0 : index
    %42 = vector.load %arg13[%c12_53, %c0_54] : memref<64x128xf32, #tpu.memory_space<vmem>>, vector<1x128xf32>
    tpu.vector_store %arg13[%c12_53, %c0_54], %41 {strides = array<i32>} : memref<64x128xf32, #tpu.memory_space<vmem>>, vector<1x128xf32>,
    %c0_55 = arith.constant 0 : index
    %c0_56 = arith.constant 0 : index
    %c13 = arith.constant 13 : index
    %43 = vector.load %arg1[%c0_55, %c0_56, %c13] : memref<1x1x256xf32, #tpu.memory_space<vmem>>, vector<1x1x128xf32>
    %44 = vector.shape_cast %43 : vector<1x1x128xf32> to vector<1x128xf32>
    %c13_57 = arith.constant 13 : index
    %c0_58 = arith.constant 0 : index
    %45 = vector.load %arg13[%c13_57, %c0_58] : memref<64x128xf32, #tpu.memory_space<vmem>>, vector<1x128xf32>
    tpu.vector_store %arg13[%c13_57, %c0_58], %44 {strides = array<i32>} : memref<64x128xf32, #tpu.memory_space<vmem>>, vector<1x128xf32>,
    %c0_59 = arith.constant 0 : index
    %c0_60 = arith.constant 0 : index
    %c14 = arith.constant 14 : index
    %46 = vector.load %arg1[%c0_59, %c0_60, %c14] : memref<1x1x256xf32, #tpu.memory_space<vmem>>, vector<1x1x128xf32>
    %47 = vector.shape_cast %46 : vector<1x1x128xf32> to vector<1x128xf32>
    %c14_61 = arith.constant 14 : index
    %c0_62 = arith.constant 0 : index
    %48 = vector.load %arg13[%c14_61, %c0_62] : memref<64x128xf32, #tpu.memory_space<vmem>>, vector<1x128xf32>
    tpu.vector_store %arg13[%c14_61, %c0_62], %47 {strides = array<i32>} : memref<64x128xf32, #tpu.memory_space<vmem>>, vector<1x128xf32>,
    %c0_63 = arith.constant 0 : index
    %c0_64 = arith.constant 0 : index
    %c15 = arith.constant 15 : index
    %49 = vector.load %arg1[%c0_63, %c0_64, %c15] : memref<1x1x256xf32, #tpu.memory_space<vmem>>, vector<1x1x128xf32>
    %50 = vector.shape_cast %49 : vector<1x1x128xf32> to vector<1x128xf32>
    %c15_65 = arith.constant 15 : index
    %c0_66 = arith.constant 0 : index
    %51 = vector.load %arg13[%c15_65, %c0_66] : memref<64x128xf32, #tpu.memory_space<vmem>>, vector<1x128xf32>
    tpu.vector_store %arg13[%c15_65, %c0_66], %50 {strides = array<i32>} : memref<64x128xf32, #tpu.memory_space<vmem>>, vector<1x128xf32>,
    %c0_67 = arith.constant 0 : index
    %c0_68 = arith.constant 0 : index
    %c16 = arith.constant 16 : index
    %52 = vector.load %arg1[%c0_67, %c0_68, %c16] : memref<1x1x256xf32, #tpu.memory_space<vmem>>, vector<1x1x128xf32>
    %53 = vector.shape_cast %52 : vector<1x1x128xf32> to vector<1x128xf32>
    %c16_69 = arith.constant 16 : index
    %c0_70 = arith.constant 0 : index
    %54 = vector.load %arg13[%c16_69, %c0_70] : memref<64x128xf32, #tpu.memory_space<vmem>>, vector<1x128xf32>
    tpu.vector_store %arg13[%c16_69, %c0_70], %53 {strides = array<i32>} : memref<64x128xf32, #tpu.memory_space<vmem>>, vector<1x128xf32>,
    %c0_71 = arith.constant 0 : index
    %c0_72 = arith.constant 0 : index
    %c17 = arith.constant 17 : index
    %55 = vector.load %arg1[%c0_71, %c0_72, %c17] : memref<1x1x256xf32, #tpu.memory_space<vmem>>, vector<1x1x128xf32>
    %56 = vector.shape_cast %55 : vector<1x1x128xf32> to vector<1x128xf32>
    %c17_73 = arith.constant 17 : index
    %c0_74 = arith.constant 0 : index
    %57 = vector.load %arg13[%c17_73, %c0_74] : memref<64x128xf32, #tpu.memory_space<vmem>>, vector<1x128xf32>
    tpu.vector_store %arg13[%c17_73, %c0_74], %56 {strides = array<i32>} : memref<64x128xf32, #tpu.memory_space<vmem>>, vector<1x128xf32>,
    %c0_75 = arith.constant 0 : index
    %c0_76 = arith.constant 0 : index
    %c18 = arith.constant 18 : index
    %58 = vector.load %arg1[%c0_75, %c0_76, %c18] : memref<1x1x256xf32, #tpu.memory_space<vmem>>, vector<1x1x128xf32>
    %59 = vector.shape_cast %58 : vector<1x1x128xf32> to vector<1x128xf32>
    %c18_77 = arith.constant 18 : index
    %c0_78 = arith.constant 0 : index
    %60 = vector.load %arg13[%c18_77, %c0_78] : memref<64x128xf32, #tpu.memory_space<vmem>>, vector<1x128xf32>
    tpu.vector_store %arg13[%c18_77, %c0_78], %59 {strides = array<i32>} : memref<64x128xf32, #tpu.memory_space<vmem>>, vector<1x128xf32>,
    %c0_79 = arith.constant 0 : index
    %c0_80 = arith.constant 0 : index
    %c19 = arith.constant 19 : index
    %61 = vector.load %arg1[%c0_79, %c0_80, %c19] : memref<1x1x256xf32, #tpu.memory_space<vmem>>, vector<1x1x128xf32>
    %62 = vector.shape_cast %61 : vector<1x1x128xf32> to vector<1x128xf32>
    %c19_81 = arith.constant 19 : index
    %c0_82 = arith.constant 0 : index
    %63 = vector.load %arg13[%c19_81, %c0_82] : memref<64x128xf32, #tpu.memory_space<vmem>>, vector<1x128xf32>
    tpu.vector_store %arg13[%c19_81, %c0_82], %62 {strides = array<i32>} : memref<64x128xf32, #tpu.memory_space<vmem>>, vector<1x128xf32>,
    %c0_83 = arith.constant 0 : index
    %c0_84 = arith.constant 0 : index
    %c20 = arith.constant 20 : index
    %64 = vector.load %arg1[%c0_83, %c0_84, %c20] : memref<1x1x256xf32, #tpu.memory_space<vmem>>, vector<1x1x128xf32>
    %65 = vector.shape_cast %64 : vector<1x1x128xf32> to vector<1x128xf32>
    %c20_85 = arith.constant 20 : index
    %c0_86 = arith.constant 0 : index
    %66 = vector.load %arg13[%c20_85, %c0_86] : memref<64x128xf32, #tpu.memory_space<vmem>>, vector<1x128xf32>
    tpu.vector_store %arg13[%c20_85, %c0_86], %65 {strides = array<i32>} : memref<64x128xf32, #tpu.memory_space<vmem>>, vector<1x128xf32>,
    %c0_87 = arith.constant 0 : index
    %c0_88 = arith.constant 0 : index
    %c21 = arith.constant 21 : index
    %67 = vector.load %arg1[%c0_87, %c0_88, %c21] : memref<1x1x256xf32, #tpu.memory_space<vmem>>, vector<1x1x128xf32>
    %68 = vector.shape_cast %67 : vector<1x1x128xf32> to vector<1x128xf32>
    %c21_89 = arith.constant 21 : index
    %c0_90 = arith.constant 0 : index
    %69 = vector.load %arg13[%c21_89, %c0_90] : memref<64x128xf32, #tpu.memory_space<vmem>>, vector<1x128xf32>
    tpu.vector_store %arg13[%c21_89, %c0_90], %68 {strides = array<i32>} : memref<64x128xf32, #tpu.memory_space<vmem>>, vector<1x128xf32>,
    %c0_91 = arith.constant 0 : index
    %c0_92 = arith.constant 0 : index
    %c22 = arith.constant 22 : index
    %70 = vector.load %arg1[%c0_91, %c0_92, %c22] : memref<1x1x256xf32, #tpu.memory_space<vmem>>, vector<1x1x128xf32>
    %71 = vector.shape_cast %70 : vector<1x1x128xf32> to vector<1x128xf32>
    %c22_93 = arith.constant 22 : index
    %c0_94 = arith.constant 0 : index
    %72 = vector.load %arg13[%c22_93, %c0_94] : memref<64x128xf32, #tpu.memory_space<vmem>>, vector<1x128xf32>
    tpu.vector_store %arg13[%c22_93, %c0_94], %71 {strides = array<i32>} : memref<64x128xf32, #tpu.memory_space<vmem>>, vector<1x128xf32>,
    %c0_95 = arith.constant 0 : index
    %c0_96 = arith.constant 0 : index
    %c23 = arith.constant 23 : index
    %73 = vector.load %arg1[%c0_95, %c0_96, %c23] : memref<1x1x256xf32, #tpu.memory_space<vmem>>, vector<1x1x128xf32>
    %74 = vector.shape_cast %73 : vector<1x1x128xf32> to vector<1x128xf32>
    %c23_97 = arith.constant 23 : index
    %c0_98 = arith.constant 0 : index
    %75 = vector.load %arg13[%c23_97, %c0_98] : memref<64x128xf32, #tpu.memory_space<vmem>>, vector<1x128xf32>
    tpu.vector_store %arg13[%c23_97, %c0_98], %74 {strides = array<i32>} : memref<64x128xf32, #tpu.memory_space<vmem>>, vector<1x128xf32>,
    %c0_99 = arith.constant 0 : index
    %c0_100 = arith.constant 0 : index
    %c24 = arith.constant 24 : index
    %76 = vector.load %arg1[%c0_99, %c0_100, %c24] : memref<1x1x256xf32, #tpu.memory_space<vmem>>, vector<1x1x128xf32>
    %77 = vector.shape_cast %76 : vector<1x1x128xf32> to vector<1x128xf32>
    %c24_101 = arith.constant 24 : index
    %c0_102 = arith.constant 0 : index
    %78 = vector.load %arg13[%c24_101, %c0_102] : memref<64x128xf32, #tpu.memory_space<vmem>>, vector<1x128xf32>
    tpu.vector_store %arg13[%c24_101, %c0_102], %77 {strides = array<i32>} : memref<64x128xf32, #tpu.memory_space<vmem>>, vector<1x128xf32>,
    %c0_103 = arith.constant 0 : index
    %c0_104 = arith.constant 0 : index
    %c25 = arith.constant 25 : index
    %79 = vector.load %arg1[%c0_103, %c0_104, %c25] : memref<1x1x256xf32, #tpu.memory_space<vmem>>, vector<1x1x128xf32>
    %80 = vector.shape_cast %79 : vector<1x1x128xf32> to vector<1x128xf32>
    %c25_105 = arith.constant 25 : index
    %c0_106 = arith.constant 0 : index
    %81 = vector.load %arg13[%c25_105, %c0_106] : memref<64x128xf32, #tpu.memory_space<vmem>>, vector<1x128xf32>
    tpu.vector_store %arg13[%c25_105, %c0_106], %80 {strides = array<i32>} : memref<64x128xf32, #tpu.memory_space<vmem>>, vector<1x128xf32>,
    %c0_107 = arith.constant 0 : index
    %c0_108 = arith.constant 0 : index
    %c26 = arith.constant 26 : index
    %82 = vector.load %arg1[%c0_107, %c0_108, %c26] : memref<1x1x256xf32, #tpu.memory_space<vmem>>, vector<1x1x128xf32>
    %83 = vector.shape_cast %82 : vector<1x1x128xf32> to vector<1x128xf32>
    %c26_109 = arith.constant 26 : index
    %c0_110 = arith.constant 0 : index
    %84 = vector.load %arg13[%c26_109, %c0_110] : memref<64x128xf32, #tpu.memory_space<vmem>>, vector<1x128xf32>
    tpu.vector_store %arg13[%c26_109, %c0_110], %83 {strides = array<i32>} : memref<64x128xf32, #tpu.memory_space<vmem>>, vector<1x128xf32>,
    %c0_111 = arith.constant 0 : index
    %c0_112 = arith.constant 0 : index
    %c27 = arith.constant 27 : index
    %85 = vector.load %arg1[%c0_111, %c0_112, %c27] : memref<1x1x256xf32, #tpu.memory_space<vmem>>, vector<1x1x128xf32>
    %86 = vector.shape_cast %85 : vector<1x1x128xf32> to vector<1x128xf32>
    %c27_113 = arith.constant 27 : index
    %c0_114 = arith.constant 0 : index
    %87 = vector.load %arg13[%c27_113, %c0_114] : memref<64x128xf32, #tpu.memory_space<vmem>>, vector<1x128xf32>
    tpu.vector_store %arg13[%c27_113, %c0_114], %86 {strides = array<i32>} : memref<64x128xf32, #tpu.memory_space<vmem>>, vector<1x128xf32>,
    %c0_115 = arith.constant 0 : index
    %c0_116 = arith.constant 0 : index
    %c28 = arith.constant 28 : index
    %88 = vector.load %arg1[%c0_115, %c0_116, %c28] : memref<1x1x256xf32, #tpu.memory_space<vmem>>, vector<1x1x128xf32>
    %89 = vector.shape_cast %88 : vector<1x1x128xf32> to vector<1x128xf32>
    %c28_117 = arith.constant 28 : index
    %c0_118 = arith.constant 0 : index
    %90 = vector.load %arg13[%c28_117, %c0_118] : memref<64x128xf32, #tpu.memory_space<vmem>>, vector<1x128xf32>
    tpu.vector_store %arg13[%c28_117, %c0_118], %89 {strides = array<i32>} : memref<64x128xf32, #tpu.memory_space<vmem>>, vector<1x128xf32>,
    %c0_119 = arith.constant 0 : index
    %c0_120 = arith.constant 0 : index
    %c29 = arith.constant 29 : index
    %91 = vector.load %arg1[%c0_119, %c0_120, %c29] : memref<1x1x256xf32, #tpu.memory_space<vmem>>, vector<1x1x128xf32>
    %92 = vector.shape_cast %91 : vector<1x1x128xf32> to vector<1x128xf32>
    %c29_121 = arith.constant 29 : index
    %c0_122 = arith.constant 0 : index
    %93 = vector.load %arg13[%c29_121, %c0_122] : memref<64x128xf32, #tpu.memory_space<vmem>>, vector<1x128xf32>
    tpu.vector_store %arg13[%c29_121, %c0_122], %92 {strides = array<i32>} : memref<64x128xf32, #tpu.memory_space<vmem>>, vector<1x128xf32>,
    %c0_123 = arith.constant 0 : index
    %c0_124 = arith.constant 0 : index
    %94 = vector.load %arg2[%c0_123, %c0_124] : memref<128x64xbf16, #tpu.memory_space<vmem>>, vector<128x64xbf16>
    %c0_125 = arith.constant 0 : index
    %c0_126 = arith.constant 0 : index
    %95 = vector.load %arg13[%c0_125, %c0_126] : memref<64x128xf32, #tpu.memory_space<vmem>>, vector<64x128xf32>
    %96 = arith.truncf %95 : vector<64x128xf32> to vector<64x128xbf16>
    %cst_127 = arith.constant dense<0.000000e+00> : vector<128x128xf32>
    %97 = tpu.matmul %94, %96, %cst_127 {dimension_numbers = #tpu.dot_dimension_numbers<[1], [0], [0], [1], [0, 0, 1, 1], [], []>} : vector<128x64xbf16>, vector<64x128xbf16>, vector<128x128xf32> -> vector<128x128xf32>
    %c0_128 = arith.constant 0 : index
    %c0_129 = arith.constant 0 : index
    %98 = vector.load %arg3[%c0_128, %c0_129] : memref<128x1xf32, #tpu.memory_space<vmem>>, vector<128x1xf32>
    %99 = vector.broadcast %98 : vector<128x1xf32> to vector<128x128xf32>
    %100 = arith.addf %97, %99 : vector<128x128xf32>
    %cst_130 = arith.constant 0.000000e+00 : f32
    %101 = vector.broadcast %cst_130 : f32 to vector<128x128xf32>
    %102 = arith.maximumf %100, %101 : vector<128x128xf32>
    %c35_i32 = arith.constant 35 : i32
    %103 = vector.broadcast %c35_i32 : i32 to vector<1x128xi32>
    %104 = arith.cmpi slt, %0, %103 : vector<1x128xi32>
    %cst_131 = arith.constant 0.000000e+00 : f32
    %105 = vector.shape_cast %104 : vector<1x128xi1> to vector<1x128xi1>
    %106 = vector.broadcast %105 : vector<1x128xi1> to vector<128x128xi1>
    %107 = vector.broadcast %cst_131 : f32 to vector<128x128xf32>
    %108 = arith.select %106, %102, %107 : vector<128x128xi1>, vector<128x128xf32>
    %cst_132 = arith.constant dense<0xFF800000> : vector<128xf32>
    %109 = vector.multi_reduction <maximumf>, %108, %cst_132 [1] : vector<128x128xf32> to vector<128xf32>
    %110 = vector.shape_cast %109 : vector<128xf32> to vector<128x1xf32>
    %c0_133 = arith.constant 0 : index
    %c0_134 = arith.constant 0 : index
    %111 = vector.load %arg4[%c0_133, %c0_134] : memref<128x128xf32, #tpu.memory_space<vmem>>, vector<128x128xf32>
    %112 = vector.broadcast %110 : vector<128x1xf32> to vector<128x128xf32>
    %113 = arith.mulf %112, %111 : vector<128x128xf32>
    %cst_135 = arith.constant dense<0.000000e+00> : vector<128xf32>
    %114 = vector.multi_reduction <add>, %113, %cst_135 [0] : vector<128x128xf32> to vector<128xf32>
    %115 = vector.shape_cast %114 : vector<128xf32> to vector<1x128xf32>
    %116 = arith.addf %1, %115 : vector<1x128xf32>
    %cst_136 = arith.constant 0.000000e+00 : f32
    %117 = vector.broadcast %cst_136 : f32 to vector<64x128xf32>
    %c0_137 = arith.constant 0 : index
    %c0_138 = arith.constant 0 : index
    %118 = vector.load %arg13[%c0_137, %c0_138] : memref<64x128xf32, #tpu.memory_space<vmem>>, vector<64x128xf32>
    tpu.vector_store %arg13[%c0_137, %c0_138], %117 {strides = array<i32>} : memref<64x128xf32, #tpu.memory_space<vmem>>, vector<64x128xf32>,
    %c0_139 = arith.constant 0 : index
    %c0_140 = arith.constant 0 : index
    %c0_141 = arith.constant 0 : index
    %119 = vector.load %arg1[%c0_139, %c0_140, %c0_141] : memref<1x1x256xf32, #tpu.memory_space<vmem>>, vector<1x1x128xf32>
    %120 = vector.shape_cast %119 : vector<1x1x128xf32> to vector<1x128xf32>
    %c0_142 = arith.constant 0 : index
    %c0_143 = arith.constant 0 : index
    %121 = vector.load %arg13[%c0_142, %c0_143] : memref<64x128xf32, #tpu.memory_space<vmem>>, vector<1x128xf32>
    tpu.vector_store %arg13[%c0_142, %c0_143], %120 {strides = array<i32>} : memref<64x128xf32, #tpu.memory_space<vmem>>, vector<1x128xf32>,
    %c0_144 = arith.constant 0 : index
    %c0_145 = arith.constant 0 : index
    %c1_146 = arith.constant 1 : index
    %122 = vector.load %arg1[%c0_144, %c0_145, %c1_146] : memref<1x1x256xf32, #tpu.memory_space<vmem>>, vector<1x1x128xf32>
    %123 = vector.shape_cast %122 : vector<1x1x128xf32> to vector<1x128xf32>
    %c1_147 = arith.constant 1 : index
    %c0_148 = arith.constant 0 : index
    %124 = vector.load %arg13[%c1_147, %c0_148] : memref<64x128xf32, #tpu.memory_space<vmem>>, vector<1x128xf32>
    tpu.vector_store %arg13[%c1_147, %c0_148], %123 {strides = array<i32>} : memref<64x128xf32, #tpu.memory_space<vmem>>, vector<1x128xf32>,
    %c0_149 = arith.constant 0 : index
    %c0_150 = arith.constant 0 : index
    %c2_151 = arith.constant 2 : index
    %125 = vector.load %arg1[%c0_149, %c0_150, %c2_151] : memref<1x1x256xf32, #tpu.memory_space<vmem>>, vector<1x1x128xf32>
    %126 = vector.shape_cast %125 : vector<1x1x128xf32> to vector<1x128xf32>
    %c2_152 = arith.constant 2 : index
    %c0_153 = arith.constant 0 : index
    %127 = vector.load %arg13[%c2_152, %c0_153] : memref<64x128xf32, #tpu.memory_space<vmem>>, vector<1x128xf32>
    tpu.vector_store %arg13[%c2_152, %c0_153], %126 {strides = array<i32>} : memref<64x128xf32, #tpu.memory_space<vmem>>, vector<1x128xf32>,
    %c0_154 = arith.constant 0 : index
    %c0_155 = arith.constant 0 : index
    %c3_156 = arith.constant 3 : index
    %128 = vector.load %arg1[%c0_154, %c0_155, %c3_156] : memref<1x1x256xf32, #tpu.memory_space<vmem>>, vector<1x1x128xf32>
    %129 = vector.shape_cast %128 : vector<1x1x128xf32> to vector<1x128xf32>
    %c3_157 = arith.constant 3 : index
    %c0_158 = arith.constant 0 : index
    %130 = vector.load %arg13[%c3_157, %c0_158] : memref<64x128xf32, #tpu.memory_space<vmem>>, vector<1x128xf32>
    tpu.vector_store %arg13[%c3_157, %c0_158], %129 {strides = array<i32>} : memref<64x128xf32, #tpu.memory_space<vmem>>, vector<1x128xf32>,
    %c0_159 = arith.constant 0 : index
    %c0_160 = arith.constant 0 : index
    %c4_161 = arith.constant 4 : index
    %131 = vector.load %arg1[%c0_159, %c0_160, %c4_161] : memref<1x1x256xf32, #tpu.memory_space<vmem>>, vector<1x1x128xf32>
    %132 = vector.shape_cast %131 : vector<1x1x128xf32> to vector<1x128xf32>
    %c4_162 = arith.constant 4 : index
    %c0_163 = arith.constant 0 : index
    %133 = vector.load %arg13[%c4_162, %c0_163] : memref<64x128xf32, #tpu.memory_space<vmem>>, vector<1x128xf32>
    tpu.vector_store %arg13[%c4_162, %c0_163], %132 {strides = array<i32>} : memref<64x128xf32, #tpu.memory_space<vmem>>, vector<1x128xf32>,
    %c0_164 = arith.constant 0 : index
    %c0_165 = arith.constant 0 : index
    %c5_166 = arith.constant 5 : index
    %134 = vector.load %arg1[%c0_164, %c0_165, %c5_166] : memref<1x1x256xf32, #tpu.memory_space<vmem>>, vector<1x1x128xf32>
    %135 = vector.shape_cast %134 : vector<1x1x128xf32> to vector<1x128xf32>
    %c5_167 = arith.constant 5 : index
    %c0_168 = arith.constant 0 : index
    %136 = vector.load %arg13[%c5_167, %c0_168] : memref<64x128xf32, #tpu.memory_space<vmem>>, vector<1x128xf32>
    tpu.vector_store %arg13[%c5_167, %c0_168], %135 {strides = array<i32>} : memref<64x128xf32, #tpu.memory_space<vmem>>, vector<1x128xf32>,
    %c0_169 = arith.constant 0 : index
    %c0_170 = arith.constant 0 : index
    %c6_171 = arith.constant 6 : index
    %137 = vector.load %arg1[%c0_169, %c0_170, %c6_171] : memref<1x1x256xf32, #tpu.memory_space<vmem>>, vector<1x1x128xf32>
    %138 = vector.shape_cast %137 : vector<1x1x128xf32> to vector<1x128xf32>
    %c6_172 = arith.constant 6 : index
    %c0_173 = arith.constant 0 : index
    %139 = vector.load %arg13[%c6_172, %c0_173] : memref<64x128xf32, #tpu.memory_space<vmem>>, vector<1x128xf32>
    tpu.vector_store %arg13[%c6_172, %c0_173], %138 {strides = array<i32>} : memref<64x128xf32, #tpu.memory_space<vmem>>, vector<1x128xf32>,
    %c0_174 = arith.constant 0 : index
    %c0_175 = arith.constant 0 : index
    %c7_176 = arith.constant 7 : index
    %140 = vector.load %arg1[%c0_174, %c0_175, %c7_176] : memref<1x1x256xf32, #tpu.memory_space<vmem>>, vector<1x1x128xf32>
    %141 = vector.shape_cast %140 : vector<1x1x128xf32> to vector<1x128xf32>
    %c7_177 = arith.constant 7 : index
    %c0_178 = arith.constant 0 : index
    %142 = vector.load %arg13[%c7_177, %c0_178] : memref<64x128xf32, #tpu.memory_space<vmem>>, vector<1x128xf32>
    tpu.vector_store %arg13[%c7_177, %c0_178], %141 {strides = array<i32>} : memref<64x128xf32, #tpu.memory_space<vmem>>, vector<1x128xf32>,
    %c0_179 = arith.constant 0 : index
    %c0_180 = arith.constant 0 : index
    %c8_181 = arith.constant 8 : index
    %143 = vector.load %arg1[%c0_179, %c0_180, %c8_181] : memref<1x1x256xf32, #tpu.memory_space<vmem>>, vector<1x1x128xf32>
    %144 = vector.shape_cast %143 : vector<1x1x128xf32> to vector<1x128xf32>
    %c8_182 = arith.constant 8 : index
    %c0_183 = arith.constant 0 : index
    %145 = vector.load %arg13[%c8_182, %c0_183] : memref<64x128xf32, #tpu.memory_space<vmem>>, vector<1x128xf32>
    tpu.vector_store %arg13[%c8_182, %c0_183], %144 {strides = array<i32>} : memref<64x128xf32, #tpu.memory_space<vmem>>, vector<1x128xf32>,
    %c0_184 = arith.constant 0 : index
    %c0_185 = arith.constant 0 : index
    %c9_186 = arith.constant 9 : index
    %146 = vector.load %arg1[%c0_184, %c0_185, %c9_186] : memref<1x1x256xf32, #tpu.memory_space<vmem>>, vector<1x1x128xf32>
    %147 = vector.shape_cast %146 : vector<1x1x128xf32> to vector<1x128xf32>
    %c9_187 = arith.constant 9 : index
    %c0_188 = arith.constant 0 : index
    %148 = vector.load %arg13[%c9_187, %c0_188] : memref<64x128xf32, #tpu.memory_space<vmem>>, vector<1x128xf32>
    tpu.vector_store %arg13[%c9_187, %c0_188], %147 {strides = array<i32>} : memref<64x128xf32, #tpu.memory_space<vmem>>, vector<1x128xf32>,
    %c0_189 = arith.constant 0 : index
    %c0_190 = arith.constant 0 : index
    %c10_191 = arith.constant 10 : index
    %149 = vector.load %arg1[%c0_189, %c0_190, %c10_191] : memref<1x1x256xf32, #tpu.memory_space<vmem>>, vector<1x1x128xf32>
    %150 = vector.shape_cast %149 : vector<1x1x128xf32> to vector<1x128xf32>
    %c10_192 = arith.constant 10 : index
    %c0_193 = arith.constant 0 : index
    %151 = vector.load %arg13[%c10_192, %c0_193] : memref<64x128xf32, #tpu.memory_space<vmem>>, vector<1x128xf32>
    tpu.vector_store %arg13[%c10_192, %c0_193], %150 {strides = array<i32>} : memref<64x128xf32, #tpu.memory_space<vmem>>, vector<1x128xf32>,
    %c0_194 = arith.constant 0 : index
    %c0_195 = arith.constant 0 : index
    %c11_196 = arith.constant 11 : index
    %152 = vector.load %arg1[%c0_194, %c0_195, %c11_196] : memref<1x1x256xf32, #tpu.memory_space<vmem>>, vector<1x1x128xf32>
    %153 = vector.shape_cast %152 : vector<1x1x128xf32> to vector<1x128xf32>
    %c11_197 = arith.constant 11 : index
    %c0_198 = arith.constant 0 : index
    %154 = vector.load %arg13[%c11_197, %c0_198] : memref<64x128xf32, #tpu.memory_space<vmem>>, vector<1x128xf32>
    tpu.vector_store %arg13[%c11_197, %c0_198], %153 {strides = array<i32>} : memref<64x128xf32, #tpu.memory_space<vmem>>, vector<1x128xf32>,
    %c0_199 = arith.constant 0 : index
    %c0_200 = arith.constant 0 : index
    %c12_201 = arith.constant 12 : index
    %155 = vector.load %arg1[%c0_199, %c0_200, %c12_201] : memref<1x1x256xf32, #tpu.memory_space<vmem>>, vector<1x1x128xf32>
    %156 = vector.shape_cast %155 : vector<1x1x128xf32> to vector<1x128xf32>
    %c12_202 = arith.constant 12 : index
    %c0_203 = arith.constant 0 : index
    %157 = vector.load %arg13[%c12_202, %c0_203] : memref<64x128xf32, #tpu.memory_space<vmem>>, vector<1x128xf32>
    tpu.vector_store %arg13[%c12_202, %c0_203], %156 {strides = array<i32>} : memref<64x128xf32, #tpu.memory_space<vmem>>, vector<1x128xf32>,
    %c0_204 = arith.constant 0 : index
    %c0_205 = arith.constant 0 : index
    %c13_206 = arith.constant 13 : index
    %158 = vector.load %arg1[%c0_204, %c0_205, %c13_206] : memref<1x1x256xf32, #tpu.memory_space<vmem>>, vector<1x1x128xf32>
    %159 = vector.shape_cast %158 : vector<1x1x128xf32> to vector<1x128xf32>
    %c13_207 = arith.constant 13 : index
    %c0_208 = arith.constant 0 : index
    %160 = vector.load %arg13[%c13_207, %c0_208] : memref<64x128xf32, #tpu.memory_space<vmem>>, vector<1x128xf32>
    tpu.vector_store %arg13[%c13_207, %c0_208], %159 {strides = array<i32>} : memref<64x128xf32, #tpu.memory_space<vmem>>, vector<1x128xf32>,
    %c0_209 = arith.constant 0 : index
    %c0_210 = arith.constant 0 : index
    %c14_211 = arith.constant 14 : index
    %161 = vector.load %arg1[%c0_209, %c0_210, %c14_211] : memref<1x1x256xf32, #tpu.memory_space<vmem>>, vector<1x1x128xf32>
    %162 = vector.shape_cast %161 : vector<1x1x128xf32> to vector<1x128xf32>
    %c14_212 = arith.constant 14 : index
    %c0_213 = arith.constant 0 : index
    %163 = vector.load %arg13[%c14_212, %c0_213] : memref<64x128xf32, #tpu.memory_space<vmem>>, vector<1x128xf32>
    tpu.vector_store %arg13[%c14_212, %c0_213], %162 {strides = array<i32>} : memref<64x128xf32, #tpu.memory_space<vmem>>, vector<1x128xf32>,
    %c0_214 = arith.constant 0 : index
    %c0_215 = arith.constant 0 : index
    %c15_216 = arith.constant 15 : index
    %164 = vector.load %arg1[%c0_214, %c0_215, %c15_216] : memref<1x1x256xf32, #tpu.memory_space<vmem>>, vector<1x1x128xf32>
    %165 = vector.shape_cast %164 : vector<1x1x128xf32> to vector<1x128xf32>
    %c15_217 = arith.constant 15 : index
    %c0_218 = arith.constant 0 : index
    %166 = vector.load %arg13[%c15_217, %c0_218] : memref<64x128xf32, #tpu.memory_space<vmem>>, vector<1x128xf32>
    tpu.vector_store %arg13[%c15_217, %c0_218], %165 {strides = array<i32>} : memref<64x128xf32, #tpu.memory_space<vmem>>, vector<1x128xf32>,
    %c0_219 = arith.constant 0 : index
    %c0_220 = arith.constant 0 : index
    %c16_221 = arith.constant 16 : index
    %167 = vector.load %arg1[%c0_219, %c0_220, %c16_221] : memref<1x1x256xf32, #tpu.memory_space<vmem>>, vector<1x1x128xf32>
    %168 = vector.shape_cast %167 : vector<1x1x128xf32> to vector<1x128xf32>
    %c16_222 = arith.constant 16 : index
    %c0_223 = arith.constant 0 : index
    %169 = vector.load %arg13[%c16_222, %c0_223] : memref<64x128xf32, #tpu.memory_space<vmem>>, vector<1x128xf32>
    tpu.vector_store %arg13[%c16_222, %c0_223], %168 {strides = array<i32>} : memref<64x128xf32, #tpu.memory_space<vmem>>, vector<1x128xf32>,
    %c0_224 = arith.constant 0 : index
    %c0_225 = arith.constant 0 : index
    %c17_226 = arith.constant 17 : index
    %170 = vector.load %arg1[%c0_224, %c0_225, %c17_226] : memref<1x1x256xf32, #tpu.memory_space<vmem>>, vector<1x1x128xf32>
    %171 = vector.shape_cast %170 : vector<1x1x128xf32> to vector<1x128xf32>
    %c17_227 = arith.constant 17 : index
    %c0_228 = arith.constant 0 : index
    %172 = vector.load %arg13[%c17_227, %c0_228] : memref<64x128xf32, #tpu.memory_space<vmem>>, vector<1x128xf32>
    tpu.vector_store %arg13[%c17_227, %c0_228], %171 {strides = array<i32>} : memref<64x128xf32, #tpu.memory_space<vmem>>, vector<1x128xf32>,
    %c0_229 = arith.constant 0 : index
    %c0_230 = arith.constant 0 : index
    %c18_231 = arith.constant 18 : index
    %173 = vector.load %arg1[%c0_229, %c0_230, %c18_231] : memref<1x1x256xf32, #tpu.memory_space<vmem>>, vector<1x1x128xf32>
    %174 = vector.shape_cast %173 : vector<1x1x128xf32> to vector<1x128xf32>
    %c18_232 = arith.constant 18 : index
    %c0_233 = arith.constant 0 : index
    %175 = vector.load %arg13[%c18_232, %c0_233] : memref<64x128xf32, #tpu.memory_space<vmem>>, vector<1x128xf32>
    tpu.vector_store %arg13[%c18_232, %c0_233], %174 {strides = array<i32>} : memref<64x128xf32, #tpu.memory_space<vmem>>, vector<1x128xf32>,
    %c0_234 = arith.constant 0 : index
    %c0_235 = arith.constant 0 : index
    %c19_236 = arith.constant 19 : index
    %176 = vector.load %arg1[%c0_234, %c0_235, %c19_236] : memref<1x1x256xf32, #tpu.memory_space<vmem>>, vector<1x1x128xf32>
    %177 = vector.shape_cast %176 : vector<1x1x128xf32> to vector<1x128xf32>
    %c19_237 = arith.constant 19 : index
    %c0_238 = arith.constant 0 : index
    %178 = vector.load %arg13[%c19_237, %c0_238] : memref<64x128xf32, #tpu.memory_space<vmem>>, vector<1x128xf32>
    tpu.vector_store %arg13[%c19_237, %c0_238], %177 {strides = array<i32>} : memref<64x128xf32, #tpu.memory_space<vmem>>, vector<1x128xf32>,
    %c0_239 = arith.constant 0 : index
    %c0_240 = arith.constant 0 : index
    %c20_241 = arith.constant 20 : index
    %179 = vector.load %arg1[%c0_239, %c0_240, %c20_241] : memref<1x1x256xf32, #tpu.memory_space<vmem>>, vector<1x1x128xf32>
    %180 = vector.shape_cast %179 : vector<1x1x128xf32> to vector<1x128xf32>
    %c20_242 = arith.constant 20 : index
    %c0_243 = arith.constant 0 : index
    %181 = vector.load %arg13[%c20_242, %c0_243] : memref<64x128xf32, #tpu.memory_space<vmem>>, vector<1x128xf32>
    tpu.vector_store %arg13[%c20_242, %c0_243], %180 {strides = array<i32>} : memref<64x128xf32, #tpu.memory_space<vmem>>, vector<1x128xf32>,
    %c0_244 = arith.constant 0 : index
    %c0_245 = arith.constant 0 : index
    %c21_246 = arith.constant 21 : index
    %182 = vector.load %arg1[%c0_244, %c0_245, %c21_246] : memref<1x1x256xf32, #tpu.memory_space<vmem>>, vector<1x1x128xf32>
    %183 = vector.shape_cast %182 : vector<1x1x128xf32> to vector<1x128xf32>
    %c21_247 = arith.constant 21 : index
    %c0_248 = arith.constant 0 : index
    %184 = vector.load %arg13[%c21_247, %c0_248] : memref<64x128xf32, #tpu.memory_space<vmem>>, vector<1x128xf32>
    tpu.vector_store %arg13[%c21_247, %c0_248], %183 {strides = array<i32>} : memref<64x128xf32, #tpu.memory_space<vmem>>, vector<1x128xf32>,
    %c0_249 = arith.constant 0 : index
    %c0_250 = arith.constant 0 : index
    %c22_251 = arith.constant 22 : index
    %185 = vector.load %arg1[%c0_249, %c0_250, %c22_251] : memref<1x1x256xf32, #tpu.memory_space<vmem>>, vector<1x1x128xf32>
    %186 = vector.shape_cast %185 : vector<1x1x128xf32> to vector<1x128xf32>
    %c22_252 = arith.constant 22 : index
    %c0_253 = arith.constant 0 : index
    %187 = vector.load %arg13[%c22_252, %c0_253] : memref<64x128xf32, #tpu.memory_space<vmem>>, vector<1x128xf32>
    tpu.vector_store %arg13[%c22_252, %c0_253], %186 {strides = array<i32>} : memref<64x128xf32, #tpu.memory_space<vmem>>, vector<1x128xf32>,
    %c0_254 = arith.constant 0 : index
    %c0_255 = arith.constant 0 : index
    %c23_256 = arith.constant 23 : index
    %188 = vector.load %arg1[%c0_254, %c0_255, %c23_256] : memref<1x1x256xf32, #tpu.memory_space<vmem>>, vector<1x1x128xf32>
    %189 = vector.shape_cast %188 : vector<1x1x128xf32> to vector<1x128xf32>
    %c23_257 = arith.constant 23 : index
    %c0_258 = arith.constant 0 : index
    %190 = vector.load %arg13[%c23_257, %c0_258] : memref<64x128xf32, #tpu.memory_space<vmem>>, vector<1x128xf32>
    tpu.vector_store %arg13[%c23_257, %c0_258], %189 {strides = array<i32>} : memref<64x128xf32, #tpu.memory_space<vmem>>, vector<1x128xf32>,
    %c0_259 = arith.constant 0 : index
    %c0_260 = arith.constant 0 : index
    %c24_261 = arith.constant 24 : index
    %191 = vector.load %arg1[%c0_259, %c0_260, %c24_261] : memref<1x1x256xf32, #tpu.memory_space<vmem>>, vector<1x1x128xf32>
    %192 = vector.shape_cast %191 : vector<1x1x128xf32> to vector<1x128xf32>
    %c24_262 = arith.constant 24 : index
    %c0_263 = arith.constant 0 : index
    %193 = vector.load %arg13[%c24_262, %c0_263] : memref<64x128xf32, #tpu.memory_space<vmem>>, vector<1x128xf32>
    tpu.vector_store %arg13[%c24_262, %c0_263], %192 {strides = array<i32>} : memref<64x128xf32, #tpu.memory_space<vmem>>, vector<1x128xf32>,
    %c0_264 = arith.constant 0 : index
    %c0_265 = arith.constant 0 : index
    %c25_266 = arith.constant 25 : index
    %194 = vector.load %arg1[%c0_264, %c0_265, %c25_266] : memref<1x1x256xf32, #tpu.memory_space<vmem>>, vector<1x1x128xf32>
    %195 = vector.shape_cast %194 : vector<1x1x128xf32> to vector<1x128xf32>
    %c25_267 = arith.constant 25 : index
    %c0_268 = arith.constant 0 : index
    %196 = vector.load %arg13[%c25_267, %c0_268] : memref<64x128xf32, #tpu.memory_space<vmem>>, vector<1x128xf32>
    tpu.vector_store %arg13[%c25_267, %c0_268], %195 {strides = array<i32>} : memref<64x128xf32, #tpu.memory_space<vmem>>, vector<1x128xf32>,
    %c0_269 = arith.constant 0 : index
    %c0_270 = arith.constant 0 : index
    %c26_271 = arith.constant 26 : index
    %197 = vector.load %arg1[%c0_269, %c0_270, %c26_271] : memref<1x1x256xf32, #tpu.memory_space<vmem>>, vector<1x1x128xf32>
    %198 = vector.shape_cast %197 : vector<1x1x128xf32> to vector<1x128xf32>
    %c26_272 = arith.constant 26 : index
    %c0_273 = arith.constant 0 : index
    %199 = vector.load %arg13[%c26_272, %c0_273] : memref<64x128xf32, #tpu.memory_space<vmem>>, vector<1x128xf32>
    tpu.vector_store %arg13[%c26_272, %c0_273], %198 {strides = array<i32>} : memref<64x128xf32, #tpu.memory_space<vmem>>, vector<1x128xf32>,
    %c0_274 = arith.constant 0 : index
    %c0_275 = arith.constant 0 : index
    %c27_276 = arith.constant 27 : index
    %200 = vector.load %arg1[%c0_274, %c0_275, %c27_276] : memref<1x1x256xf32, #tpu.memory_space<vmem>>, vector<1x1x128xf32>
    %201 = vector.shape_cast %200 : vector<1x1x128xf32> to vector<1x128xf32>
    %c27_277 = arith.constant 27 : index
    %c0_278 = arith.constant 0 : index
    %202 = vector.load %arg13[%c27_277, %c0_278] : memref<64x128xf32, #tpu.memory_space<vmem>>, vector<1x128xf32>
    tpu.vector_store %arg13[%c27_277, %c0_278], %201 {strides = array<i32>} : memref<64x128xf32, #tpu.memory_space<vmem>>, vector<1x128xf32>,
    %c0_279 = arith.constant 0 : index
    %c0_280 = arith.constant 0 : index
    %c28_281 = arith.constant 28 : index
    %203 = vector.load %arg1[%c0_279, %c0_280, %c28_281] : memref<1x1x256xf32, #tpu.memory_space<vmem>>, vector<1x1x128xf32>
    %204 = vector.shape_cast %203 : vector<1x1x128xf32> to vector<1x128xf32>
    %c28_282 = arith.constant 28 : index
    %c0_283 = arith.constant 0 : index
    %205 = vector.load %arg13[%c28_282, %c0_283] : memref<64x128xf32, #tpu.memory_space<vmem>>, vector<1x128xf32>
    tpu.vector_store %arg13[%c28_282, %c0_283], %204 {strides = array<i32>} : memref<64x128xf32, #tpu.memory_space<vmem>>, vector<1x128xf32>,
    %c0_284 = arith.constant 0 : index
    %c0_285 = arith.constant 0 : index
    %c29_286 = arith.constant 29 : index
    %206 = vector.load %arg1[%c0_284, %c0_285, %c29_286] : memref<1x1x256xf32, #tpu.memory_space<vmem>>, vector<1x1x128xf32>
    %207 = vector.shape_cast %206 : vector<1x1x128xf32> to vector<1x128xf32>
    %c29_287 = arith.constant 29 : index
    %c0_288 = arith.constant 0 : index
    %208 = vector.load %arg13[%c29_287, %c0_288] : memref<64x128xf32, #tpu.memory_space<vmem>>, vector<1x128xf32>
    tpu.vector_store %arg13[%c29_287, %c0_288], %207 {strides = array<i32>} : memref<64x128xf32, #tpu.memory_space<vmem>>, vector<1x128xf32>,
    %c0_289 = arith.constant 0 : index
    %c0_290 = arith.constant 0 : index
    %c30 = arith.constant 30 : index
    %209 = vector.load %arg1[%c0_289, %c0_290, %c30] : memref<1x1x256xf32, #tpu.memory_space<vmem>>, vector<1x1x128xf32>
    %210 = vector.shape_cast %209 : vector<1x1x128xf32> to vector<1x128xf32>
    %c30_291 = arith.constant 30 : index
    %c0_292 = arith.constant 0 : index
    %211 = vector.load %arg13[%c30_291, %c0_292] : memref<64x128xf32, #tpu.memory_space<vmem>>, vector<1x128xf32>
    tpu.vector_store %arg13[%c30_291, %c0_292], %210 {strides = array<i32>} : memref<64x128xf32, #tpu.memory_space<vmem>>, vector<1x128xf32>,
    %c0_293 = arith.constant 0 : index
    %c0_294 = arith.constant 0 : index
    %c31 = arith.constant 31 : index
    %212 = vector.load %arg1[%c0_293, %c0_294, %c31] : memref<1x1x256xf32, #tpu.memory_space<vmem>>, vector<1x1x128xf32>
    %213 = vector.shape_cast %212 : vector<1x1x128xf32> to vector<1x128xf32>
    %c31_295 = arith.constant 31 : index
    %c0_296 = arith.constant 0 : index
    %214 = vector.load %arg13[%c31_295, %c0_296] : memref<64x128xf32, #tpu.memory_space<vmem>>, vector<1x128xf32>
    tpu.vector_store %arg13[%c31_295, %c0_296], %213 {strides = array<i32>} : memref<64x128xf32, #tpu.memory_space<vmem>>, vector<1x128xf32>,
    %c0_297 = arith.constant 0 : index
    %c0_298 = arith.constant 0 : index
    %c32 = arith.constant 32 : index
    %215 = vector.load %arg1[%c0_297, %c0_298, %c32] : memref<1x1x256xf32, #tpu.memory_space<vmem>>, vector<1x1x128xf32>
    %216 = vector.shape_cast %215 : vector<1x1x128xf32> to vector<1x128xf32>
    %c32_299 = arith.constant 32 : index
    %c0_300 = arith.constant 0 : index
    %217 = vector.load %arg13[%c32_299, %c0_300] : memref<64x128xf32, #tpu.memory_space<vmem>>, vector<1x128xf32>
    tpu.vector_store %arg13[%c32_299, %c0_300], %216 {strides = array<i32>} : memref<64x128xf32, #tpu.memory_space<vmem>>, vector<1x128xf32>,
    %c0_301 = arith.constant 0 : index
    %c0_302 = arith.constant 0 : index
    %c33 = arith.constant 33 : index
    %218 = vector.load %arg1[%c0_301, %c0_302, %c33] : memref<1x1x256xf32, #tpu.memory_space<vmem>>, vector<1x1x128xf32>
    %219 = vector.shape_cast %218 : vector<1x1x128xf32> to vector<1x128xf32>
    %c33_303 = arith.constant 33 : index
    %c0_304 = arith.constant 0 : index
    %220 = vector.load %arg13[%c33_303, %c0_304] : memref<64x128xf32, #tpu.memory_space<vmem>>, vector<1x128xf32>
    tpu.vector_store %arg13[%c33_303, %c0_304], %219 {strides = array<i32>} : memref<64x128xf32, #tpu.memory_space<vmem>>, vector<1x128xf32>,
    %c0_305 = arith.constant 0 : index
    %c0_306 = arith.constant 0 : index
    %c34 = arith.constant 34 : index
    %221 = vector.load %arg1[%c0_305, %c0_306, %c34] : memref<1x1x256xf32, #tpu.memory_space<vmem>>, vector<1x1x128xf32>
    %222 = vector.shape_cast %221 : vector<1x1x128xf32> to vector<1x128xf32>
    %c34_307 = arith.constant 34 : index
    %c0_308 = arith.constant 0 : index
    %223 = vector.load %arg13[%c34_307, %c0_308] : memref<64x128xf32, #tpu.memory_space<vmem>>, vector<1x128xf32>
    tpu.vector_store %arg13[%c34_307, %c0_308], %222 {strides = array<i32>} : memref<64x128xf32, #tpu.memory_space<vmem>>, vector<1x128xf32>,
    %c0_309 = arith.constant 0 : index
    %c0_310 = arith.constant 0 : index
    %c35 = arith.constant 35 : index
    %224 = vector.load %arg1[%c0_309, %c0_310, %c35] : memref<1x1x256xf32, #tpu.memory_space<vmem>>, vector<1x1x128xf32>
    %225 = vector.shape_cast %224 : vector<1x1x128xf32> to vector<1x128xf32>
    %c35_311 = arith.constant 35 : index
    %c0_312 = arith.constant 0 : index
    %226 = vector.load %arg13[%c35_311, %c0_312] : memref<64x128xf32, #tpu.memory_space<vmem>>, vector<1x128xf32>
    tpu.vector_store %arg13[%c35_311, %c0_312], %225 {strides = array<i32>} : memref<64x128xf32, #tpu.memory_space<vmem>>, vector<1x128xf32>,
    %c0_313 = arith.constant 0 : index
    %c0_314 = arith.constant 0 : index
    %c36 = arith.constant 36 : index
    %227 = vector.load %arg1[%c0_313, %c0_314, %c36] : memref<1x1x256xf32, #tpu.memory_space<vmem>>, vector<1x1x128xf32>
    %228 = vector.shape_cast %227 : vector<1x1x128xf32> to vector<1x128xf32>
    %c36_315 = arith.constant 36 : index
    %c0_316 = arith.constant 0 : index
    %229 = vector.load %arg13[%c36_315, %c0_316] : memref<64x128xf32, #tpu.memory_space<vmem>>, vector<1x128xf32>
    tpu.vector_store %arg13[%c36_315, %c0_316], %228 {strides = array<i32>} : memref<64x128xf32, #tpu.memory_space<vmem>>, vector<1x128xf32>,
    %c0_317 = arith.constant 0 : index
    %c0_318 = arith.constant 0 : index
    %c37 = arith.constant 37 : index
    %230 = vector.load %arg1[%c0_317, %c0_318, %c37] : memref<1x1x256xf32, #tpu.memory_space<vmem>>, vector<1x1x128xf32>
    %231 = vector.shape_cast %230 : vector<1x1x128xf32> to vector<1x128xf32>
    %c37_319 = arith.constant 37 : index
    %c0_320 = arith.constant 0 : index
    %232 = vector.load %arg13[%c37_319, %c0_320] : memref<64x128xf32, #tpu.memory_space<vmem>>, vector<1x128xf32>
    tpu.vector_store %arg13[%c37_319, %c0_320], %231 {strides = array<i32>} : memref<64x128xf32, #tpu.memory_space<vmem>>, vector<1x128xf32>,
    %c0_321 = arith.constant 0 : index
    %c0_322 = arith.constant 0 : index
    %c38 = arith.constant 38 : index
    %233 = vector.load %arg1[%c0_321, %c0_322, %c38] : memref<1x1x256xf32, #tpu.memory_space<vmem>>, vector<1x1x128xf32>
    %234 = vector.shape_cast %233 : vector<1x1x128xf32> to vector<1x128xf32>
    %c38_323 = arith.constant 38 : index
    %c0_324 = arith.constant 0 : index
    %235 = vector.load %arg13[%c38_323, %c0_324] : memref<64x128xf32, #tpu.memory_space<vmem>>, vector<1x128xf32>
    tpu.vector_store %arg13[%c38_323, %c0_324], %234 {strides = array<i32>} : memref<64x128xf32, #tpu.memory_space<vmem>>, vector<1x128xf32>,
    %c0_325 = arith.constant 0 : index
    %c0_326 = arith.constant 0 : index
    %c39 = arith.constant 39 : index
    %236 = vector.load %arg1[%c0_325, %c0_326, %c39] : memref<1x1x256xf32, #tpu.memory_space<vmem>>, vector<1x1x128xf32>
    %237 = vector.shape_cast %236 : vector<1x1x128xf32> to vector<1x128xf32>
    %c39_327 = arith.constant 39 : index
    %c0_328 = arith.constant 0 : index
    %238 = vector.load %arg13[%c39_327, %c0_328] : memref<64x128xf32, #tpu.memory_space<vmem>>, vector<1x128xf32>
    tpu.vector_store %arg13[%c39_327, %c0_328], %237 {strides = array<i32>} : memref<64x128xf32, #tpu.memory_space<vmem>>, vector<1x128xf32>,
    %c0_329 = arith.constant 0 : index
    %c0_330 = arith.constant 0 : index
    %239 = vector.load %arg5[%c0_329, %c0_330] : memref<128x64xbf16, #tpu.memory_space<vmem>>, vector<128x64xbf16>
    %c0_331 = arith.constant 0 : index
    %c0_332 = arith.constant 0 : index
    %240 = vector.load %arg13[%c0_331, %c0_332] : memref<64x128xf32, #tpu.memory_space<vmem>>, vector<64x128xf32>
    %241 = arith.truncf %240 : vector<64x128xf32> to vector<64x128xbf16>
    %cst_333 = arith.constant dense<0.000000e+00> : vector<128x128xf32>
    %242 = tpu.matmul %239, %241, %cst_333 {dimension_numbers = #tpu.dot_dimension_numbers<[1], [0], [0], [1], [0, 0, 1, 1], [], []>} : vector<128x64xbf16>, vector<64x128xbf16>, vector<128x128xf32> -> vector<128x128xf32>
    %c0_334 = arith.constant 0 : index
    %c0_335 = arith.constant 0 : index
    %243 = vector.load %arg6[%c0_334, %c0_335] : memref<128x1xf32, #tpu.memory_space<vmem>>, vector<128x1xf32>
    %244 = vector.broadcast %243 : vector<128x1xf32> to vector<128x128xf32>
    %245 = arith.addf %242, %244 : vector<128x128xf32>
    %cst_336 = arith.constant 0.000000e+00 : f32
    %246 = vector.broadcast %cst_336 : f32 to vector<128x128xf32>
    %247 = arith.maximumf %245, %246 : vector<128x128xf32>
    %c25_i32 = arith.constant 25 : i32
    %248 = vector.broadcast %c25_i32 : i32 to vector<1x128xi32>
    %249 = arith.cmpi slt, %0, %248 : vector<1x128xi32>
    %cst_337 = arith.constant 0.000000e+00 : f32
    %250 = vector.shape_cast %249 : vector<1x128xi1> to vector<1x128xi1>
    %251 = vector.broadcast %250 : vector<1x128xi1> to vector<128x128xi1>
    %252 = vector.broadcast %cst_337 : f32 to vector<128x128xf32>
    %253 = arith.select %251, %247, %252 : vector<128x128xi1>, vector<128x128xf32>
    %cst_338 = arith.constant dense<0xFF800000> : vector<128xf32>
    %254 = vector.multi_reduction <maximumf>, %253, %cst_338 [1] : vector<128x128xf32> to vector<128xf32>
    %255 = vector.shape_cast %254 : vector<128xf32> to vector<128x1xf32>
    %c0_339 = arith.constant 0 : index
    %c0_340 = arith.constant 0 : index
    %256 = vector.load %arg7[%c0_339, %c0_340] : memref<128x128xf32, #tpu.memory_space<vmem>>, vector<128x128xf32>
    %257 = vector.broadcast %255 : vector<128x1xf32> to vector<128x128xf32>
    %258 = arith.mulf %257, %256 : vector<128x128xf32>
    %cst_341 = arith.constant dense<0.000000e+00> : vector<128xf32>
    %259 = vector.multi_reduction <add>, %258, %cst_341 [0] : vector<128x128xf32> to vector<128xf32>
    %260 = vector.shape_cast %259 : vector<128xf32> to vector<1x128xf32>
    %261 = arith.addf %116, %260 : vector<1x128xf32>
    %cst_342 = arith.constant 0.000000e+00 : f32
    %262 = vector.broadcast %cst_342 : f32 to vector<64x128xf32>
    %c0_343 = arith.constant 0 : index
    %c0_344 = arith.constant 0 : index
    %263 = vector.load %arg13[%c0_343, %c0_344] : memref<64x128xf32, #tpu.memory_space<vmem>>, vector<64x128xf32>
    tpu.vector_store %arg13[%c0_343, %c0_344], %262 {strides = array<i32>} : memref<64x128xf32, #tpu.memory_space<vmem>>, vector<64x128xf32>,
    %c0_345 = arith.constant 0 : index
    %c0_346 = arith.constant 0 : index
    %c0_347 = arith.constant 0 : index
    %264 = vector.load %arg1[%c0_345, %c0_346, %c0_347] : memref<1x1x256xf32, #tpu.memory_space<vmem>>, vector<1x1x128xf32>
    %265 = vector.shape_cast %264 : vector<1x1x128xf32> to vector<1x128xf32>
    %c0_348 = arith.constant 0 : index
    %c0_349 = arith.constant 0 : index
    %266 = vector.load %arg13[%c0_348, %c0_349] : memref<64x128xf32, #tpu.memory_space<vmem>>, vector<1x128xf32>
    tpu.vector_store %arg13[%c0_348, %c0_349], %265 {strides = array<i32>} : memref<64x128xf32, #tpu.memory_space<vmem>>, vector<1x128xf32>,
    %c0_350 = arith.constant 0 : index
    %c0_351 = arith.constant 0 : index
    %c1_352 = arith.constant 1 : index
    %267 = vector.load %arg1[%c0_350, %c0_351, %c1_352] : memref<1x1x256xf32, #tpu.memory_space<vmem>>, vector<1x1x128xf32>
    %268 = vector.shape_cast %267 : vector<1x1x128xf32> to vector<1x128xf32>
    %c1_353 = arith.constant 1 : index
    %c0_354 = arith.constant 0 : index
    %269 = vector.load %arg13[%c1_353, %c0_354] : memref<64x128xf32, #tpu.memory_space<vmem>>, vector<1x128xf32>
    tpu.vector_store %arg13[%c1_353, %c0_354], %268 {strides = array<i32>} : memref<64x128xf32, #tpu.memory_space<vmem>>, vector<1x128xf32>,
    %c0_355 = arith.constant 0 : index
    %c0_356 = arith.constant 0 : index
    %c2_357 = arith.constant 2 : index
    %270 = vector.load %arg1[%c0_355, %c0_356, %c2_357] : memref<1x1x256xf32, #tpu.memory_space<vmem>>, vector<1x1x128xf32>
    %271 = vector.shape_cast %270 : vector<1x1x128xf32> to vector<1x128xf32>
    %c2_358 = arith.constant 2 : index
    %c0_359 = arith.constant 0 : index
    %272 = vector.load %arg13[%c2_358, %c0_359] : memref<64x128xf32, #tpu.memory_space<vmem>>, vector<1x128xf32>
    tpu.vector_store %arg13[%c2_358, %c0_359], %271 {strides = array<i32>} : memref<64x128xf32, #tpu.memory_space<vmem>>, vector<1x128xf32>,
    %c0_360 = arith.constant 0 : index
    %c0_361 = arith.constant 0 : index
    %c3_362 = arith.constant 3 : index
    %273 = vector.load %arg1[%c0_360, %c0_361, %c3_362] : memref<1x1x256xf32, #tpu.memory_space<vmem>>, vector<1x1x128xf32>
    %274 = vector.shape_cast %273 : vector<1x1x128xf32> to vector<1x128xf32>
    %c3_363 = arith.constant 3 : index
    %c0_364 = arith.constant 0 : index
    %275 = vector.load %arg13[%c3_363, %c0_364] : memref<64x128xf32, #tpu.memory_space<vmem>>, vector<1x128xf32>
    tpu.vector_store %arg13[%c3_363, %c0_364], %274 {strides = array<i32>} : memref<64x128xf32, #tpu.memory_space<vmem>>, vector<1x128xf32>,
    %c0_365 = arith.constant 0 : index
    %c0_366 = arith.constant 0 : index
    %c4_367 = arith.constant 4 : index
    %276 = vector.load %arg1[%c0_365, %c0_366, %c4_367] : memref<1x1x256xf32, #tpu.memory_space<vmem>>, vector<1x1x128xf32>
    %277 = vector.shape_cast %276 : vector<1x1x128xf32> to vector<1x128xf32>
    %c4_368 = arith.constant 4 : index
    %c0_369 = arith.constant 0 : index
    %278 = vector.load %arg13[%c4_368, %c0_369] : memref<64x128xf32, #tpu.memory_space<vmem>>, vector<1x128xf32>
    tpu.vector_store %arg13[%c4_368, %c0_369], %277 {strides = array<i32>} : memref<64x128xf32, #tpu.memory_space<vmem>>, vector<1x128xf32>,
    %c0_370 = arith.constant 0 : index
    %c0_371 = arith.constant 0 : index
    %c5_372 = arith.constant 5 : index
    %279 = vector.load %arg1[%c0_370, %c0_371, %c5_372] : memref<1x1x256xf32, #tpu.memory_space<vmem>>, vector<1x1x128xf32>
    %280 = vector.shape_cast %279 : vector<1x1x128xf32> to vector<1x128xf32>
    %c5_373 = arith.constant 5 : index
    %c0_374 = arith.constant 0 : index
    %281 = vector.load %arg13[%c5_373, %c0_374] : memref<64x128xf32, #tpu.memory_space<vmem>>, vector<1x128xf32>
    tpu.vector_store %arg13[%c5_373, %c0_374], %280 {strides = array<i32>} : memref<64x128xf32, #tpu.memory_space<vmem>>, vector<1x128xf32>,
    %c0_375 = arith.constant 0 : index
    %c0_376 = arith.constant 0 : index
    %c6_377 = arith.constant 6 : index
    %282 = vector.load %arg1[%c0_375, %c0_376, %c6_377] : memref<1x1x256xf32, #tpu.memory_space<vmem>>, vector<1x1x128xf32>
    %283 = vector.shape_cast %282 : vector<1x1x128xf32> to vector<1x128xf32>
    %c6_378 = arith.constant 6 : index
    %c0_379 = arith.constant 0 : index
    %284 = vector.load %arg13[%c6_378, %c0_379] : memref<64x128xf32, #tpu.memory_space<vmem>>, vector<1x128xf32>
    tpu.vector_store %arg13[%c6_378, %c0_379], %283 {strides = array<i32>} : memref<64x128xf32, #tpu.memory_space<vmem>>, vector<1x128xf32>,
    %c0_380 = arith.constant 0 : index
    %c0_381 = arith.constant 0 : index
    %c7_382 = arith.constant 7 : index
    %285 = vector.load %arg1[%c0_380, %c0_381, %c7_382] : memref<1x1x256xf32, #tpu.memory_space<vmem>>, vector<1x1x128xf32>
    %286 = vector.shape_cast %285 : vector<1x1x128xf32> to vector<1x128xf32>
    %c7_383 = arith.constant 7 : index
    %c0_384 = arith.constant 0 : index
    %287 = vector.load %arg13[%c7_383, %c0_384] : memref<64x128xf32, #tpu.memory_space<vmem>>, vector<1x128xf32>
    tpu.vector_store %arg13[%c7_383, %c0_384], %286 {strides = array<i32>} : memref<64x128xf32, #tpu.memory_space<vmem>>, vector<1x128xf32>,
    %c0_385 = arith.constant 0 : index
    %c0_386 = arith.constant 0 : index
    %c8_387 = arith.constant 8 : index
    %288 = vector.load %arg1[%c0_385, %c0_386, %c8_387] : memref<1x1x256xf32, #tpu.memory_space<vmem>>, vector<1x1x128xf32>
    %289 = vector.shape_cast %288 : vector<1x1x128xf32> to vector<1x128xf32>
    %c8_388 = arith.constant 8 : index
    %c0_389 = arith.constant 0 : index
    %290 = vector.load %arg13[%c8_388, %c0_389] : memref<64x128xf32, #tpu.memory_space<vmem>>, vector<1x128xf32>
    tpu.vector_store %arg13[%c8_388, %c0_389], %289 {strides = array<i32>} : memref<64x128xf32, #tpu.memory_space<vmem>>, vector<1x128xf32>,
    %c0_390 = arith.constant 0 : index
    %c0_391 = arith.constant 0 : index
    %c9_392 = arith.constant 9 : index
    %291 = vector.load %arg1[%c0_390, %c0_391, %c9_392] : memref<1x1x256xf32, #tpu.memory_space<vmem>>, vector<1x1x128xf32>
    %292 = vector.shape_cast %291 : vector<1x1x128xf32> to vector<1x128xf32>
    %c9_393 = arith.constant 9 : index
    %c0_394 = arith.constant 0 : index
    %293 = vector.load %arg13[%c9_393, %c0_394] : memref<64x128xf32, #tpu.memory_space<vmem>>, vector<1x128xf32>
    tpu.vector_store %arg13[%c9_393, %c0_394], %292 {strides = array<i32>} : memref<64x128xf32, #tpu.memory_space<vmem>>, vector<1x128xf32>,
    %c0_395 = arith.constant 0 : index
    %c0_396 = arith.constant 0 : index
    %c10_397 = arith.constant 10 : index
    %294 = vector.load %arg1[%c0_395, %c0_396, %c10_397] : memref<1x1x256xf32, #tpu.memory_space<vmem>>, vector<1x1x128xf32>
    %295 = vector.shape_cast %294 : vector<1x1x128xf32> to vector<1x128xf32>
    %c10_398 = arith.constant 10 : index
    %c0_399 = arith.constant 0 : index
    %296 = vector.load %arg13[%c10_398, %c0_399] : memref<64x128xf32, #tpu.memory_space<vmem>>, vector<1x128xf32>
    tpu.vector_store %arg13[%c10_398, %c0_399], %295 {strides = array<i32>} : memref<64x128xf32, #tpu.memory_space<vmem>>, vector<1x128xf32>,
    %c0_400 = arith.constant 0 : index
    %c0_401 = arith.constant 0 : index
    %c11_402 = arith.constant 11 : index
    %297 = vector.load %arg1[%c0_400, %c0_401, %c11_402] : memref<1x1x256xf32, #tpu.memory_space<vmem>>, vector<1x1x128xf32>
    %298 = vector.shape_cast %297 : vector<1x1x128xf32> to vector<1x128xf32>
    %c11_403 = arith.constant 11 : index
    %c0_404 = arith.constant 0 : index
    %299 = vector.load %arg13[%c11_403, %c0_404] : memref<64x128xf32, #tpu.memory_space<vmem>>, vector<1x128xf32>
    tpu.vector_store %arg13[%c11_403, %c0_404], %298 {strides = array<i32>} : memref<64x128xf32, #tpu.memory_space<vmem>>, vector<1x128xf32>,
    %c0_405 = arith.constant 0 : index
    %c0_406 = arith.constant 0 : index
    %c12_407 = arith.constant 12 : index
    %300 = vector.load %arg1[%c0_405, %c0_406, %c12_407] : memref<1x1x256xf32, #tpu.memory_space<vmem>>, vector<1x1x128xf32>
    %301 = vector.shape_cast %300 : vector<1x1x128xf32> to vector<1x128xf32>
    %c12_408 = arith.constant 12 : index
    %c0_409 = arith.constant 0 : index
    %302 = vector.load %arg13[%c12_408, %c0_409] : memref<64x128xf32, #tpu.memory_space<vmem>>, vector<1x128xf32>
    tpu.vector_store %arg13[%c12_408, %c0_409], %301 {strides = array<i32>} : memref<64x128xf32, #tpu.memory_space<vmem>>, vector<1x128xf32>,
    %c0_410 = arith.constant 0 : index
    %c0_411 = arith.constant 0 : index
    %c13_412 = arith.constant 13 : index
    %303 = vector.load %arg1[%c0_410, %c0_411, %c13_412] : memref<1x1x256xf32, #tpu.memory_space<vmem>>, vector<1x1x128xf32>
    %304 = vector.shape_cast %303 : vector<1x1x128xf32> to vector<1x128xf32>
    %c13_413 = arith.constant 13 : index
    %c0_414 = arith.constant 0 : index
    %305 = vector.load %arg13[%c13_413, %c0_414] : memref<64x128xf32, #tpu.memory_space<vmem>>, vector<1x128xf32>
    tpu.vector_store %arg13[%c13_413, %c0_414], %304 {strides = array<i32>} : memref<64x128xf32, #tpu.memory_space<vmem>>, vector<1x128xf32>,
    %c0_415 = arith.constant 0 : index
    %c0_416 = arith.constant 0 : index
    %c14_417 = arith.constant 14 : index
    %306 = vector.load %arg1[%c0_415, %c0_416, %c14_417] : memref<1x1x256xf32, #tpu.memory_space<vmem>>, vector<1x1x128xf32>
    %307 = vector.shape_cast %306 : vector<1x1x128xf32> to vector<1x128xf32>
    %c14_418 = arith.constant 14 : index
    %c0_419 = arith.constant 0 : index
    %308 = vector.load %arg13[%c14_418, %c0_419] : memref<64x128xf32, #tpu.memory_space<vmem>>, vector<1x128xf32>
    tpu.vector_store %arg13[%c14_418, %c0_419], %307 {strides = array<i32>} : memref<64x128xf32, #tpu.memory_space<vmem>>, vector<1x128xf32>,
    %c0_420 = arith.constant 0 : index
    %c0_421 = arith.constant 0 : index
    %c15_422 = arith.constant 15 : index
    %309 = vector.load %arg1[%c0_420, %c0_421, %c15_422] : memref<1x1x256xf32, #tpu.memory_space<vmem>>, vector<1x1x128xf32>
    %310 = vector.shape_cast %309 : vector<1x1x128xf32> to vector<1x128xf32>
    %c15_423 = arith.constant 15 : index
    %c0_424 = arith.constant 0 : index
    %311 = vector.load %arg13[%c15_423, %c0_424] : memref<64x128xf32, #tpu.memory_space<vmem>>, vector<1x128xf32>
    tpu.vector_store %arg13[%c15_423, %c0_424], %310 {strides = array<i32>} : memref<64x128xf32, #tpu.memory_space<vmem>>, vector<1x128xf32>,
    %c0_425 = arith.constant 0 : index
    %c0_426 = arith.constant 0 : index
    %c16_427 = arith.constant 16 : index
    %312 = vector.load %arg1[%c0_425, %c0_426, %c16_427] : memref<1x1x256xf32, #tpu.memory_space<vmem>>, vector<1x1x128xf32>
    %313 = vector.shape_cast %312 : vector<1x1x128xf32> to vector<1x128xf32>
    %c16_428 = arith.constant 16 : index
    %c0_429 = arith.constant 0 : index
    %314 = vector.load %arg13[%c16_428, %c0_429] : memref<64x128xf32, #tpu.memory_space<vmem>>, vector<1x128xf32>
    tpu.vector_store %arg13[%c16_428, %c0_429], %313 {strides = array<i32>} : memref<64x128xf32, #tpu.memory_space<vmem>>, vector<1x128xf32>,
    %c0_430 = arith.constant 0 : index
    %c0_431 = arith.constant 0 : index
    %c17_432 = arith.constant 17 : index
    %315 = vector.load %arg1[%c0_430, %c0_431, %c17_432] : memref<1x1x256xf32, #tpu.memory_space<vmem>>, vector<1x1x128xf32>
    %316 = vector.shape_cast %315 : vector<1x1x128xf32> to vector<1x128xf32>
    %c17_433 = arith.constant 17 : index
    %c0_434 = arith.constant 0 : index
    %317 = vector.load %arg13[%c17_433, %c0_434] : memref<64x128xf32, #tpu.memory_space<vmem>>, vector<1x128xf32>
    tpu.vector_store %arg13[%c17_433, %c0_434], %316 {strides = array<i32>} : memref<64x128xf32, #tpu.memory_space<vmem>>, vector<1x128xf32>,
    %c0_435 = arith.constant 0 : index
    %c0_436 = arith.constant 0 : index
    %c18_437 = arith.constant 18 : index
    %318 = vector.load %arg1[%c0_435, %c0_436, %c18_437] : memref<1x1x256xf32, #tpu.memory_space<vmem>>, vector<1x1x128xf32>
    %319 = vector.shape_cast %318 : vector<1x1x128xf32> to vector<1x128xf32>
    %c18_438 = arith.constant 18 : index
    %c0_439 = arith.constant 0 : index
    %320 = vector.load %arg13[%c18_438, %c0_439] : memref<64x128xf32, #tpu.memory_space<vmem>>, vector<1x128xf32>
    tpu.vector_store %arg13[%c18_438, %c0_439], %319 {strides = array<i32>} : memref<64x128xf32, #tpu.memory_space<vmem>>, vector<1x128xf32>,
    %c0_440 = arith.constant 0 : index
    %c0_441 = arith.constant 0 : index
    %c19_442 = arith.constant 19 : index
    %321 = vector.load %arg1[%c0_440, %c0_441, %c19_442] : memref<1x1x256xf32, #tpu.memory_space<vmem>>, vector<1x1x128xf32>
    %322 = vector.shape_cast %321 : vector<1x1x128xf32> to vector<1x128xf32>
    %c19_443 = arith.constant 19 : index
    %c0_444 = arith.constant 0 : index
    %323 = vector.load %arg13[%c19_443, %c0_444] : memref<64x128xf32, #tpu.memory_space<vmem>>, vector<1x128xf32>
    tpu.vector_store %arg13[%c19_443, %c0_444], %322 {strides = array<i32>} : memref<64x128xf32, #tpu.memory_space<vmem>>, vector<1x128xf32>,
    %c0_445 = arith.constant 0 : index
    %c0_446 = arith.constant 0 : index
    %c20_447 = arith.constant 20 : index
    %324 = vector.load %arg1[%c0_445, %c0_446, %c20_447] : memref<1x1x256xf32, #tpu.memory_space<vmem>>, vector<1x1x128xf32>
    %325 = vector.shape_cast %324 : vector<1x1x128xf32> to vector<1x128xf32>
    %c20_448 = arith.constant 20 : index
    %c0_449 = arith.constant 0 : index
    %326 = vector.load %arg13[%c20_448, %c0_449] : memref<64x128xf32, #tpu.memory_space<vmem>>, vector<1x128xf32>
    tpu.vector_store %arg13[%c20_448, %c0_449], %325 {strides = array<i32>} : memref<64x128xf32, #tpu.memory_space<vmem>>, vector<1x128xf32>,
    %c0_450 = arith.constant 0 : index
    %c0_451 = arith.constant 0 : index
    %c21_452 = arith.constant 21 : index
    %327 = vector.load %arg1[%c0_450, %c0_451, %c21_452] : memref<1x1x256xf32, #tpu.memory_space<vmem>>, vector<1x1x128xf32>
    %328 = vector.shape_cast %327 : vector<1x1x128xf32> to vector<1x128xf32>
    %c21_453 = arith.constant 21 : index
    %c0_454 = arith.constant 0 : index
    %329 = vector.load %arg13[%c21_453, %c0_454] : memref<64x128xf32, #tpu.memory_space<vmem>>, vector<1x128xf32>
    tpu.vector_store %arg13[%c21_453, %c0_454], %328 {strides = array<i32>} : memref<64x128xf32, #tpu.memory_space<vmem>>, vector<1x128xf32>,
    %c0_455 = arith.constant 0 : index
    %c0_456 = arith.constant 0 : index
    %c22_457 = arith.constant 22 : index
    %330 = vector.load %arg1[%c0_455, %c0_456, %c22_457] : memref<1x1x256xf32, #tpu.memory_space<vmem>>, vector<1x1x128xf32>
    %331 = vector.shape_cast %330 : vector<1x1x128xf32> to vector<1x128xf32>
    %c22_458 = arith.constant 22 : index
    %c0_459 = arith.constant 0 : index
    %332 = vector.load %arg13[%c22_458, %c0_459] : memref<64x128xf32, #tpu.memory_space<vmem>>, vector<1x128xf32>
    tpu.vector_store %arg13[%c22_458, %c0_459], %331 {strides = array<i32>} : memref<64x128xf32, #tpu.memory_space<vmem>>, vector<1x128xf32>,
    %c0_460 = arith.constant 0 : index
    %c0_461 = arith.constant 0 : index
    %c23_462 = arith.constant 23 : index
    %333 = vector.load %arg1[%c0_460, %c0_461, %c23_462] : memref<1x1x256xf32, #tpu.memory_space<vmem>>, vector<1x1x128xf32>
    %334 = vector.shape_cast %333 : vector<1x1x128xf32> to vector<1x128xf32>
    %c23_463 = arith.constant 23 : index
    %c0_464 = arith.constant 0 : index
    %335 = vector.load %arg13[%c23_463, %c0_464] : memref<64x128xf32, #tpu.memory_space<vmem>>, vector<1x128xf32>
    tpu.vector_store %arg13[%c23_463, %c0_464], %334 {strides = array<i32>} : memref<64x128xf32, #tpu.memory_space<vmem>>, vector<1x128xf32>,
    %c0_465 = arith.constant 0 : index
    %c0_466 = arith.constant 0 : index
    %c24_467 = arith.constant 24 : index
    %336 = vector.load %arg1[%c0_465, %c0_466, %c24_467] : memref<1x1x256xf32, #tpu.memory_space<vmem>>, vector<1x1x128xf32>
    %337 = vector.shape_cast %336 : vector<1x1x128xf32> to vector<1x128xf32>
    %c24_468 = arith.constant 24 : index
    %c0_469 = arith.constant 0 : index
    %338 = vector.load %arg13[%c24_468, %c0_469] : memref<64x128xf32, #tpu.memory_space<vmem>>, vector<1x128xf32>
    tpu.vector_store %arg13[%c24_468, %c0_469], %337 {strides = array<i32>} : memref<64x128xf32, #tpu.memory_space<vmem>>, vector<1x128xf32>,
    %c0_470 = arith.constant 0 : index
    %c0_471 = arith.constant 0 : index
    %c25_472 = arith.constant 25 : index
    %339 = vector.load %arg1[%c0_470, %c0_471, %c25_472] : memref<1x1x256xf32, #tpu.memory_space<vmem>>, vector<1x1x128xf32>
    %340 = vector.shape_cast %339 : vector<1x1x128xf32> to vector<1x128xf32>
    %c25_473 = arith.constant 25 : index
    %c0_474 = arith.constant 0 : index
    %341 = vector.load %arg13[%c25_473, %c0_474] : memref<64x128xf32, #tpu.memory_space<vmem>>, vector<1x128xf32>
    tpu.vector_store %arg13[%c25_473, %c0_474], %340 {strides = array<i32>} : memref<64x128xf32, #tpu.memory_space<vmem>>, vector<1x128xf32>,
    %c0_475 = arith.constant 0 : index
    %c0_476 = arith.constant 0 : index
    %c26_477 = arith.constant 26 : index
    %342 = vector.load %arg1[%c0_475, %c0_476, %c26_477] : memref<1x1x256xf32, #tpu.memory_space<vmem>>, vector<1x1x128xf32>
    %343 = vector.shape_cast %342 : vector<1x1x128xf32> to vector<1x128xf32>
    %c26_478 = arith.constant 26 : index
    %c0_479 = arith.constant 0 : index
    %344 = vector.load %arg13[%c26_478, %c0_479] : memref<64x128xf32, #tpu.memory_space<vmem>>, vector<1x128xf32>
    tpu.vector_store %arg13[%c26_478, %c0_479], %343 {strides = array<i32>} : memref<64x128xf32, #tpu.memory_space<vmem>>, vector<1x128xf32>,
    %c0_480 = arith.constant 0 : index
    %c0_481 = arith.constant 0 : index
    %c27_482 = arith.constant 27 : index
    %345 = vector.load %arg1[%c0_480, %c0_481, %c27_482] : memref<1x1x256xf32, #tpu.memory_space<vmem>>, vector<1x1x128xf32>
    %346 = vector.shape_cast %345 : vector<1x1x128xf32> to vector<1x128xf32>
    %c27_483 = arith.constant 27 : index
    %c0_484 = arith.constant 0 : index
    %347 = vector.load %arg13[%c27_483, %c0_484] : memref<64x128xf32, #tpu.memory_space<vmem>>, vector<1x128xf32>
    tpu.vector_store %arg13[%c27_483, %c0_484], %346 {strides = array<i32>} : memref<64x128xf32, #tpu.memory_space<vmem>>, vector<1x128xf32>,
    %c0_485 = arith.constant 0 : index
    %c0_486 = arith.constant 0 : index
    %c28_487 = arith.constant 28 : index
    %348 = vector.load %arg1[%c0_485, %c0_486, %c28_487] : memref<1x1x256xf32, #tpu.memory_space<vmem>>, vector<1x1x128xf32>
    %349 = vector.shape_cast %348 : vector<1x1x128xf32> to vector<1x128xf32>
    %c28_488 = arith.constant 28 : index
    %c0_489 = arith.constant 0 : index
    %350 = vector.load %arg13[%c28_488, %c0_489] : memref<64x128xf32, #tpu.memory_space<vmem>>, vector<1x128xf32>
    tpu.vector_store %arg13[%c28_488, %c0_489], %349 {strides = array<i32>} : memref<64x128xf32, #tpu.memory_space<vmem>>, vector<1x128xf32>,
    %c0_490 = arith.constant 0 : index
    %c0_491 = arith.constant 0 : index
    %c29_492 = arith.constant 29 : index
    %351 = vector.load %arg1[%c0_490, %c0_491, %c29_492] : memref<1x1x256xf32, #tpu.memory_space<vmem>>, vector<1x1x128xf32>
    %352 = vector.shape_cast %351 : vector<1x1x128xf32> to vector<1x128xf32>
    %c29_493 = arith.constant 29 : index
    %c0_494 = arith.constant 0 : index
    %353 = vector.load %arg13[%c29_493, %c0_494] : memref<64x128xf32, #tpu.memory_space<vmem>>, vector<1x128xf32>
    tpu.vector_store %arg13[%c29_493, %c0_494], %352 {strides = array<i32>} : memref<64x128xf32, #tpu.memory_space<vmem>>, vector<1x128xf32>,
    %c0_495 = arith.constant 0 : index
    %c0_496 = arith.constant 0 : index
    %c30_497 = arith.constant 30 : index
    %354 = vector.load %arg1[%c0_495, %c0_496, %c30_497] : memref<1x1x256xf32, #tpu.memory_space<vmem>>, vector<1x1x128xf32>
    %355 = vector.shape_cast %354 : vector<1x1x128xf32> to vector<1x128xf32>
    %c30_498 = arith.constant 30 : index
    %c0_499 = arith.constant 0 : index
    %356 = vector.load %arg13[%c30_498, %c0_499] : memref<64x128xf32, #tpu.memory_space<vmem>>, vector<1x128xf32>
    tpu.vector_store %arg13[%c30_498, %c0_499], %355 {strides = array<i32>} : memref<64x128xf32, #tpu.memory_space<vmem>>, vector<1x128xf32>,
    %c0_500 = arith.constant 0 : index
    %c0_501 = arith.constant 0 : index
    %c31_502 = arith.constant 31 : index
    %357 = vector.load %arg1[%c0_500, %c0_501, %c31_502] : memref<1x1x256xf32, #tpu.memory_space<vmem>>, vector<1x1x128xf32>
    %358 = vector.shape_cast %357 : vector<1x1x128xf32> to vector<1x128xf32>
    %c31_503 = arith.constant 31 : index
    %c0_504 = arith.constant 0 : index
    %359 = vector.load %arg13[%c31_503, %c0_504] : memref<64x128xf32, #tpu.memory_space<vmem>>, vector<1x128xf32>
    tpu.vector_store %arg13[%c31_503, %c0_504], %358 {strides = array<i32>} : memref<64x128xf32, #tpu.memory_space<vmem>>, vector<1x128xf32>,
    %c0_505 = arith.constant 0 : index
    %c0_506 = arith.constant 0 : index
    %c32_507 = arith.constant 32 : index
    %360 = vector.load %arg1[%c0_505, %c0_506, %c32_507] : memref<1x1x256xf32, #tpu.memory_space<vmem>>, vector<1x1x128xf32>
    %361 = vector.shape_cast %360 : vector<1x1x128xf32> to vector<1x128xf32>
    %c32_508 = arith.constant 32 : index
    %c0_509 = arith.constant 0 : index
    %362 = vector.load %arg13[%c32_508, %c0_509] : memref<64x128xf32, #tpu.memory_space<vmem>>, vector<1x128xf32>
    tpu.vector_store %arg13[%c32_508, %c0_509], %361 {strides = array<i32>} : memref<64x128xf32, #tpu.memory_space<vmem>>, vector<1x128xf32>,
    %c0_510 = arith.constant 0 : index
    %c0_511 = arith.constant 0 : index
    %c33_512 = arith.constant 33 : index
    %363 = vector.load %arg1[%c0_510, %c0_511, %c33_512] : memref<1x1x256xf32, #tpu.memory_space<vmem>>, vector<1x1x128xf32>
    %364 = vector.shape_cast %363 : vector<1x1x128xf32> to vector<1x128xf32>
    %c33_513 = arith.constant 33 : index
    %c0_514 = arith.constant 0 : index
    %365 = vector.load %arg13[%c33_513, %c0_514] : memref<64x128xf32, #tpu.memory_space<vmem>>, vector<1x128xf32>
    tpu.vector_store %arg13[%c33_513, %c0_514], %364 {strides = array<i32>} : memref<64x128xf32, #tpu.memory_space<vmem>>, vector<1x128xf32>,
    %c0_515 = arith.constant 0 : index
    %c0_516 = arith.constant 0 : index
    %c34_517 = arith.constant 34 : index
    %366 = vector.load %arg1[%c0_515, %c0_516, %c34_517] : memref<1x1x256xf32, #tpu.memory_space<vmem>>, vector<1x1x128xf32>
    %367 = vector.shape_cast %366 : vector<1x1x128xf32> to vector<1x128xf32>
    %c34_518 = arith.constant 34 : index
    %c0_519 = arith.constant 0 : index
    %368 = vector.load %arg13[%c34_518, %c0_519] : memref<64x128xf32, #tpu.memory_space<vmem>>, vector<1x128xf32>
    tpu.vector_store %arg13[%c34_518, %c0_519], %367 {strides = array<i32>} : memref<64x128xf32, #tpu.memory_space<vmem>>, vector<1x128xf32>,
    %c0_520 = arith.constant 0 : index
    %c0_521 = arith.constant 0 : index
    %c35_522 = arith.constant 35 : index
    %369 = vector.load %arg1[%c0_520, %c0_521, %c35_522] : memref<1x1x256xf32, #tpu.memory_space<vmem>>, vector<1x1x128xf32>
    %370 = vector.shape_cast %369 : vector<1x1x128xf32> to vector<1x128xf32>
    %c35_523 = arith.constant 35 : index
    %c0_524 = arith.constant 0 : index
    %371 = vector.load %arg13[%c35_523, %c0_524] : memref<64x128xf32, #tpu.memory_space<vmem>>, vector<1x128xf32>
    tpu.vector_store %arg13[%c35_523, %c0_524], %370 {strides = array<i32>} : memref<64x128xf32, #tpu.memory_space<vmem>>, vector<1x128xf32>,
    %c0_525 = arith.constant 0 : index
    %c0_526 = arith.constant 0 : index
    %c36_527 = arith.constant 36 : index
    %372 = vector.load %arg1[%c0_525, %c0_526, %c36_527] : memref<1x1x256xf32, #tpu.memory_space<vmem>>, vector<1x1x128xf32>
    %373 = vector.shape_cast %372 : vector<1x1x128xf32> to vector<1x128xf32>
    %c36_528 = arith.constant 36 : index
    %c0_529 = arith.constant 0 : index
    %374 = vector.load %arg13[%c36_528, %c0_529] : memref<64x128xf32, #tpu.memory_space<vmem>>, vector<1x128xf32>
    tpu.vector_store %arg13[%c36_528, %c0_529], %373 {strides = array<i32>} : memref<64x128xf32, #tpu.memory_space<vmem>>, vector<1x128xf32>,
    %c0_530 = arith.constant 0 : index
    %c0_531 = arith.constant 0 : index
    %c37_532 = arith.constant 37 : index
    %375 = vector.load %arg1[%c0_530, %c0_531, %c37_532] : memref<1x1x256xf32, #tpu.memory_space<vmem>>, vector<1x1x128xf32>
    %376 = vector.shape_cast %375 : vector<1x1x128xf32> to vector<1x128xf32>
    %c37_533 = arith.constant 37 : index
    %c0_534 = arith.constant 0 : index
    %377 = vector.load %arg13[%c37_533, %c0_534] : memref<64x128xf32, #tpu.memory_space<vmem>>, vector<1x128xf32>
    tpu.vector_store %arg13[%c37_533, %c0_534], %376 {strides = array<i32>} : memref<64x128xf32, #tpu.memory_space<vmem>>, vector<1x128xf32>,
    %c0_535 = arith.constant 0 : index
    %c0_536 = arith.constant 0 : index
    %c38_537 = arith.constant 38 : index
    %378 = vector.load %arg1[%c0_535, %c0_536, %c38_537] : memref<1x1x256xf32, #tpu.memory_space<vmem>>, vector<1x1x128xf32>
    %379 = vector.shape_cast %378 : vector<1x1x128xf32> to vector<1x128xf32>
    %c38_538 = arith.constant 38 : index
    %c0_539 = arith.constant 0 : index
    %380 = vector.load %arg13[%c38_538, %c0_539] : memref<64x128xf32, #tpu.memory_space<vmem>>, vector<1x128xf32>
    tpu.vector_store %arg13[%c38_538, %c0_539], %379 {strides = array<i32>} : memref<64x128xf32, #tpu.memory_space<vmem>>, vector<1x128xf32>,
    %c0_540 = arith.constant 0 : index
    %c0_541 = arith.constant 0 : index
    %c39_542 = arith.constant 39 : index
    %381 = vector.load %arg1[%c0_540, %c0_541, %c39_542] : memref<1x1x256xf32, #tpu.memory_space<vmem>>, vector<1x1x128xf32>
    %382 = vector.shape_cast %381 : vector<1x1x128xf32> to vector<1x128xf32>
    %c39_543 = arith.constant 39 : index
    %c0_544 = arith.constant 0 : index
    %383 = vector.load %arg13[%c39_543, %c0_544] : memref<64x128xf32, #tpu.memory_space<vmem>>, vector<1x128xf32>
    tpu.vector_store %arg13[%c39_543, %c0_544], %382 {strides = array<i32>} : memref<64x128xf32, #tpu.memory_space<vmem>>, vector<1x128xf32>,
    %c0_545 = arith.constant 0 : index
    %c0_546 = arith.constant 0 : index
    %c40 = arith.constant 40 : index
    %384 = vector.load %arg1[%c0_545, %c0_546, %c40] : memref<1x1x256xf32, #tpu.memory_space<vmem>>, vector<1x1x128xf32>
    %385 = vector.shape_cast %384 : vector<1x1x128xf32> to vector<1x128xf32>
    %c40_547 = arith.constant 40 : index
    %c0_548 = arith.constant 0 : index
    %386 = vector.load %arg13[%c40_547, %c0_548] : memref<64x128xf32, #tpu.memory_space<vmem>>, vector<1x128xf32>
    tpu.vector_store %arg13[%c40_547, %c0_548], %385 {strides = array<i32>} : memref<64x128xf32, #tpu.memory_space<vmem>>, vector<1x128xf32>,
    %c0_549 = arith.constant 0 : index
    %c0_550 = arith.constant 0 : index
    %c41 = arith.constant 41 : index
    %387 = vector.load %arg1[%c0_549, %c0_550, %c41] : memref<1x1x256xf32, #tpu.memory_space<vmem>>, vector<1x1x128xf32>
    %388 = vector.shape_cast %387 : vector<1x1x128xf32> to vector<1x128xf32>
    %c41_551 = arith.constant 41 : index
    %c0_552 = arith.constant 0 : index
    %389 = vector.load %arg13[%c41_551, %c0_552] : memref<64x128xf32, #tpu.memory_space<vmem>>, vector<1x128xf32>
    tpu.vector_store %arg13[%c41_551, %c0_552], %388 {strides = array<i32>} : memref<64x128xf32, #tpu.memory_space<vmem>>, vector<1x128xf32>,
    %c0_553 = arith.constant 0 : index
    %c0_554 = arith.constant 0 : index
    %c42 = arith.constant 42 : index
    %390 = vector.load %arg1[%c0_553, %c0_554, %c42] : memref<1x1x256xf32, #tpu.memory_space<vmem>>, vector<1x1x128xf32>
    %391 = vector.shape_cast %390 : vector<1x1x128xf32> to vector<1x128xf32>
    %c42_555 = arith.constant 42 : index
    %c0_556 = arith.constant 0 : index
    %392 = vector.load %arg13[%c42_555, %c0_556] : memref<64x128xf32, #tpu.memory_space<vmem>>, vector<1x128xf32>
    tpu.vector_store %arg13[%c42_555, %c0_556], %391 {strides = array<i32>} : memref<64x128xf32, #tpu.memory_space<vmem>>, vector<1x128xf32>,
    %c0_557 = arith.constant 0 : index
    %c0_558 = arith.constant 0 : index
    %c43 = arith.constant 43 : index
    %393 = vector.load %arg1[%c0_557, %c0_558, %c43] : memref<1x1x256xf32, #tpu.memory_space<vmem>>, vector<1x1x128xf32>
    %394 = vector.shape_cast %393 : vector<1x1x128xf32> to vector<1x128xf32>
    %c43_559 = arith.constant 43 : index
    %c0_560 = arith.constant 0 : index
    %395 = vector.load %arg13[%c43_559, %c0_560] : memref<64x128xf32, #tpu.memory_space<vmem>>, vector<1x128xf32>
    tpu.vector_store %arg13[%c43_559, %c0_560], %394 {strides = array<i32>} : memref<64x128xf32, #tpu.memory_space<vmem>>, vector<1x128xf32>,
    %c0_561 = arith.constant 0 : index
    %c0_562 = arith.constant 0 : index
    %c44 = arith.constant 44 : index
    %396 = vector.load %arg1[%c0_561, %c0_562, %c44] : memref<1x1x256xf32, #tpu.memory_space<vmem>>, vector<1x1x128xf32>
    %397 = vector.shape_cast %396 : vector<1x1x128xf32> to vector<1x128xf32>
    %c44_563 = arith.constant 44 : index
    %c0_564 = arith.constant 0 : index
    %398 = vector.load %arg13[%c44_563, %c0_564] : memref<64x128xf32, #tpu.memory_space<vmem>>, vector<1x128xf32>
    tpu.vector_store %arg13[%c44_563, %c0_564], %397 {strides = array<i32>} : memref<64x128xf32, #tpu.memory_space<vmem>>, vector<1x128xf32>,
    %c0_565 = arith.constant 0 : index
    %c0_566 = arith.constant 0 : index
    %c45 = arith.constant 45 : index
    %399 = vector.load %arg1[%c0_565, %c0_566, %c45] : memref<1x1x256xf32, #tpu.memory_space<vmem>>, vector<1x1x128xf32>
    %400 = vector.shape_cast %399 : vector<1x1x128xf32> to vector<1x128xf32>
    %c45_567 = arith.constant 45 : index
    %c0_568 = arith.constant 0 : index
    %401 = vector.load %arg13[%c45_567, %c0_568] : memref<64x128xf32, #tpu.memory_space<vmem>>, vector<1x128xf32>
    tpu.vector_store %arg13[%c45_567, %c0_568], %400 {strides = array<i32>} : memref<64x128xf32, #tpu.memory_space<vmem>>, vector<1x128xf32>,
    %c0_569 = arith.constant 0 : index
    %c0_570 = arith.constant 0 : index
    %c46 = arith.constant 46 : index
    %402 = vector.load %arg1[%c0_569, %c0_570, %c46] : memref<1x1x256xf32, #tpu.memory_space<vmem>>, vector<1x1x128xf32>
    %403 = vector.shape_cast %402 : vector<1x1x128xf32> to vector<1x128xf32>
    %c46_571 = arith.constant 46 : index
    %c0_572 = arith.constant 0 : index
    %404 = vector.load %arg13[%c46_571, %c0_572] : memref<64x128xf32, #tpu.memory_space<vmem>>, vector<1x128xf32>
    tpu.vector_store %arg13[%c46_571, %c0_572], %403 {strides = array<i32>} : memref<64x128xf32, #tpu.memory_space<vmem>>, vector<1x128xf32>,
    %c0_573 = arith.constant 0 : index
    %c0_574 = arith.constant 0 : index
    %c47 = arith.constant 47 : index
    %405 = vector.load %arg1[%c0_573, %c0_574, %c47] : memref<1x1x256xf32, #tpu.memory_space<vmem>>, vector<1x1x128xf32>
    %406 = vector.shape_cast %405 : vector<1x1x128xf32> to vector<1x128xf32>
    %c47_575 = arith.constant 47 : index
    %c0_576 = arith.constant 0 : index
    %407 = vector.load %arg13[%c47_575, %c0_576] : memref<64x128xf32, #tpu.memory_space<vmem>>, vector<1x128xf32>
    tpu.vector_store %arg13[%c47_575, %c0_576], %406 {strides = array<i32>} : memref<64x128xf32, #tpu.memory_space<vmem>>, vector<1x128xf32>,
    %c0_577 = arith.constant 0 : index
    %c0_578 = arith.constant 0 : index
    %c48 = arith.constant 48 : index
    %408 = vector.load %arg1[%c0_577, %c0_578, %c48] : memref<1x1x256xf32, #tpu.memory_space<vmem>>, vector<1x1x128xf32>
    %409 = vector.shape_cast %408 : vector<1x1x128xf32> to vector<1x128xf32>
    %c48_579 = arith.constant 48 : index
    %c0_580 = arith.constant 0 : index
    %410 = vector.load %arg13[%c48_579, %c0_580] : memref<64x128xf32, #tpu.memory_space<vmem>>, vector<1x128xf32>
    tpu.vector_store %arg13[%c48_579, %c0_580], %409 {strides = array<i32>} : memref<64x128xf32, #tpu.memory_space<vmem>>, vector<1x128xf32>,
    %c0_581 = arith.constant 0 : index
    %c0_582 = arith.constant 0 : index
    %c49 = arith.constant 49 : index
    %411 = vector.load %arg1[%c0_581, %c0_582, %c49] : memref<1x1x256xf32, #tpu.memory_space<vmem>>, vector<1x1x128xf32>
    %412 = vector.shape_cast %411 : vector<1x1x128xf32> to vector<1x128xf32>
    %c49_583 = arith.constant 49 : index
    %c0_584 = arith.constant 0 : index
    %413 = vector.load %arg13[%c49_583, %c0_584] : memref<64x128xf32, #tpu.memory_space<vmem>>, vector<1x128xf32>
    tpu.vector_store %arg13[%c49_583, %c0_584], %412 {strides = array<i32>} : memref<64x128xf32, #tpu.memory_space<vmem>>, vector<1x128xf32>,
    %c0_585 = arith.constant 0 : index
    %c0_586 = arith.constant 0 : index
    %414 = vector.load %arg8[%c0_585, %c0_586] : memref<128x64xbf16, #tpu.memory_space<vmem>>, vector<128x64xbf16>
    %c0_587 = arith.constant 0 : index
    %c0_588 = arith.constant 0 : index
    %415 = vector.load %arg13[%c0_587, %c0_588] : memref<64x128xf32, #tpu.memory_space<vmem>>, vector<64x128xf32>
    %416 = arith.truncf %415 : vector<64x128xf32> to vector<64x128xbf16>
    %cst_589 = arith.constant dense<0.000000e+00> : vector<128x128xf32>
    %417 = tpu.matmul %414, %416, %cst_589 {dimension_numbers = #tpu.dot_dimension_numbers<[1], [0], [0], [1], [0, 0, 1, 1], [], []>} : vector<128x64xbf16>, vector<64x128xbf16>, vector<128x128xf32> -> vector<128x128xf32>
    %c0_590 = arith.constant 0 : index
    %c0_591 = arith.constant 0 : index
    %418 = vector.load %arg9[%c0_590, %c0_591] : memref<128x1xf32, #tpu.memory_space<vmem>>, vector<128x1xf32>
    %419 = vector.broadcast %418 : vector<128x1xf32> to vector<128x128xf32>
    %420 = arith.addf %417, %419 : vector<128x128xf32>
    %cst_592 = arith.constant 0.000000e+00 : f32
    %421 = vector.broadcast %cst_592 : f32 to vector<128x128xf32>
    %422 = arith.maximumf %420, %421 : vector<128x128xf32>
    %c15_i32 = arith.constant 15 : i32
    %423 = vector.broadcast %c15_i32 : i32 to vector<1x128xi32>
    %424 = arith.cmpi slt, %0, %423 : vector<1x128xi32>
    %cst_593 = arith.constant 0.000000e+00 : f32
    %425 = vector.shape_cast %424 : vector<1x128xi1> to vector<1x128xi1>
    %426 = vector.broadcast %425 : vector<1x128xi1> to vector<128x128xi1>
    %427 = vector.broadcast %cst_593 : f32 to vector<128x128xf32>
    %428 = arith.select %426, %422, %427 : vector<128x128xi1>, vector<128x128xf32>
    %cst_594 = arith.constant dense<0xFF800000> : vector<128xf32>
    %429 = vector.multi_reduction <maximumf>, %428, %cst_594 [1] : vector<128x128xf32> to vector<128xf32>
    %430 = vector.shape_cast %429 : vector<128xf32> to vector<128x1xf32>
    %c0_595 = arith.constant 0 : index
    %c0_596 = arith.constant 0 : index
    %431 = vector.load %arg10[%c0_595, %c0_596] : memref<128x128xf32, #tpu.memory_space<vmem>>, vector<128x128xf32>
    %432 = vector.broadcast %430 : vector<128x1xf32> to vector<128x128xf32>
    %433 = arith.mulf %432, %431 : vector<128x128xf32>
    %cst_597 = arith.constant dense<0.000000e+00> : vector<128xf32>
    %434 = vector.multi_reduction <add>, %433, %cst_597 [0] : vector<128x128xf32> to vector<128xf32>
    %435 = vector.shape_cast %434 : vector<128xf32> to vector<1x128xf32>
    %436 = arith.addf %261, %435 : vector<1x128xf32>
    %c0_598 = arith.constant 0 : index
    %c0_599 = arith.constant 0 : index
    %437 = vector.load %arg11[%c0_598, %c0_599] : memref<1x128xf32, #tpu.memory_space<vmem>>, vector<1x128xf32>
    %438 = arith.addf %436, %437 : vector<1x128xf32>
    %c0_600 = arith.constant 0 : index
    %c0_601 = arith.constant 0 : index
    %c0_602 = arith.constant 0 : index
    %439 = vector.load %arg12[%c0_600, %c0_601, %c0_602] : memref<1x1x128xf32, #tpu.memory_space<vmem>>, vector<1x1x128xf32>
    %440 = vector.shape_cast %439 : vector<1x1x128xf32> to vector<1x128xf32>
    %441 = vector.shape_cast %438 : vector<1x128xf32> to vector<1x1x128xf32>
    tpu.vector_store %arg12[%c0_600, %c0_601, %c0_602], %441 {strides = array<i32>} : memref<1x1x128xf32, #tpu.memory_space<vmem>>, vector<1x1x128xf32>,
    return
  }
  func.func @transform_0(%arg0: i32) -> (i32, i32, i32) {
    %c0_i32 = arith.constant 0 : i32
    %c0_i32_0 = arith.constant 0 : i32
    %c0_i32_1 = arith.constant 0 : i32
    return %arg0, %c0_i32, %c0_i32_0 : i32, i32, i32
  }
  func.func @transform_1(%arg0: i32) -> (i32, i32) {
    %c0_i32 = arith.constant 0 : i32
    %c0_i32_0 = arith.constant 0 : i32
    %c0_i32_1 = arith.constant 0 : i32
    return %c0_i32, %c0_i32_0 : i32, i32
  }
  func.func @transform_2(%arg0: i32) -> (i32, i32) {
    %c0_i32 = arith.constant 0 : i32
    %c0_i32_0 = arith.constant 0 : i32
    %c0_i32_1 = arith.constant 0 : i32
    return %c0_i32, %c0_i32_0 : i32, i32
  }
  func.func @transform_3(%arg0: i32) -> (i32, i32) {
    %c0_i32 = arith.constant 0 : i32
    %c0_i32_0 = arith.constant 0 : i32
    %c0_i32_1 = arith.constant 0 : i32
    return %c0_i32, %c0_i32_0 : i32, i32
  }
  func.func @transform_4(%arg0: i32) -> (i32, i32) {
    %c0_i32 = arith.constant 0 : i32
    %c0_i32_0 = arith.constant 0 : i32
    %c0_i32_1 = arith.constant 0 : i32
    return %c0_i32, %c0_i32_0 : i32, i32
  }
  func.func @transform_5(%arg0: i32) -> (i32, i32) {
    %c0_i32 = arith.constant 0 : i32
    %c0_i32_0 = arith.constant 0 : i32
    %c0_i32_1 = arith.constant 0 : i32
    return %c0_i32, %c0_i32_0 : i32, i32
  }
  func.func @transform_6(%arg0: i32) -> (i32, i32) {
    %c0_i32 = arith.constant 0 : i32
    %c0_i32_0 = arith.constant 0 : i32
    %c0_i32_1 = arith.constant 0 : i32
    return %c0_i32, %c0_i32_0 : i32, i32
  }
  func.func @transform_7(%arg0: i32) -> (i32, i32) {
    %c0_i32 = arith.constant 0 : i32
    %c0_i32_0 = arith.constant 0 : i32
    %c0_i32_1 = arith.constant 0 : i32
    return %c0_i32, %c0_i32_0 : i32, i32
  }
  func.func @transform_8(%arg0: i32) -> (i32, i32) {
    %c0_i32 = arith.constant 0 : i32
    %c0_i32_0 = arith.constant 0 : i32
    %c0_i32_1 = arith.constant 0 : i32
    return %c0_i32, %c0_i32_0 : i32, i32
  }
  func.func @transform_9(%arg0: i32) -> (i32, i32) {
    %c0_i32 = arith.constant 0 : i32
    %c0_i32_0 = arith.constant 0 : i32
    %c0_i32_1 = arith.constant 0 : i32
    return %c0_i32, %c0_i32_0 : i32, i32
  }
  func.func @transform_10(%arg0: i32) -> (i32, i32) {
    %c0_i32 = arith.constant 0 : i32
    %c0_i32_0 = arith.constant 0 : i32
    %c0_i32_1 = arith.constant 0 : i32
    return %c0_i32, %c0_i32_0 : i32, i32
  }
  func.func @transform_11(%arg0: i32) -> (i32, i32, i32) {
    %c0_i32 = arith.constant 0 : i32
    %c0_i32_0 = arith.constant 0 : i32
    %c0_i32_1 = arith.constant 0 : i32
    return %arg0, %c0_i32, %c0_i32_0 : i32, i32, i32
  }
}

</mosaic_0001>

<llo_original>
// kernel: tpu_custom_call.1
$region0: #{tpu_custom_call.1}
  #allocation0 [shape = 'u32[]', space=smem, size = 0x4, offset = 0x4, fixed_abs, tag = 'smem constant byte address 0x4 - core index']
  #allocation1 [shape = 'u32[72,128]{1,0:T(1,128)}', space=vmem, size = 0x9000, scoped, tag = 'internal scratch']
  #allocation2 [shape = 'f32[64,128]{1,0:T(8,128)}', space=vmem, size = 0x8000, scoped, tag = 'scratch operand']
  %s0 = inlined_call_operand.vmem [shape: f32[2,1,256], index: 0, kind: input, shape index: {}]
  %s1 = inlined_call_operand.vmem [shape: bf16[128,64], index: 1, kind: input, shape index: {}]
  %s2 = inlined_call_operand.vmem [shape: f32[128,1], index: 2, kind: input, shape index: {}]
  %s3 = inlined_call_operand.vmem [shape: f32[128,128], index: 3, kind: input, shape index: {}]
  %s4 = inlined_call_operand.vmem [shape: bf16[128,64], index: 4, kind: input, shape index: {}]
  %s5 = inlined_call_operand.vmem [shape: f32[128,1], index: 5, kind: input, shape index: {}]
  %s6 = inlined_call_operand.vmem [shape: f32[128,128], index: 6, kind: input, shape index: {}]
  %s7 = inlined_call_operand.vmem [shape: bf16[128,64], index: 7, kind: input, shape index: {}]
  %s8 = inlined_call_operand.vmem [shape: f32[128,1], index: 8, kind: input, shape index: {}]
  %s9 = inlined_call_operand.vmem [shape: f32[128,128], index: 9, kind: input, shape index: {}]
  %s10 = inlined_call_operand.vmem [shape: f32[1,128], index: 10, kind: input, shape index: {}]
  %s11 = inlined_call_operand.hbm [shape: f32[2,1,128], index: 11, kind: output, shape index: {}]
  %s12 = sld [smem:[#allocation0]]
  $region77: #{tpu_custom_call.1} parent=0
    _
  %s14 = ssub.s32 1, %s12
  %s15 = scalar_select 0, %s14, %s12
  $region1: #{tpu_custom_call.1} parent=0
    #allocation3 [shape = 'u8[1024]{0}', space=vmem, size = 0x400, scoped, tag = 'output window, operand 0']
    #allocation4 [shape = 's32[2]{0}', space=sflag, size = 0x8, scoped, tag = 'scoped memory for tpu_custom_call.1']
    %16 = vsyncpa [#allocation4], 0
    %s17 = scalar_lea.sflag [#allocation4], 1
    %18 = vsyncpa %s17, 0
    loop: start=0, step=1, limit=4
    $region2: #{tpu_custom_call.1} parent=1 // loop_pre_header
      _
    $region3: #{tpu_custom_call.1} parent=1 // loop_header
      %s20 = sphi 0, %s24
      %p21 = scmp.ge.s32.totalorder %s20, 4
      %s30 = sphi 0, %s32
      %s33 = sphi 0, %s30
      %s34 = sphi 0, %s33
      %s50 = sphi 0, %s34
      %s54 = sphi 0, %s54
      %s56 = sphi 0, %s54
      %s57 = sphi 0, %s56
      %s71 = sphi 0, %s57
      %s75 = sphi 0, %s75
      %s77 = sphi 0, %s75
      %s78 = sphi 0, %s77
      %s92 = sphi 0, %s78
      %s96 = sphi 0, %s96
      %s98 = sphi 0, %s96
      %s99 = sphi 0, %s98
      %s113 = sphi 0, %s99
      %s117 = sphi 0, %s117
      %s119 = sphi 0, %s117
      %s120 = sphi 0, %s119
      %s134 = sphi 0, %s120
      %s138 = sphi 0, %s138
      %s140 = sphi 0, %s138
      %s141 = sphi 0, %s140
      %s155 = sphi 0, %s141
      %s159 = sphi 0, %s159
      %s161 = sphi 0, %s159
      %s162 = sphi 0, %s161
      %s176 = sphi 0, %s162
      %s180 = sphi 0, %s180
      %s182 = sphi 0, %s180
      %s183 = sphi 0, %s182
      %s197 = sphi 0, %s183
      %s201 = sphi 0, %s201
      %s203 = sphi 0, %s201
      %s204 = sphi 0, %s203
      %s218 = sphi 0, %s204
      %s222 = sphi 0, %s222
      %s224 = sphi 0, %s222
      %s225 = sphi 0, %s224
      %s239 = sphi 0, %s225
      %s243 = sphi 0, %s243
      %s245 = sphi 0, %s243
      %s246 = sphi 0, %s245
      %s260 = sphi 0, %s246
      %s266 = sphi 0, %s268
      %s269 = sphi 0, %s266
      %s270 = sphi 0, %s269
      %s286 = sphi 0, %s270
    $region4: #{tpu_custom_call.1} parent=1 // loop_header_branch
      %23 = sbr.rel (%p21) target = $region8
    $region5: #{tpu_custom_call.1} parent=1 // loop_body
      %s25 = ssub.s32 %s20, 1
      %s26 = ssub.s32 %s20, 2
      %s27 = sadd.s32 %s20, 1
      %s28 = ssub.s32 %s20, %s27
      %p29 = scmp.eq.s32.totalorder %s28, 0
      %s31 = sadd.s32 %s30, 1
      %s32 = scalar_select %p29, %s30, %s31
      %p35 = pneg %p29
      %p36 = scmp.eq.s32.totalorder %s20, 1
      %p37 = por %p35, %p36
      %p38 = scmp.ne.s32.totalorder %s30, %s33
      %p39 = scmp.eq.s32.totalorder %s20, 0
      %p40 = por %p38, %p39
      %p41 = scmp.ne.s32.totalorder %s30, %s33
      %p42 = scmp.eq.s32.totalorder %s25, 1
      %p43 = por %p41, %p42
      %p44 = scmp.ne.s32.totalorder %s33, %s34
      %p45 = scmp.eq.s32.totalorder %s25, 0
      %p46 = por %p44, %p45
      %p47 = scmp.ne.s32.totalorder %s33, %s34
      %p48 = scmp.eq.s32.totalorder %s26, 1
      %p49 = por %p47, %p48
      %p51 = scmp.ne.s32.totalorder %s34, %s50
      %p52 = scmp.eq.s32.totalorder %s26, 0
      %p53 = por %p51, %p52
      %s55 = sadd.s32 %s54, 1
      %p58 = scmp.eq.s32.totalorder %s20, 1
      %p59 = scmp.ne.s32.totalorder %s54, %s56
      %p60 = scmp.eq.s32.totalorder %s20, 0
      %p61 = por %p59, %p60
      %p62 = scmp.ne.s32.totalorder %s54, %s56
      %p63 = scmp.eq.s32.totalorder %s25, 1
      %p64 = por %p62, %p63
      %p65 = scmp.ne.s32.totalorder %s56, %s57
      %p66 = scmp.eq.s32.totalorder %s25, 0
      %p67 = por %p65, %p66
      %p68 = scmp.ne.s32.totalorder %s56, %s57
      %p69 = scmp.eq.s32.totalorder %s26, 1
      %p70 = por %p68, %p69
      %p72 = scmp.ne.s32.totalorder %s57, %s71
      %p73 = scmp.eq.s32.totalorder %s26, 0
      %p74 = por %p72, %p73
      %s76 = sadd.s32 %s75, 1
      %p79 = scmp.eq.s32.totalorder %s20, 1
      %p80 = scmp.ne.s32.totalorder %s75, %s77
      %p81 = scmp.eq.s32.totalorder %s20, 0
      %p82 = por %p80, %p81
      %p83 = scmp.ne.s32.totalorder %s75, %s77
      %p84 = scmp.eq.s32.totalorder %s25, 1
      %p85 = por %p83, %p84
      %p86 = scmp.ne.s32.totalorder %s77, %s78
      %p87 = scmp.eq.s32.totalorder %s25, 0
      %p88 = por %p86, %p87
      %p89 = scmp.ne.s32.totalorder %s77, %s78
      %p90 = scmp.eq.s32.totalorder %s26, 1
      %p91 = por %p89, %p90
      %p93 = scmp.ne.s32.totalorder %s78, %s92
      %p94 = scmp.eq.s32.totalorder %s26, 0
      %p95 = por %p93, %p94
      %s97 = sadd.s32 %s96, 1
      %p100 = scmp.eq.s32.totalorder %s20, 1
      %p101 = scmp.ne.s32.totalorder %s96, %s98
      %p102 = scmp.eq.s32.totalorder %s20, 0
      %p103 = por %p101, %p102
      %p104 = scmp.ne.s32.totalorder %s96, %s98
      %p105 = scmp.eq.s32.totalorder %s25, 1
      %p106 = por %p104, %p105
      %p107 = scmp.ne.s32.totalorder %s98, %s99
      %p108 = scmp.eq.s32.totalorder %s25, 0
      %p109 = por %p107, %p108
      %p110 = scmp.ne.s32.totalorder %s98, %s99
      %p111 = scmp.eq.s32.totalorder %s26, 1
      %p112 = por %p110, %p111
      %p114 = scmp.ne.s32.totalorder %s99, %s113
      %p115 = scmp.eq.s32.totalorder %s26, 0
      %p116 = por %p114, %p115
      %s118 = sadd.s32 %s117, 1
      %p121 = scmp.eq.s32.totalorder %s20, 1
      %p122 = scmp.ne.s32.totalorder %s117, %s119
      %p123 = scmp.eq.s32.totalorder %s20, 0
      %p124 = por %p122, %p123
      %p125 = scmp.ne.s32.totalorder %s117, %s119
      %p126 = scmp.eq.s32.totalorder %s25, 1
      %p127 = por %p125, %p126
      %p128 = scmp.ne.s32.totalorder %s119, %s120
      %p129 = scmp.eq.s32.totalorder %s25, 0
      %p130 = por %p128, %p129
      %p131 = scmp.ne.s32.totalorder %s119, %s120
      %p132 = scmp.eq.s32.totalorder %s26, 1
      %p133 = por %p131, %p132
      %p135 = scmp.ne.s32.totalorder %s120, %s134
      %p136 = scmp.eq.s32.totalorder %s26, 0
      %p137 = por %p135, %p136
      %s139 = sadd.s32 %s138, 1
      %p142 = scmp.eq.s32.totalorder %s20, 1
      %p143 = scmp.ne.s32.totalorder %s138, %s140
      %p144 = scmp.eq.s32.totalorder %s20, 0
      %p145 = por %p143, %p144
      %p146 = scmp.ne.s32.totalorder %s138, %s140
      %p147 = scmp.eq.s32.totalorder %s25, 1
      %p148 = por %p146, %p147
      %p149 = scmp.ne.s32.totalorder %s140, %s141
      %p150 = scmp.eq.s32.totalorder %s25, 0
      %p151 = por %p149, %p150
      %p152 = scmp.ne.s32.totalorder %s140, %s141
      %p153 = scmp.eq.s32.totalorder %s26, 1
      %p154 = por %p152, %p153
      %p156 = scmp.ne.s32.totalorder %s141, %s155
      %p157 = scmp.eq.s32.totalorder %s26, 0
      %p158 = por %p156, %p157
      %s160 = sadd.s32 %s159, 1
      %p163 = scmp.eq.s32.totalorder %s20, 1
      %p164 = scmp.ne.s32.totalorder %s159, %s161
      %p165 = scmp.eq.s32.totalorder %s20, 0
      %p166 = por %p164, %p165
      %p167 = scmp.ne.s32.totalorder %s159, %s161
      %p168 = scmp.eq.s32.totalorder %s25, 1
      %p169 = por %p167, %p168
      %p170 = scmp.ne.s32.totalorder %s161, %s162
      %p171 = scmp.eq.s32.totalorder %s25, 0
      %p172 = por %p170, %p171
      %p173 = scmp.ne.s32.totalorder %s161, %s162
      %p174 = scmp.eq.s32.totalorder %s26, 1
      %p175 = por %p173, %p174
      %p177 = scmp.ne.s32.totalorder %s162, %s176
      %p178 = scmp.eq.s32.totalorder %s26, 0
      %p179 = por %p177, %p178
      %s181 = sadd.s32 %s180, 1
      %p184 = scmp.eq.s32.totalorder %s20, 1
      %p185 = scmp.ne.s32.totalorder %s180, %s182
      %p186 = scmp.eq.s32.totalorder %s20, 0
      %p187 = por %p185, %p186
      %p188 = scmp.ne.s32.totalorder %s180, %s182
      %p189 = scmp.eq.s32.totalorder %s25, 1
      %p190 = por %p188, %p189
      %p191 = scmp.ne.s32.totalorder %s182, %s183
      %p192 = scmp.eq.s32.totalorder %s25, 0
      %p193 = por %p191, %p192
      %p194 = scmp.ne.s32.totalorder %s182, %s183
      %p195 = scmp.eq.s32.totalorder %s26, 1
      %p196 = por %p194, %p195
      %p198 = scmp.ne.s32.totalorder %s183, %s197
      %p199 = scmp.eq.s32.totalorder %s26, 0
      %p200 = por %p198, %p199
      %s202 = sadd.s32 %s201, 1
      %p205 = scmp.eq.s32.totalorder %s20, 1
      %p206 = scmp.ne.s32.totalorder %s201, %s203
      %p207 = scmp.eq.s32.totalorder %s20, 0
      %p208 = por %p206, %p207
      %p209 = scmp.ne.s32.totalorder %s201, %s203
      %p210 = scmp.eq.s32.totalorder %s25, 1
      %p211 = por %p209, %p210
      %p212 = scmp.ne.s32.totalorder %s203, %s204
      %p213 = scmp.eq.s32.totalorder %s25, 0
      %p214 = por %p212, %p213
      %p215 = scmp.ne.s32.totalorder %s203, %s204
      %p216 = scmp.eq.s32.totalorder %s26, 1
      %p217 = por %p215, %p216
      %p219 = scmp.ne.s32.totalorder %s204, %s218
      %p220 = scmp.eq.s32.totalorder %s26, 0
      %p221 = por %p219, %p220
      %s223 = sadd.s32 %s222, 1
      %p226 = scmp.eq.s32.totalorder %s20, 1
      %p227 = scmp.ne.s32.totalorder %s222, %s224
      %p228 = scmp.eq.s32.totalorder %s20, 0
      %p229 = por %p227, %p228
      %p230 = scmp.ne.s32.totalorder %s222, %s224
      %p231 = scmp.eq.s32.totalorder %s25, 1
      %p232 = por %p230, %p231
      %p233 = scmp.ne.s32.totalorder %s224, %s225
      %p234 = scmp.eq.s32.totalorder %s25, 0
      %p235 = por %p233, %p234
      %p236 = scmp.ne.s32.totalorder %s224, %s225
      %p237 = scmp.eq.s32.totalorder %s26, 1
      %p238 = por %p236, %p237
      %p240 = scmp.ne.s32.totalorder %s225, %s239
      %p241 = scmp.eq.s32.totalorder %s26, 0
      %p242 = por %p240, %p241
      %s244 = sadd.s32 %s243, 1
      %p247 = scmp.eq.s32.totalorder %s20, 1
      %p248 = scmp.ne.s32.totalorder %s243, %s245
      %p249 = scmp.eq.s32.totalorder %s20, 0
      %p250 = por %p248, %p249
      %p251 = scmp.ne.s32.totalorder %s243, %s245
      %p252 = scmp.eq.s32.totalorder %s25, 1
      %p253 = por %p251, %p252
      %p254 = scmp.ne.s32.totalorder %s245, %s246
      %p255 = scmp.eq.s32.totalorder %s25, 0
      %p256 = por %p254, %p255
      %p257 = scmp.ne.s32.totalorder %s245, %s246
      %p258 = scmp.eq.s32.totalorder %s26, 1
      %p259 = por %p257, %p258
      %p261 = scmp.ne.s32.totalorder %s246, %s260
      %p262 = scmp.eq.s32.totalorder %s26, 0
      %p263 = por %p261, %p262
      %s264 = ssub.s32 %s20, %s27
      %p265 = scmp.eq.s32.totalorder %s264, 0
      %s267 = sadd.s32 %s266, 1
      %s268 = scalar_select %p265, %s266, %s267
      %p271 = pneg %p265
      %p272 = scmp.eq.s32.totalorder %s20, 1
      %p273 = por %p271, %p272
      %p274 = scmp.ne.s32.totalorder %s266, %s269
      %p275 = scmp.eq.s32.totalorder %s20, 0
      %p276 = por %p274, %p275
      %p277 = scmp.ne.s32.totalorder %s266, %s269
      %p278 = scmp.eq.s32.totalorder %s25, 1
      %p279 = por %p277, %p278
      %p280 = scmp.ne.s32.totalorder %s269, %s270
      %p281 = scmp.eq.s32.totalorder %s25, 0
      %p282 = por %p280, %p281
      %p283 = scmp.ne.s32.totalorder %s269, %s270
      %p284 = scmp.eq.s32.totalorder %s26, 1
      %p285 = por %p283, %p284
      %p287 = scmp.ne.s32.totalorder %s270, %s286
      %p288 = scmp.eq.s32.totalorder %s26, 0
      %p289 = por %p287, %p288
      %p290 = scmp.le.s32.totalorder 1, %s20
      %p291 = scmp.lt.s32.totalorder %s20, 3
      %p292 = pnand %p290, %p291
      %p293 = pneg %p292
      // Predicated region
      $region9: #{tpu_custom_call.1} parent=5 // pred_check
        _
      $region10: #{tpu_custom_call.1} parent=5 // pred_check_branch
        %295 = sbr.rel (%p292) target = $region12
      $region11: #{tpu_custom_call.1} parent=5 // pred_region
        %s296 = ssub.s32 %s20, 1
        // Predicated region
        $region13: #{tpu_custom_call.1} parent=11 // pred_check
          %p297 = pneg %p67
        $region14: #{tpu_custom_call.1} parent=11 // pred_check_branch
          %299 = sbr.rel (%p297) target = $region16
        $region15: #{tpu_custom_call.1} parent=11 // pred_region
          _
        $region16: #{tpu_custom_call.1} parent=11 // pred_fallthru
          _
        // Predicated region
        $region17: #{tpu_custom_call.1} parent=11 // pred_check
          %p300 = pneg %p88
        $region18: #{tpu_custom_call.1} parent=11 // pred_check_branch
          %302 = sbr.rel (%p300) target = $region20
        $region19: #{tpu_custom_call.1} parent=11 // pred_region
          _
        $region20: #{tpu_custom_call.1} parent=11 // pred_fallthru
          _
        // Predicated region
        $region21: #{tpu_custom_call.1} parent=11 // pred_check
          %p303 = pneg %p109
        $region22: #{tpu_custom_call.1} parent=11 // pred_check_branch
          %305 = sbr.rel (%p303) target = $region24
        $region23: #{tpu_custom_call.1} parent=11 // pred_region
          _
        $region24: #{tpu_custom_call.1} parent=11 // pred_fallthru
          _
        // Predicated region
        $region25: #{tpu_custom_call.1} parent=11 // pred_check
          %p306 = pneg %p130
        $region26: #{tpu_custom_call.1} parent=11 // pred_check_branch
          %308 = sbr.rel (%p306) target = $region28
        $region27: #{tpu_custom_call.1} parent=11 // pred_region
          _
        $region28: #{tpu_custom_call.1} parent=11 // pred_fallthru
          _
        // Predicated region
        $region29: #{tpu_custom_call.1} parent=11 // pred_check
          %p309 = pneg %p151
        $region30: #{tpu_custom_call.1} parent=11 // pred_check_branch
          %311 = sbr.rel (%p309) target = $region32
        $region31: #{tpu_custom_call.1} parent=11 // pred_region
          _
        $region32: #{tpu_custom_call.1} parent=11 // pred_fallthru
          _
        // Predicated region
        $region33: #{tpu_custom_call.1} parent=11 // pred_check
          %p312 = pneg %p172
        $region34: #{tpu_custom_call.1} parent=11 // pred_check_branch
          %314 = sbr.rel (%p312) target = $region36
        $region35: #{tpu_custom_call.1} parent=11 // pred_region
          _
        $region36: #{tpu_custom_call.1} parent=11 // pred_fallthru
          _
        // Predicated region
        $region37: #{tpu_custom_call.1} parent=11 // pred_check
          %p315 = pneg %p193
        $region38: #{tpu_custom_call.1} parent=11 // pred_check_branch
          %317 = sbr.rel (%p315) target = $region40
        $region39: #{tpu_custom_call.1} parent=11 // pred_region
          _
        $region40: #{tpu_custom_call.1} parent=11 // pred_fallthru
          _
        // Predicated region
        $region41: #{tpu_custom_call.1} parent=11 // pred_check
          %p318 = pneg %p214
        $region42: #{tpu_custom_call.1} parent=11 // pred_check_branch
          %320 = sbr.rel (%p318) target = $region44
        $region43: #{tpu_custom_call.1} parent=11 // pred_region
          _
        $region44: #{tpu_custom_call.1} parent=11 // pred_fallthru
          _
        // Predicated region
        $region45: #{tpu_custom_call.1} parent=11 // pred_check
          %p321 = pneg %p235
        $region46: #{tpu_custom_call.1} parent=11 // pred_check_branch
          %323 = sbr.rel (%p321) target = $region48
        $region47: #{tpu_custom_call.1} parent=11 // pred_region
          _
        $region48: #{tpu_custom_call.1} parent=11 // pred_fallthru
          _
        // Predicated region
        $region49: #{tpu_custom_call.1} parent=11 // pred_check
          %p324 = pneg %p256
        $region50: #{tpu_custom_call.1} parent=11 // pred_check_branch
          %326 = sbr.rel (%p324) target = $region52
        $region51: #{tpu_custom_call.1} parent=11 // pred_region
          _
        $region52: #{tpu_custom_call.1} parent=11 // pred_fallthru
          _
      $region12: #{tpu_custom_call.1} parent=5 // pred_fallthru
        _
      %p327 = scmp.lt.s32.totalorder %s20, 2
      // Predicated region
      $region53: #{tpu_custom_call.1} parent=5 // pred_check
        %p328 = pneg %p327
      $region54: #{tpu_custom_call.1} parent=5 // pred_check_branch
        %330 = sbr.rel (%p328) target = $region56
      $region55: #{tpu_custom_call.1} parent=5 // pred_region
        // Predicated region
        $region57: #{tpu_custom_call.1} parent=55 // pred_check
          %p331 = pneg %p40
        $region58: #{tpu_custom_call.1} parent=55 // pred_check_branch
          %333 = sbr.rel (%p331) target = $region60
        $region59: #{tpu_custom_call.1} parent=55 // pred_region
          %p334 = scmp.lt.s32.totalorder %s20, 1
          %s335 = scalar_select %p334, %s20, 1
          %s336 = smul.addr %s335, 2
          %s337 = scalar_lea.vmem %s0, %s336
        $region60: #{tpu_custom_call.1} parent=55 // pred_fallthru
          _
      $region56: #{tpu_custom_call.1} parent=5 // pred_fallthru
        _
      %p338 = scmp.le.s32.totalorder 1, %s20
      %p339 = scmp.lt.s32.totalorder %s20, 3
      %p340 = pnand %p338, %p339
      %p341 = pneg %p340
      // Predicated region
      $region61: #{tpu_custom_call.1} parent=5 // pred_check
        _
      $region62: #{tpu_custom_call.1} parent=5 // pred_check_branch
        %343 = sbr.rel (%p340) target = $region64
      $region63: #{tpu_custom_call.1} parent=5 // pred_region
        %s344 = ssub.s32 %s20, 1
        %p345 = scmp.lt.s32.totalorder %s25, 1
        %s346 = scalar_select %p345, %s25, 1
        %s347 = smul.addr %s346, 2
        %s348 = scalar_lea.vmem %s0, %s347
        %p349 = pneg %p46
        %p350 = pneg %p43
        %p351 = pneg %p67
        %p352 = pneg %p64
        %p353 = pneg %p88
        %p354 = pneg %p85
        %p355 = pneg %p109
        %p356 = pneg %p106
        %p357 = pneg %p130
        %p358 = pneg %p127
        %p359 = pneg %p151
        %p360 = pneg %p148
        %p361 = pneg %p172
        %p362 = pneg %p169
        %p363 = pneg %p193
        %p364 = pneg %p190
        %p365 = pneg %p214
        %p366 = pneg %p211
        %p367 = pneg %p235
        %p368 = pneg %p232
        %p369 = pneg %p256
        %p370 = pneg %p253
        %p371 = pneg %p282
        %p372 = pneg %p279
        %s373 = sand.u32 %s269, 1
        %s374 = scalar_lea.sflag [#allocation4], %s373
        %s375 = sand.u32 %s269, 1
        %s376 = scalar_lea.vmem [#allocation3], %s375
        %p377 = scmp.lt.s32.totalorder %s25, 1
        %s378 = scalar_select %p377, %s25, 1
        %s379 = smul.addr %s378, 2
        %s380 = scalar_lea.vmem %s0, %s379
        %v382 = vlaneseq
        %v383 = vand.u32 %v382, 127
        %384 = vst [vmem:[#allocation2] sm:$0xff] 0.0
        %385 = vst [vmem:[#allocation2 + $0x8] sm:$0xff] 0.0
        %386 = vst [vmem:[#allocation2 + $0x10] sm:$0xff] 0.0
        %387 = vst [vmem:[#allocation2 + $0x18] sm:$0xff] 0.0
        %388 = vst [vmem:[#allocation2 + $0x20] sm:$0xff] 0.0
        %389 = vst [vmem:[#allocation2 + $0x28] sm:$0xff] 0.0
        %390 = vst [vmem:[#allocation2 + $0x30] sm:$0xff] 0.0
        %391 = vst [vmem:[#allocation2 + $0x38] sm:$0xff] 0.0
        %v392 = vld [vmem:[%s380] sm:$0x1]
        %393 = vst [vmem:[#allocation2] sm:$0x1] %v392
        %v394 = vld [vmem:[%s380] sm:$0x3]
        %v396 = vperm.slane %v394, 0
        %v397 = vperm.slane %v394, 1
        %398 = vrot.lane.b32.xlu0 %v396, 127
        %v399 = vpop.permute.xlu0 %398
        %400 = vrot.lane.b32.xlu0 %v397, 127
        %v401 = vpop.permute.xlu0 %400
        %vm402 = vcmask 1039360
        %v403 = vsel %vm402, %v399, %v401
        %405 = vst [vmem:[#allocation2 + $0x1] sm:$0x1] %v403
        %v406 = vld [vmem:[%s380] sm:$0x3]
        %v408 = vperm.slane %v406, 0
        %v409 = vperm.slane %v406, 1
        %410 = vrot.lane.b32.xlu0 %v408, 126
        %v411 = vpop.permute.xlu0 %410
        %412 = vrot.lane.b32.xlu0 %v409, 126
        %v413 = vpop.permute.xlu0 %412
        %vm414 = vcmask 1031168
        %v415 = vsel %vm414, %v411, %v413
        %417 = vst [vmem:[#allocation2 + $0x2] sm:$0x1] %v415
        %v418 = vld [vmem:[%s380] sm:$0x3]
        %v420 = vperm.slane %v418, 0
        %v421 = vperm.slane %v418, 1
        %422 = vrot.lane.b32.xlu0 %v420, 125
        %v423 = vpop.permute.xlu0 %422
        %424 = vrot.lane.b32.xlu0 %v421, 125
        %v425 = vpop.permute.xlu0 %424
        %vm426 = vcmask 1022976
        %v427 = vsel %vm426, %v423, %v425
        %429 = vst [vmem:[#allocation2 + $0x3] sm:$0x1] %v427
        %v430 = vld [vmem:[%s380] sm:$0x3]
        %v432 = vperm.slane %v430, 0
        %v433 = vperm.slane %v430, 1
        %434 = vrot.lane.b32.xlu0 %v432, 124
        %v435 = vpop.permute.xlu0 %434
        %436 = vrot.lane.b32.xlu0 %v433, 124
        %v437 = vpop.permute.xlu0 %436
        %vm438 = vcmask 1014784
        %v439 = vsel %vm438, %v435, %v437
        %441 = vst [vmem:[#allocation2 + $0x4] sm:$0x1] %v439
        %v442 = vld [vmem:[%s380] sm:$0x3]
        %v444 = vperm.slane %v442, 0
        %v445 = vperm.slane %v442, 1
        %446 = vrot.lane.b32.xlu0 %v444, 123
        %v447 = vpop.permute.xlu0 %446
        %448 = vrot.lane.b32.xlu0 %v445, 123
        %v449 = vpop.permute.xlu0 %448
        %vm450 = vcmask 1006592
        %v451 = vsel %vm450, %v447, %v449
        %453 = vst [vmem:[#allocation2 + $0x5] sm:$0x1] %v451
        %v454 = vld [vmem:[%s380] sm:$0x3]
        %v456 = vperm.slane %v454, 0
        %v457 = vperm.slane %v454, 1
        %458 = vrot.lane.b32.xlu0 %v456, 122
        %v459 = vpop.permute.xlu0 %458
        %460 = vrot.lane.b32.xlu0 %v457, 122
        %v461 = vpop.permute.xlu0 %460
        %vm462 = vcmask 998400
        %v463 = vsel %vm462, %v459, %v461
        %465 = vst [vmem:[#allocation2 + $0x6] sm:$0x1] %v463
        %v466 = vld [vmem:[%s380] sm:$0x3]
        %v468 = vperm.slane %v466, 0
        %v469 = vperm.slane %v466, 1
        %470 = vrot.lane.b32.xlu0 %v468, 121
        %v471 = vpop.permute.xlu0 %470
        %472 = vrot.lane.b32.xlu0 %v469, 121
        %v473 = vpop.permute.xlu0 %472
        %vm474 = vcmask 990208
        %v475 = vsel %vm474, %v471, %v473
        %477 = vst [vmem:[#allocation2 + $0x7] sm:$0x1] %v475
        %v478 = vld [vmem:[%s380] sm:$0x3]
        %v480 = vperm.slane %v478, 0
        %v481 = vperm.slane %v478, 1
        %482 = vrot.lane.b32.xlu0 %v480, 120
        %v483 = vpop.permute.xlu0 %482
        %484 = vrot.lane.b32.xlu0 %v481, 120
        %v485 = vpop.permute.xlu0 %484
        %vm486 = vcmask 982016
        %v487 = vsel %vm486, %v483, %v485
        %489 = vst [vmem:[#allocation2 + $0x8] sm:$0x1] %v487
        %v490 = vld [vmem:[%s380] sm:$0x3]
        %v492 = vperm.slane %v490, 0
        %v493 = vperm.slane %v490, 1
        %494 = vrot.lane.b32.xlu0 %v492, 119
        %v495 = vpop.permute.xlu0 %494
        %496 = vrot.lane.b32.xlu0 %v493, 119
        %v497 = vpop.permute.xlu0 %496
        %vm498 = vcmask 973824
        %v499 = vsel %vm498, %v495, %v497
        %501 = vst [vmem:[#allocation2 + $0x9] sm:$0x1] %v499
        %v502 = vld [vmem:[%s380] sm:$0x3]
        %v504 = vperm.slane %v502, 0
        %v505 = vperm.slane %v502, 1
        %506 = vrot.lane.b32.xlu0 %v504, 118
        %v507 = vpop.permute.xlu0 %506
        %508 = vrot.lane.b32.xlu0 %v505, 118
        %v509 = vpop.permute.xlu0 %508
        %vm510 = vcmask 965632
        %v511 = vsel %vm510, %v507, %v509
        %513 = vst [vmem:[#allocation2 + $0xa] sm:$0x1] %v511
        %v514 = vld [vmem:[%s380] sm:$0x3]
        %v516 = vperm.slane %v514, 0
        %v517 = vperm.slane %v514, 1
        %518 = vrot.lane.b32.xlu0 %v516, 117
        %v519 = vpop.permute.xlu0 %518
        %520 = vrot.lane.b32.xlu0 %v517, 117
        %v521 = vpop.permute.xlu0 %520
        %vm522 = vcmask 957440
        %v523 = vsel %vm522, %v519, %v521
        %525 = vst [vmem:[#allocation2 + $0xb] sm:$0x1] %v523
        %v526 = vld [vmem:[%s380] sm:$0x3]
        %v528 = vperm.slane %v526, 0
        %v529 = vperm.slane %v526, 1
        %530 = vrot.lane.b32.xlu0 %v528, 116
        %v531 = vpop.permute.xlu0 %530
        %532 = vrot.lane.b32.xlu0 %v529, 116
        %v533 = vpop.permute.xlu0 %532
        %vm534 = vcmask 949248
        %v535 = vsel %vm534, %v531, %v533
        %537 = vst [vmem:[#allocation2 + $0xc] sm:$0x1] %v535
        %v538 = vld [vmem:[%s380] sm:$0x3]
        %v540 = vperm.slane %v538, 0
        %v541 = vperm.slane %v538, 1
        %542 = vrot.lane.b32.xlu0 %v540, 115
        %v543 = vpop.permute.xlu0 %542
        %544 = vrot.lane.b32.xlu0 %v541, 115
        %v545 = vpop.permute.xlu0 %544
        %vm546 = vcmask 941056
        %v547 = vsel %vm546, %v543, %v545
        %549 = vst [vmem:[#allocation2 + $0xd] sm:$0x1] %v547
        %v550 = vld [vmem:[%s380] sm:$0x3]
        %v552 = vperm.slane %v550, 0
        %v553 = vperm.slane %v550, 1
        %554 = vrot.lane.b32.xlu0 %v552, 114
        %v555 = vpop.permute.xlu0 %554
        %556 = vrot.lane.b32.xlu0 %v553, 114
        %v557 = vpop.permute.xlu0 %556
        %vm558 = vcmask 932864
        %v559 = vsel %vm558, %v555, %v557
        %561 = vst [vmem:[#allocation2 + $0xe] sm:$0x1] %v559
        %v562 = vld [vmem:[%s380] sm:$0x3]
        %v564 = vperm.slane %v562, 0
        %v565 = vperm.slane %v562, 1
        %566 = vrot.lane.b32.xlu0 %v564, 113
        %v567 = vpop.permute.xlu0 %566
        %568 = vrot.lane.b32.xlu0 %v565, 113
        %v569 = vpop.permute.xlu0 %568
        %vm570 = vcmask 924672
        %v571 = vsel %vm570, %v567, %v569
        %573 = vst [vmem:[#allocation2 + $0xf] sm:$0x1] %v571
        %v574 = vld [vmem:[%s380] sm:$0x3]
        %v576 = vperm.slane %v574, 0
        %v577 = vperm.slane %v574, 1
        %578 = vrot.lane.b32.xlu0 %v576, 112
        %v579 = vpop.permute.xlu0 %578
        %580 = vrot.lane.b32.xlu0 %v577, 112
        %v581 = vpop.permute.xlu0 %580
        %vm582 = vcmask 916480
        %v583 = vsel %vm582, %v579, %v581
        %585 = vst [vmem:[#allocation2 + $0x10] sm:$0x1] %v583
        %v586 = vld [vmem:[%s380] sm:$0x3]
        %v588 = vperm.slane %v586, 0
        %v589 = vperm.slane %v586, 1
        %590 = vrot.lane.b32.xlu0 %v588, 111
        %v591 = vpop.permute.xlu0 %590
        %592 = vrot.lane.b32.xlu0 %v589, 111
        %v593 = vpop.permute.xlu0 %592
        %vm594 = vcmask 908288
        %v595 = vsel %vm594, %v591, %v593
        %597 = vst [vmem:[#allocation2 + $0x11] sm:$0x1] %v595
        %v598 = vld [vmem:[%s380] sm:$0x3]
        %v600 = vperm.slane %v598, 0
        %v601 = vperm.slane %v598, 1
        %602 = vrot.lane.b32.xlu0 %v600, 110
        %v603 = vpop.permute.xlu0 %602
        %604 = vrot.lane.b32.xlu0 %v601, 110
        %v605 = vpop.permute.xlu0 %604
        %vm606 = vcmask 900096
        %v607 = vsel %vm606, %v603, %v605
        %609 = vst [vmem:[#allocation2 + $0x12] sm:$0x1] %v607
        %v610 = vld [vmem:[%s380] sm:$0x3]
        %v612 = vperm.slane %v610, 0
        %v613 = vperm.slane %v610, 1
        %614 = vrot.lane.b32.xlu0 %v612, 109
        %v615 = vpop.permute.xlu0 %614
        %616 = vrot.lane.b32.xlu0 %v613, 109
        %v617 = vpop.permute.xlu0 %616
        %vm618 = vcmask 891904
        %v619 = vsel %vm618, %v615, %v617
        %621 = vst [vmem:[#allocation2 + $0x13] sm:$0x1] %v619
        %v622 = vld [vmem:[%s380] sm:$0x3]
        %v624 = vperm.slane %v622, 0
        %v625 = vperm.slane %v622, 1
        %626 = vrot.lane.b32.xlu0 %v624, 108
        %v627 = vpop.permute.xlu0 %626
        %628 = vrot.lane.b32.xlu0 %v625, 108
        %v629 = vpop.permute.xlu0 %628
        %vm630 = vcmask 883712
        %v631 = vsel %vm630, %v627, %v629
        %633 = vst [vmem:[#allocation2 + $0x14] sm:$0x1] %v631
        %v634 = vld [vmem:[%s380] sm:$0x3]
        %v636 = vperm.slane %v634, 0
        %v637 = vperm.slane %v634, 1
        %638 = vrot.lane.b32.xlu0 %v636, 107
        %v639 = vpop.permute.xlu0 %638
        %640 = vrot.lane.b32.xlu0 %v637, 107
        %v641 = vpop.permute.xlu0 %640
        %vm642 = vcmask 875520
        %v643 = vsel %vm642, %v639, %v641
        %645 = vst [vmem:[#allocation2 + $0x15] sm:$0x1] %v643
        %v646 = vld [vmem:[%s380] sm:$0x3]
        %v648 = vperm.slane %v646, 0
        %v649 = vperm.slane %v646, 1
        %650 = vrot.lane.b32.xlu0 %v648, 106
        %v651 = vpop.permute.xlu0 %650
        %652 = vrot.lane.b32.xlu0 %v649, 106
        %v653 = vpop.permute.xlu0 %652
        %vm654 = vcmask 867328
        %v655 = vsel %vm654, %v651, %v653
        %657 = vst [vmem:[#allocation2 + $0x16] sm:$0x1] %v655
        %v658 = vld [vmem:[%s380] sm:$0x3]
        %v660 = vperm.slane %v658, 0
        %v661 = vperm.slane %v658, 1
        %662 = vrot.lane.b32.xlu0 %v660, 105
        %v663 = vpop.permute.xlu0 %662
        %664 = vrot.lane.b32.xlu0 %v661, 105
        %v665 = vpop.permute.xlu0 %664
        %vm666 = vcmask 859136
        %v667 = vsel %vm666, %v663, %v665
        %669 = vst [vmem:[#allocation2 + $0x17] sm:$0x1] %v667
        %v670 = vld [vmem:[%s380] sm:$0x3]
        %v672 = vperm.slane %v670, 0
        %v673 = vperm.slane %v670, 1
        %674 = vrot.lane.b32.xlu0 %v672, 104
        %v675 = vpop.permute.xlu0 %674
        %676 = vrot.lane.b32.xlu0 %v673, 104
        %v677 = vpop.permute.xlu0 %676
        %vm678 = vcmask 850944
        %v679 = vsel %vm678, %v675, %v677
        %681 = vst [vmem:[#allocation2 + $0x18] sm:$0x1] %v679
        %v682 = vld [vmem:[%s380] sm:$0x3]
        %v684 = vperm.slane %v682, 0
        %v685 = vperm.slane %v682, 1
        %686 = vrot.lane.b32.xlu0 %v684, 103
        %v687 = vpop.permute.xlu0 %686
        %688 = vrot.lane.b32.xlu0 %v685, 103
        %v689 = vpop.permute.xlu0 %688
        %vm690 = vcmask 842752
        %v691 = vsel %vm690, %v687, %v689
        %693 = vst [vmem:[#allocation2 + $0x19] sm:$0x1] %v691
        %v694 = vld [vmem:[%s380] sm:$0x3]
        %v696 = vperm.slane %v694, 0
        %v697 = vperm.slane %v694, 1
        %698 = vrot.lane.b32.xlu0 %v696, 102
        %v699 = vpop.permute.xlu0 %698
        %700 = vrot.lane.b32.xlu0 %v697, 102
        %v701 = vpop.permute.xlu0 %700
        %vm702 = vcmask 834560
        %v703 = vsel %vm702, %v699, %v701
        %705 = vst [vmem:[#allocation2 + $0x1a] sm:$0x1] %v703
        %v706 = vld [vmem:[%s380] sm:$0x3]
        %v708 = vperm.slane %v706, 0
        %v709 = vperm.slane %v706, 1
        %710 = vrot.lane.b32.xlu0 %v708, 101
        %v711 = vpop.permute.xlu0 %710
        %712 = vrot.lane.b32.xlu0 %v709, 101
        %v713 = vpop.permute.xlu0 %712
        %vm714 = vcmask 826368
        %v715 = vsel %vm714, %v711, %v713
        %717 = vst [vmem:[#allocation2 + $0x1b] sm:$0x1] %v715
        %v718 = vld [vmem:[%s380] sm:$0x3]
        %v720 = vperm.slane %v718, 0
        %v721 = vperm.slane %v718, 1
        %722 = vrot.lane.b32.xlu0 %v720, 100
        %v723 = vpop.permute.xlu0 %722
        %724 = vrot.lane.b32.xlu0 %v721, 100
        %v725 = vpop.permute.xlu0 %724
        %vm726 = vcmask 818176
        %v727 = vsel %vm726, %v723, %v725
        %729 = vst [vmem:[#allocation2 + $0x1c] sm:$0x1] %v727
        %v730 = vld [vmem:[%s380] sm:$0x3]
        %v732 = vperm.slane %v730, 0
        %v733 = vperm.slane %v730, 1
        %734 = vrot.lane.b32.xlu0 %v732, 99
        %v735 = vpop.permute.xlu0 %734
        %736 = vrot.lane.b32.xlu0 %v733, 99
        %v737 = vpop.permute.xlu0 %736
        %vm738 = vcmask 809984
        %v739 = vsel %vm738, %v735, %v737
        %741 = vst [vmem:[#allocation2 + $0x1d] sm:$0x1] %v739
        %v742 = vld [vmem:[%s1] sm:$0xf]
        %v743 = vld [vmem:[%s1 + $0x4] sm:$0xf]
        %v744 = vld [vmem:[%s1 + $0x8] sm:$0xf]
        %v745 = vld [vmem:[%s1 + $0xc] sm:$0xf]
        %v746 = vld [vmem:[%s1 + $0x10] sm:$0xf]
        %v747 = vld [vmem:[%s1 + $0x14] sm:$0xf]
        %v748 = vld [vmem:[%s1 + $0x18] sm:$0xf]
        %v749 = vld [vmem:[%s1 + $0x1c] sm:$0xf]
        %v750 = vld [vmem:[%s1 + $0x20] sm:$0xf]
        %v751 = vld [vmem:[%s1 + $0x24] sm:$0xf]
        %v752 = vld [vmem:[%s1 + $0x28] sm:$0xf]
        %v753 = vld [vmem:[%s1 + $0x2c] sm:$0xf]
        %v754 = vld [vmem:[%s1 + $0x30] sm:$0xf]
        %v755 = vld [vmem:[%s1 + $0x34] sm:$0xf]
        %v756 = vld [vmem:[%s1 + $0x38] sm:$0xf]
        %v757 = vld [vmem:[%s1 + $0x3c] sm:$0xf]
        %v758 = vld [vmem:[#allocation2] sm:$0xff]
        %v759 = vld [vmem:[#allocation2 + $0x8] sm:$0xff]
        %v760 = vld [vmem:[#allocation2 + $0x10] sm:$0xff]
        %v761 = vld [vmem:[#allocation2 + $0x18] sm:$0xff]
        %v762 = vld [vmem:[#allocation2 + $0x20] sm:$0xff]
        %v763 = vld [vmem:[#allocation2 + $0x28] sm:$0xff]
        %v764 = vld [vmem:[#allocation2 + $0x30] sm:$0xff]
        %v765 = vld [vmem:[#allocation2 + $0x38] sm:$0xff]
        %v766 = vpack.c.bf16 %v759, %v758
        %v767 = vpack.c.bf16 %v761, %v760
        %v768 = vpack.c.bf16 %v763, %v762
        %v769 = vpack.c.bf16 %v765, %v764
        %v770 = vld [vmem:[%s2] sm:$0xff]
        %v771 = vld [vmem:[%s2 + $0x8] sm:$0xff]
        %v772 = vld [vmem:[%s2 + $0x10] sm:$0xff]
        %v773 = vld [vmem:[%s2 + $0x18] sm:$0xff]
        %v774 = vld [vmem:[%s2 + $0x20] sm:$0xff]
        %v775 = vld [vmem:[%s2 + $0x28] sm:$0xff]
        %v776 = vld [vmem:[%s2 + $0x30] sm:$0xff]
        %v777 = vld [vmem:[%s2 + $0x38] sm:$0xff]
        %v778 = vld [vmem:[%s2 + $0x40] sm:$0xff]
        %v779 = vld [vmem:[%s2 + $0x48] sm:$0xff]
        %v780 = vld [vmem:[%s2 + $0x50] sm:$0xff]
        %v781 = vld [vmem:[%s2 + $0x58] sm:$0xff]
        %v782 = vld [vmem:[%s2 + $0x60] sm:$0xff]
        %v783 = vld [vmem:[%s2 + $0x68] sm:$0xff]
        %v784 = vld [vmem:[%s2 + $0x70] sm:$0xff]
        %v785 = vld [vmem:[%s2 + $0x78] sm:$0xff]
        %787 = vset.pattern.permute.xlu0 0
        %788 = vperm.xlu0 %787, %v770
        %v789 = vpop.permute.xlu0 %788
        %792 = vset.pattern.permute.xlu0 0
        %793 = vperm.xlu0 %792, %v771
        %v794 = vpop.permute.xlu0 %793
        %797 = vset.pattern.permute.xlu0 0
        %798 = vperm.xlu0 %797, %v772
        %v799 = vpop.permute.xlu0 %798
        %802 = vset.pattern.permute.xlu0 0
        %803 = vperm.xlu0 %802, %v773
        %v804 = vpop.permute.xlu0 %803
        %807 = vset.pattern.permute.xlu0 0
        %808 = vperm.xlu0 %807, %v774
        %v809 = vpop.permute.xlu0 %808
        %812 = vset.pattern.permute.xlu0 0
        %813 = vperm.xlu0 %812, %v775
        %v814 = vpop.permute.xlu0 %813
        %817 = vset.pattern.permute.xlu0 0
        %818 = vperm.xlu0 %817, %v776
        %v819 = vpop.permute.xlu0 %818
        %822 = vset.pattern.permute.xlu0 0
        %823 = vperm.xlu0 %822, %v777
        %v824 = vpop.permute.xlu0 %823
        %827 = vset.pattern.permute.xlu0 0
        %828 = vperm.xlu0 %827, %v778
        %v829 = vpop.permute.xlu0 %828
        %832 = vset.pattern.permute.xlu0 0
        %833 = vperm.xlu0 %832, %v779
        %v834 = vpop.permute.xlu0 %833
        %837 = vset.pattern.permute.xlu0 0
        %838 = vperm.xlu0 %837, %v780
        %v839 = vpop.permute.xlu0 %838
        %842 = vset.pattern.permute.xlu0 0
        %843 = vperm.xlu0 %842, %v781
        %v844 = vpop.permute.xlu0 %843
        %847 = vset.pattern.permute.xlu0 0
        %848 = vperm.xlu0 %847, %v782
        %v849 = vpop.permute.xlu0 %848
        %852 = vset.pattern.permute.xlu0 0
        %853 = vperm.xlu0 %852, %v783
        %v854 = vpop.permute.xlu0 %853
        %857 = vset.pattern.permute.xlu0 0
        %858 = vperm.xlu0 %857, %v784
        %v859 = vpop.permute.xlu0 %858
        %862 = vset.pattern.permute.xlu0 0
        %863 = vperm.xlu0 %862, %v785
        %v864 = vpop.permute.xlu0 %863
        %v882 = vunpack.c.l.b16 %v742
        %v883 = vunpack.c.l.b16 %v743
        %v884 = vunpack.c.l.b16 %v744
        %v885 = vunpack.c.l.b16 %v745
        %v886 = vunpack.c.l.b16 %v746
        %v887 = vunpack.c.l.b16 %v747
        %v888 = vunpack.c.l.b16 %v748
        %v889 = vunpack.c.l.b16 %v749
        %v890 = vunpack.c.l.b16 %v750
        %v891 = vunpack.c.l.b16 %v751
        %v892 = vunpack.c.l.b16 %v752
        %v893 = vunpack.c.l.b16 %v753
        %v894 = vunpack.c.l.b16 %v754
        %v895 = vunpack.c.l.b16 %v755
        %v896 = vunpack.c.l.b16 %v756
        %v897 = vunpack.c.l.b16 %v757
        %v898 = vpack.c.b16 %v883, %v882
        %v899 = vpack.c.b16 %v885, %v884
        %v900 = vpack.c.b16 %v887, %v886
        %v901 = vpack.c.b16 %v889, %v888
        %v902 = vpack.c.b16 %v891, %v890
        %v903 = vpack.c.b16 %v893, %v892
        %v904 = vpack.c.b16 %v895, %v894
        %v905 = vpack.c.b16 %v897, %v896
        %vm906 = vcmask 523264
        %v908 = vsel %vm906, %v898, 0
        %v911 = vsel %vm906, %v899, 0
        %v914 = vsel %vm906, %v900, 0
        %v917 = vsel %vm906, %v901, 0
        %v920 = vsel %vm906, %v902, 0
        %v923 = vsel %vm906, %v903, 0
        %v926 = vsel %vm906, %v904, 0
        %v929 = vsel %vm906, %v905, 0
        %931 = vmatpush.bf16.msra.mxu0 0
        %932 = vmatpush.bf16.msra.mxu0 0
        %933 = vmatpush.bf16.msra.mxu0 0
        %934 = vmatpush.bf16.msra.mxu0 0
        %935 = vmatpush.bf16.msra.mxu0 %v769
        %936 = vmatpush.bf16.msra.mxu0 %v768
        %937 = vmatpush.bf16.msra.mxu0 %v767
        %938 = vmatpush.bf16.msra.mxu0 %v766
        %939 = vmatmul.bf16.gmra.mxu0 %v908
        %v940 = vpop.f32.mrf.mxu0
        %v941 = vadd.f32 %v789, %v940
        %v942 = vpop.f32.mrf.mxu0
        %v943 = vadd.f32 %v794, %v942
        %944 = vmatmul.bf16.gmra.mxu0 %v911
        %v945 = vpop.f32.mrf.mxu0
        %v946 = vadd.f32 %v799, %v945
        %v947 = vpop.f32.mrf.mxu0
        %v948 = vadd.f32 %v804, %v947
        %949 = vmatmul.bf16.gmra.mxu0 %v914
        %v950 = vpop.f32.mrf.mxu0
        %v951 = vadd.f32 %v809, %v950
        %v952 = vpop.f32.mrf.mxu0
        %v953 = vadd.f32 %v814, %v952
        %954 = vmatmul.bf16.gmra.mxu0 %v917
        %v955 = vpop.f32.mrf.mxu0
        %v956 = vadd.f32 %v819, %v955
        %v957 = vpop.f32.mrf.mxu0
        %v958 = vadd.f32 %v824, %v957
        %959 = vmatmul.bf16.gmra.mxu0 %v920
        %v960 = vpop.f32.mrf.mxu0
        %v961 = vadd.f32 %v829, %v960
        %v962 = vpop.f32.mrf.mxu0
        %v963 = vadd.f32 %v834, %v962
        %964 = vmatmul.bf16.gmra.mxu0 %v923
        %v965 = vpop.f32.mrf.mxu0
        %v966 = vadd.f32 %v839, %v965
        %v967 = vpop.f32.mrf.mxu0
        %v968 = vadd.f32 %v844, %v967
        %969 = vmatmul.bf16.gmra.mxu0 %v926
        %v970 = vpop.f32.mrf.mxu0
        %v971 = vadd.f32 %v849, %v970
        %v972 = vpop.f32.mrf.mxu0
        %v973 = vadd.f32 %v854, %v972
        %974 = vmatmul.bf16.gmra.mxu0 %v929
        %v975 = vpop.f32.mrf.mxu0
        %v976 = vadd.f32 %v859, %v975
        %v977 = vpop.f32.mrf.mxu0
        %v978 = vadd.f32 %v864, %v977
        %979 = vdwg.mxu0
        %v980 = vmax.f32 %v941, 0.0
        %v981 = vmax.f32 %v943, 0.0
        %v982 = vmax.f32 %v946, 0.0
        %v983 = vmax.f32 %v948, 0.0
        %v984 = vmax.f32 %v951, 0.0
        %v985 = vmax.f32 %v953, 0.0
        %v986 = vmax.f32 %v956, 0.0
        %v987 = vmax.f32 %v958, 0.0
        %v988 = vmax.f32 %v961, 0.0
        %v989 = vmax.f32 %v963, 0.0
        %v990 = vmax.f32 %v966, 0.0
        %v991 = vmax.f32 %v968, 0.0
        %v992 = vmax.f32 %v971, 0.0
        %v993 = vmax.f32 %v973, 0.0
        %v994 = vmax.f32 %v976, 0.0
        %v995 = vmax.f32 %v978, 0.0
        %vm996 = vcmp.lt.s32.totalorder %v383, 35
        %v997 = vsel %vm996, 1, 0
        %vm998 = vcmp.eq.s32.totalorder %v997, 1
        %v999 = vsel %vm998, %v980, 0.0
        %v1000 = vsel %vm998, %v981, 0.0
        %v1001 = vsel %vm998, %v982, 0.0
        %v1002 = vsel %vm998, %v983, 0.0
        %v1003 = vsel %vm998, %v984, 0.0
        %v1004 = vsel %vm998, %v985, 0.0
        %v1005 = vsel %vm998, %v986, 0.0
        %v1006 = vsel %vm998, %v987, 0.0
        %v1007 = vsel %vm998, %v988, 0.0
        %v1008 = vsel %vm998, %v989, 0.0
        %v1009 = vsel %vm998, %v990, 0.0
        %v1010 = vsel %vm998, %v991, 0.0
        %v1011 = vsel %vm998, %v992, 0.0
        %v1012 = vsel %vm998, %v993, 0.0
        %v1013 = vsel %vm998, %v994, 0.0
        %v1014 = vsel %vm998, %v995, 0.0
        %1015 = vmax.xlane.f32.xlu0 %v999
        %v1016 = vpop.xlane.xlu0 %1015
        %1017 = vmax.xlane.f32.xlu0 %v1000
        %v1018 = vpop.xlane.xlu0 %1017
        %1019 = vmax.xlane.f32.xlu0 %v1001
        %v1020 = vpop.xlane.xlu0 %1019
        %1021 = vmax.xlane.f32.xlu0 %v1002
        %v1022 = vpop.xlane.xlu0 %1021
        %1023 = vmax.xlane.f32.xlu0 %v1003
        %v1024 = vpop.xlane.xlu0 %1023
        %1025 = vmax.xlane.f32.xlu0 %v1004
        %v1026 = vpop.xlane.xlu0 %1025
        %1027 = vmax.xlane.f32.xlu0 %v1005
        %v1028 = vpop.xlane.xlu0 %1027
        %1029 = vmax.xlane.f32.xlu0 %v1006
        %v1030 = vpop.xlane.xlu0 %1029
        %1031 = vmax.xlane.f32.xlu0 %v1007
        %v1032 = vpop.xlane.xlu0 %1031
        %1033 = vmax.xlane.f32.xlu0 %v1008
        %v1034 = vpop.xlane.xlu0 %1033
        %1035 = vmax.xlane.f32.xlu0 %v1009
        %v1036 = vpop.xlane.xlu0 %1035
        %1037 = vmax.xlane.f32.xlu0 %v1010
        %v1038 = vpop.xlane.xlu0 %1037
        %1039 = vmax.xlane.f32.xlu0 %v1011
        %v1040 = vpop.xlane.xlu0 %1039
        %1041 = vmax.xlane.f32.xlu0 %v1012
        %v1042 = vpop.xlane.xlu0 %1041
        %1043 = vmax.xlane.f32.xlu0 %v1013
        %v1044 = vpop.xlane.xlu0 %1043
        %1045 = vmax.xlane.f32.xlu0 %v1014
        %v1046 = vpop.xlane.xlu0 %1045
        %v1047 = vld [vmem:[%s3] sm:$0xff]
        %v1048 = vld [vmem:[%s3 + $0x8] sm:$0xff]
        %v1049 = vld [vmem:[%s3 + $0x10] sm:$0xff]
        %v1050 = vld [vmem:[%s3 + $0x18] sm:$0xff]
        %v1051 = vld [vmem:[%s3 + $0x20] sm:$0xff]
        %v1052 = vld [vmem:[%s3 + $0x28] sm:$0xff]
        %v1053 = vld [vmem:[%s3 + $0x30] sm:$0xff]
        %v1054 = vld [vmem:[%s3 + $0x38] sm:$0xff]
        %v1055 = vld [vmem:[%s3 + $0x40] sm:$0xff]
        %v1056 = vld [vmem:[%s3 + $0x48] sm:$0xff]
        %v1057 = vld [vmem:[%s3 + $0x50] sm:$0xff]
        %v1058 = vld [vmem:[%s3 + $0x58] sm:$0xff]
        %v1059 = vld [vmem:[%s3 + $0x60] sm:$0xff]
        %v1060 = vld [vmem:[%s3 + $0x68] sm:$0xff]
        %v1061 = vld [vmem:[%s3 + $0x70] sm:$0xff]
        %v1062 = vld [vmem:[%s3 + $0x78] sm:$0xff]
        %v1063 = vmul.f32 %v1016, %v1047
        %v1064 = vmul.f32 %v1018, %v1048
        %v1065 = vmul.f32 %v1020, %v1049
        %v1066 = vmul.f32 %v1022, %v1050
        %v1067 = vmul.f32 %v1024, %v1051
        %v1068 = vmul.f32 %v1026, %v1052
        %v1069 = vmul.f32 %v1028, %v1053
        %v1070 = vmul.f32 %v1030, %v1054
        %v1071 = vmul.f32 %v1032, %v1055
        %v1072 = vmul.f32 %v1034, %v1056
        %v1073 = vmul.f32 %v1036, %v1057
        %v1074 = vmul.f32 %v1038, %v1058
        %v1075 = vmul.f32 %v1040, %v1059
        %v1076 = vmul.f32 %v1042, %v1060
        %v1077 = vmul.f32 %v1044, %v1061
        %v1078 = vmul.f32 %v1046, %v1062
        %v1079 = vadd.f32 %v1063, %v1064
        %v1080 = vadd.f32 %v1079, %v1065
        %v1081 = vadd.f32 %v1080, %v1066
        %v1082 = vadd.f32 %v1081, %v1067
        %v1083 = vadd.f32 %v1082, %v1068
        %v1084 = vadd.f32 %v1083, %v1069
        %v1085 = vadd.f32 %v1084, %v1070
        %v1086 = vadd.f32 %v1085, %v1071
        %v1087 = vadd.f32 %v1086, %v1072
        %v1088 = vadd.f32 %v1087, %v1073
        %v1089 = vadd.f32 %v1088, %v1074
        %v1090 = vadd.f32 %v1089, %v1075
        %v1091 = vadd.f32 %v1090, %v1076
        %v1092 = vadd.f32 %v1091, %v1077
        %v1093 = vadd.f32 %v1092, %v1078
        %v1094 = vrot.slane %v1093, 4
        %v1095 = vadd.f32 %v1093, %v1094
        %v1096 = vrot.slane %v1095, 2
        %v1097 = vadd.f32 %v1095, %v1096
        %v1098 = vrot.slane %v1097, 1
        %v1099 = vadd.f32 %v1097, %v1098
        %v1100 = vadd.f32 %v1099, 0.0
        %1101 = vst [vmem:[#allocation2] sm:$0xff] 0.0
        %1102 = vst [vmem:[#allocation2 + $0x8] sm:$0xff] 0.0
        %1103 = vst [vmem:[#allocation2 + $0x10] sm:$0xff] 0.0
        %1104 = vst [vmem:[#allocation2 + $0x18] sm:$0xff] 0.0
        %1105 = vst [vmem:[#allocation2 + $0x20] sm:$0xff] 0.0
        %1106 = vst [vmem:[#allocation2 + $0x28] sm:$0xff] 0.0
        %1107 = vst [vmem:[#allocation2 + $0x30] sm:$0xff] 0.0
        %1108 = vst [vmem:[#allocation2 + $0x38] sm:$0xff] 0.0
        %v1109 = vld [vmem:[%s380] sm:$0x1]
        %1110 = vst [vmem:[#allocation2] sm:$0x1] %v1109
        %v1111 = vld [vmem:[%s380] sm:$0x3]
        %v1113 = vperm.slane %v1111, 0
        %v1114 = vperm.slane %v1111, 1
        %1115 = vrot.lane.b32.xlu0 %v1113, 127
        %v1116 = vpop.permute.xlu0 %1115
        %1117 = vrot.lane.b32.xlu0 %v1114, 127
        %v1118 = vpop.permute.xlu0 %1117
        %v1119 = vsel %vm402, %v1116, %v1118
        %1121 = vst [vmem:[#allocation2 + $0x1] sm:$0x1] %v1119
        %v1122 = vld [vmem:[%s380] sm:$0x3]
        %v1124 = vperm.slane %v1122, 0
        %v1125 = vperm.slane %v1122, 1
        %1126 = vrot.lane.b32.xlu0 %v1124, 126
        %v1127 = vpop.permute.xlu0 %1126
        %1128 = vrot.lane.b32.xlu0 %v1125, 126
        %v1129 = vpop.permute.xlu0 %1128
        %v1130 = vsel %vm414, %v1127, %v1129
        %1132 = vst [vmem:[#allocation2 + $0x2] sm:$0x1] %v1130
        %v1133 = vld [vmem:[%s380] sm:$0x3]
        %v1135 = vperm.slane %v1133, 0
        %v1136 = vperm.slane %v1133, 1
        %1137 = vrot.lane.b32.xlu0 %v1135, 125
        %v1138 = vpop.permute.xlu0 %1137
        %1139 = vrot.lane.b32.xlu0 %v1136, 125
        %v1140 = vpop.permute.xlu0 %1139
        %v1141 = vsel %vm426, %v1138, %v1140
        %1143 = vst [vmem:[#allocation2 + $0x3] sm:$0x1] %v1141
        %v1144 = vld [vmem:[%s380] sm:$0x3]
        %v1146 = vperm.slane %v1144, 0
        %v1147 = vperm.slane %v1144, 1
        %1148 = vrot.lane.b32.xlu0 %v1146, 124
        %v1149 = vpop.permute.xlu0 %1148
        %1150 = vrot.lane.b32.xlu0 %v1147, 124
        %v1151 = vpop.permute.xlu0 %1150
        %v1152 = vsel %vm438, %v1149, %v1151
        %1154 = vst [vmem:[#allocation2 + $0x4] sm:$0x1] %v1152
        %v1155 = vld [vmem:[%s380] sm:$0x3]
        %v1157 = vperm.slane %v1155, 0
        %v1158 = vperm.slane %v1155, 1
        %1159 = vrot.lane.b32.xlu0 %v1157, 123
        %v1160 = vpop.permute.xlu0 %1159
        %1161 = vrot.lane.b32.xlu0 %v1158, 123
        %v1162 = vpop.permute.xlu0 %1161
        %v1163 = vsel %vm450, %v1160, %v1162
        %1165 = vst [vmem:[#allocation2 + $0x5] sm:$0x1] %v1163
        %v1166 = vld [vmem:[%s380] sm:$0x3]
        %v1168 = vperm.slane %v1166, 0
        %v1169 = vperm.slane %v1166, 1
        %1170 = vrot.lane.b32.xlu0 %v1168, 122
        %v1171 = vpop.permute.xlu0 %1170
        %1172 = vrot.lane.b32.xlu0 %v1169, 122
        %v1173 = vpop.permute.xlu0 %1172
        %v1174 = vsel %vm462, %v1171, %v1173
        %1176 = vst [vmem:[#allocation2 + $0x6] sm:$0x1] %v1174
        %v1177 = vld [vmem:[%s380] sm:$0x3]
        %v1179 = vperm.slane %v1177, 0
        %v1180 = vperm.slane %v1177, 1
        %1181 = vrot.lane.b32.xlu0 %v1179, 121
        %v1182 = vpop.permute.xlu0 %1181
        %1183 = vrot.lane.b32.xlu0 %v1180, 121
        %v1184 = vpop.permute.xlu0 %1183
        %v1185 = vsel %vm474, %v1182, %v1184
        %1187 = vst [vmem:[#allocation2 + $0x7] sm:$0x1] %v1185
        %v1188 = vld [vmem:[%s380] sm:$0x3]
        %v1190 = vperm.slane %v1188, 0
        %v1191 = vperm.slane %v1188, 1
        %1192 = vrot.lane.b32.xlu0 %v1190, 120
        %v1193 = vpop.permute.xlu0 %1192
        %1194 = vrot.lane.b32.xlu0 %v1191, 120
        %v1195 = vpop.permute.xlu0 %1194
        %v1196 = vsel %vm486, %v1193, %v1195
        %1198 = vst [vmem:[#allocation2 + $0x8] sm:$0x1] %v1196
        %v1199 = vld [vmem:[%s380] sm:$0x3]
        %v1201 = vperm.slane %v1199, 0
        %v1202 = vperm.slane %v1199, 1
        %1203 = vrot.lane.b32.xlu0 %v1201, 119
        %v1204 = vpop.permute.xlu0 %1203
        %1205 = vrot.lane.b32.xlu0 %v1202, 119
        %v1206 = vpop.permute.xlu0 %1205
        %v1207 = vsel %vm498, %v1204, %v1206
        %1209 = vst [vmem:[#allocation2 + $0x9] sm:$0x1] %v1207
        %v1210 = vld [vmem:[%s380] sm:$0x3]
        %v1212 = vperm.slane %v1210, 0
        %v1213 = vperm.slane %v1210, 1
        %1214 = vrot.lane.b32.xlu0 %v1212, 118
        %v1215 = vpop.permute.xlu0 %1214
        %1216 = vrot.lane.b32.xlu0 %v1213, 118
        %v1217 = vpop.permute.xlu0 %1216
        %v1218 = vsel %vm510, %v1215, %v1217
        %1220 = vst [vmem:[#allocation2 + $0xa] sm:$0x1] %v1218
        %v1221 = vld [vmem:[%s380] sm:$0x3]
        %v1223 = vperm.slane %v1221, 0
        %v1224 = vperm.slane %v1221, 1
        %1225 = vrot.lane.b32.xlu0 %v1223, 117
        %v1226 = vpop.permute.xlu0 %1225
        %1227 = vrot.lane.b32.xlu0 %v1224, 117
        %v1228 = vpop.permute.xlu0 %1227
        %v1229 = vsel %vm522, %v1226, %v1228
        %1231 = vst [vmem:[#allocation2 + $0xb] sm:$0x1] %v1229
        %v1232 = vld [vmem:[%s380] sm:$0x3]
        %v1234 = vperm.slane %v1232, 0
        %v1235 = vperm.slane %v1232, 1
        %1236 = vrot.lane.b32.xlu0 %v1234, 116
        %v1237 = vpop.permute.xlu0 %1236
        %1238 = vrot.lane.b32.xlu0 %v1235, 116
        %v1239 = vpop.permute.xlu0 %1238
        %v1240 = vsel %vm534, %v1237, %v1239
        %1242 = vst [vmem:[#allocation2 + $0xc] sm:$0x1] %v1240
        %v1243 = vld [vmem:[%s380] sm:$0x3]
        %v1245 = vperm.slane %v1243, 0
        %v1246 = vperm.slane %v1243, 1
        %1247 = vrot.lane.b32.xlu0 %v1245, 115
        %v1248 = vpop.permute.xlu0 %1247
        %1249 = vrot.lane.b32.xlu0 %v1246, 115
        %v1250 = vpop.permute.xlu0 %1249
        %v1251 = vsel %vm546, %v1248, %v1250
        %1253 = vst [vmem:[#allocation2 + $0xd] sm:$0x1] %v1251
        %v1254 = vld [vmem:[%s380] sm:$0x3]
        %v1256 = vperm.slane %v1254, 0
        %v1257 = vperm.slane %v1254, 1
        %1258 = vrot.lane.b32.xlu0 %v1256, 114
        %v1259 = vpop.permute.xlu0 %1258
        %1260 = vrot.lane.b32.xlu0 %v1257, 114
        %v1261 = vpop.permute.xlu0 %1260
        %v1262 = vsel %vm558, %v1259, %v1261
        %1264 = vst [vmem:[#allocation2 + $0xe] sm:$0x1] %v1262
        %v1265 = vld [vmem:[%s380] sm:$0x3]
        %v1267 = vperm.slane %v1265, 0
        %v1268 = vperm.slane %v1265, 1
        %1269 = vrot.lane.b32.xlu0 %v1267, 113
        %v1270 = vpop.permute.xlu0 %1269
        %1271 = vrot.lane.b32.xlu0 %v1268, 113
        %v1272 = vpop.permute.xlu0 %1271
        %v1273 = vsel %vm570, %v1270, %v1272
        %1275 = vst [vmem:[#allocation2 + $0xf] sm:$0x1] %v1273
        %v1276 = vld [vmem:[%s380] sm:$0x3]
        %v1278 = vperm.slane %v1276, 0
        %v1279 = vperm.slane %v1276, 1
        %1280 = vrot.lane.b32.xlu0 %v1278, 112
        %v1281 = vpop.permute.xlu0 %1280
        %1282 = vrot.lane.b32.xlu0 %v1279, 112
        %v1283 = vpop.permute.xlu0 %1282
        %v1284 = vsel %vm582, %v1281, %v1283
        %1286 = vst [vmem:[#allocation2 + $0x10] sm:$0x1] %v1284
        %v1287 = vld [vmem:[%s380] sm:$0x3]
        %v1289 = vperm.slane %v1287, 0
        %v1290 = vperm.slane %v1287, 1
        %1291 = vrot.lane.b32.xlu0 %v1289, 111
        %v1292 = vpop.permute.xlu0 %1291
        %1293 = vrot.lane.b32.xlu0 %v1290, 111
        %v1294 = vpop.permute.xlu0 %1293
        %v1295 = vsel %vm594, %v1292, %v1294
        %1297 = vst [vmem:[#allocation2 + $0x11] sm:$0x1] %v1295
        %v1298 = vld [vmem:[%s380] sm:$0x3]
        %v1300 = vperm.slane %v1298, 0
        %v1301 = vperm.slane %v1298, 1
        %1302 = vrot.lane.b32.xlu0 %v1300, 110
        %v1303 = vpop.permute.xlu0 %1302
        %1304 = vrot.lane.b32.xlu0 %v1301, 110
        %v1305 = vpop.permute.xlu0 %1304
        %v1306 = vsel %vm606, %v1303, %v1305
        %1308 = vst [vmem:[#allocation2 + $0x12] sm:$0x1] %v1306
        %v1309 = vld [vmem:[%s380] sm:$0x3]
        %v1311 = vperm.slane %v1309, 0
        %v1312 = vperm.slane %v1309, 1
        %1313 = vrot.lane.b32.xlu0 %v1311, 109
        %v1314 = vpop.permute.xlu0 %1313
        %1315 = vrot.lane.b32.xlu0 %v1312, 109
        %v1316 = vpop.permute.xlu0 %1315
        %v1317 = vsel %vm618, %v1314, %v1316
        %1319 = vst [vmem:[#allocation2 + $0x13] sm:$0x1] %v1317
        %v1320 = vld [vmem:[%s380] sm:$0x3]
        %v1322 = vperm.slane %v1320, 0
        %v1323 = vperm.slane %v1320, 1
        %1324 = vrot.lane.b32.xlu0 %v1322, 108
        %v1325 = vpop.permute.xlu0 %1324
        %1326 = vrot.lane.b32.xlu0 %v1323, 108
        %v1327 = vpop.permute.xlu0 %1326
        %v1328 = vsel %vm630, %v1325, %v1327
        %1330 = vst [vmem:[#allocation2 + $0x14] sm:$0x1] %v1328
        %v1331 = vld [vmem:[%s380] sm:$0x3]
        %v1333 = vperm.slane %v1331, 0
        %v1334 = vperm.slane %v1331, 1
        %1335 = vrot.lane.b32.xlu0 %v1333, 107
        %v1336 = vpop.permute.xlu0 %1335
        %1337 = vrot.lane.b32.xlu0 %v1334, 107
        %v1338 = vpop.permute.xlu0 %1337
        %v1339 = vsel %vm642, %v1336, %v1338
        %1341 = vst [vmem:[#allocation2 + $0x15] sm:$0x1] %v1339
        %v1342 = vld [vmem:[%s380] sm:$0x3]
        %v1344 = vperm.slane %v1342, 0
        %v1345 = vperm.slane %v1342, 1
        %1346 = vrot.lane.b32.xlu0 %v1344, 106
        %v1347 = vpop.permute.xlu0 %1346
        %1348 = vrot.lane.b32.xlu0 %v1345, 106
        %v1349 = vpop.permute.xlu0 %1348
        %v1350 = vsel %vm654, %v1347, %v1349
        %1352 = vst [vmem:[#allocation2 + $0x16] sm:$0x1] %v1350
        %v1353 = vld [vmem:[%s380] sm:$0x3]
        %v1355 = vperm.slane %v1353, 0
        %v1356 = vperm.slane %v1353, 1
        %1357 = vrot.lane.b32.xlu0 %v1355, 105
        %v1358 = vpop.permute.xlu0 %1357
        %1359 = vrot.lane.b32.xlu0 %v1356, 105
        %v1360 = vpop.permute.xlu0 %1359
        %v1361 = vsel %vm666, %v1358, %v1360
        %1363 = vst [vmem:[#allocation2 + $0x17] sm:$0x1] %v1361
        %v1364 = vld [vmem:[%s380] sm:$0x3]
        %v1366 = vperm.slane %v1364, 0
        %v1367 = vperm.slane %v1364, 1
        %1368 = vrot.lane.b32.xlu0 %v1366, 104
        %v1369 = vpop.permute.xlu0 %1368
        %1370 = vrot.lane.b32.xlu0 %v1367, 104
        %v1371 = vpop.permute.xlu0 %1370
        %v1372 = vsel %vm678, %v1369, %v1371
        %1374 = vst [vmem:[#allocation2 + $0x18] sm:$0x1] %v1372
        %v1375 = vld [vmem:[%s380] sm:$0x3]
        %v1377 = vperm.slane %v1375, 0
        %v1378 = vperm.slane %v1375, 1
        %1379 = vrot.lane.b32.xlu0 %v1377, 103
        %v1380 = vpop.permute.xlu0 %1379
        %1381 = vrot.lane.b32.xlu0 %v1378, 103
        %v1382 = vpop.permute.xlu0 %1381
        %v1383 = vsel %vm690, %v1380, %v1382
        %1385 = vst [vmem:[#allocation2 + $0x19] sm:$0x1] %v1383
        %v1386 = vld [vmem:[%s380] sm:$0x3]
        %v1388 = vperm.slane %v1386, 0
        %v1389 = vperm.slane %v1386, 1
        %1390 = vrot.lane.b32.xlu0 %v1388, 102
        %v1391 = vpop.permute.xlu0 %1390
        %1392 = vrot.lane.b32.xlu0 %v1389, 102
        %v1393 = vpop.permute.xlu0 %1392
        %v1394 = vsel %vm702, %v1391, %v1393
        %1396 = vst [vmem:[#allocation2 + $0x1a] sm:$0x1] %v1394
        %v1397 = vld [vmem:[%s380] sm:$0x3]
        %v1399 = vperm.slane %v1397, 0
        %v1400 = vperm.slane %v1397, 1
        %1401 = vrot.lane.b32.xlu0 %v1399, 101
        %v1402 = vpop.permute.xlu0 %1401
        %1403 = vrot.lane.b32.xlu0 %v1400, 101
        %v1404 = vpop.permute.xlu0 %1403
        %v1405 = vsel %vm714, %v1402, %v1404
        %1407 = vst [vmem:[#allocation2 + $0x1b] sm:$0x1] %v1405
        %v1408 = vld [vmem:[%s380] sm:$0x3]
        %v1410 = vperm.slane %v1408, 0
        %v1411 = vperm.slane %v1408, 1
        %1412 = vrot.lane.b32.xlu0 %v1410, 100
        %v1413 = vpop.permute.xlu0 %1412
        %1414 = vrot.lane.b32.xlu0 %v1411, 100
        %v1415 = vpop.permute.xlu0 %1414
        %v1416 = vsel %vm726, %v1413, %v1415
        %1418 = vst [vmem:[#allocation2 + $0x1c] sm:$0x1] %v1416
        %v1419 = vld [vmem:[%s380] sm:$0x3]
        %v1421 = vperm.slane %v1419, 0
        %v1422 = vperm.slane %v1419, 1
        %1423 = vrot.lane.b32.xlu0 %v1421, 99
        %v1424 = vpop.permute.xlu0 %1423
        %1425 = vrot.lane.b32.xlu0 %v1422, 99
        %v1426 = vpop.permute.xlu0 %1425
        %v1427 = vsel %vm738, %v1424, %v1426
        %1429 = vst [vmem:[#allocation2 + $0x1d] sm:$0x1] %v1427
        %v1430 = vld [vmem:[%s380] sm:$0x3]
        %v1432 = vperm.slane %v1430, 0
        %v1433 = vperm.slane %v1430, 1
        %1434 = vrot.lane.b32.xlu0 %v1432, 98
        %v1435 = vpop.permute.xlu0 %1434
        %1436 = vrot.lane.b32.xlu0 %v1433, 98
        %v1437 = vpop.permute.xlu0 %1436
        %vm1438 = vcmask 801792
        %v1439 = vsel %vm1438, %v1435, %v1437
        %1441 = vst [vmem:[#allocation2 + $0x1e] sm:$0x1] %v1439
        %v1442 = vld [vmem:[%s380] sm:$0x3]
        %v1444 = vperm.slane %v1442, 0
        %v1445 = vperm.slane %v1442, 1
        %1446 = vrot.lane.b32.xlu0 %v1444, 97
        %v1447 = vpop.permute.xlu0 %1446
        %1448 = vrot.lane.b32.xlu0 %v1445, 97
        %v1449 = vpop.permute.xlu0 %1448
        %vm1450 = vcmask 793600
        %v1451 = vsel %vm1450, %v1447, %v1449
        %1453 = vst [vmem:[#allocation2 + $0x1f] sm:$0x1] %v1451
        %v1454 = vld [vmem:[%s380] sm:$0x3]
        %v1456 = vperm.slane %v1454, 0
        %v1457 = vperm.slane %v1454, 1
        %1458 = vrot.lane.b32.xlu0 %v1456, 96
        %v1459 = vpop.permute.xlu0 %1458
        %1460 = vrot.lane.b32.xlu0 %v1457, 96
        %v1461 = vpop.permute.xlu0 %1460
        %vm1462 = vcmask 785408
        %v1463 = vsel %vm1462, %v1459, %v1461
        %1465 = vst [vmem:[#allocation2 + $0x20] sm:$0x1] %v1463
        %v1466 = vld [vmem:[%s380] sm:$0x3]
        %v1468 = vperm.slane %v1466, 0
        %v1469 = vperm.slane %v1466, 1
        %1470 = vrot.lane.b32.xlu0 %v1468, 95
        %v1471 = vpop.permute.xlu0 %1470
        %1472 = vrot.lane.b32.xlu0 %v1469, 95
        %v1473 = vpop.permute.xlu0 %1472
        %vm1474 = vcmask 777216
        %v1475 = vsel %vm1474, %v1471, %v1473
        %1477 = vst [vmem:[#allocation2 + $0x21] sm:$0x1] %v1475
        %v1478 = vld [vmem:[%s380] sm:$0x3]
        %v1480 = vperm.slane %v1478, 0
        %v1481 = vperm.slane %v1478, 1
        %1482 = vrot.lane.b32.xlu0 %v1480, 94
        %v1483 = vpop.permute.xlu0 %1482
        %1484 = vrot.lane.b32.xlu0 %v1481, 94
        %v1485 = vpop.permute.xlu0 %1484
        %vm1486 = vcmask 769024
        %v1487 = vsel %vm1486, %v1483, %v1485
        %1489 = vst [vmem:[#allocation2 + $0x22] sm:$0x1] %v1487
        %v1490 = vld [vmem:[%s380] sm:$0x3]
        %v1492 = vperm.slane %v1490, 0
        %v1493 = vperm.slane %v1490, 1
        %1494 = vrot.lane.b32.xlu0 %v1492, 93
        %v1495 = vpop.permute.xlu0 %1494
        %1496 = vrot.lane.b32.xlu0 %v1493, 93
        %v1497 = vpop.permute.xlu0 %1496
        %vm1498 = vcmask 760832
        %v1499 = vsel %vm1498, %v1495, %v1497
        %1501 = vst [vmem:[#allocation2 + $0x23] sm:$0x1] %v1499
        %v1502 = vld [vmem:[%s380] sm:$0x3]
        %v1504 = vperm.slane %v1502, 0
        %v1505 = vperm.slane %v1502, 1
        %1506 = vrot.lane.b32.xlu0 %v1504, 92
        %v1507 = vpop.permute.xlu0 %1506
        %1508 = vrot.lane.b32.xlu0 %v1505, 92
        %v1509 = vpop.permute.xlu0 %1508
        %vm1510 = vcmask 752640
        %v1511 = vsel %vm1510, %v1507, %v1509
        %1513 = vst [vmem:[#allocation2 + $0x24] sm:$0x1] %v1511
        %v1514 = vld [vmem:[%s380] sm:$0x3]
        %v1516 = vperm.slane %v1514, 0
        %v1517 = vperm.slane %v1514, 1
        %1518 = vrot.lane.b32.xlu0 %v1516, 91
        %v1519 = vpop.permute.xlu0 %1518
        %1520 = vrot.lane.b32.xlu0 %v1517, 91
        %v1521 = vpop.permute.xlu0 %1520
        %vm1522 = vcmask 744448
        %v1523 = vsel %vm1522, %v1519, %v1521
        %1525 = vst [vmem:[#allocation2 + $0x25] sm:$0x1] %v1523
        %v1526 = vld [vmem:[%s380] sm:$0x3]
        %v1528 = vperm.slane %v1526, 0
        %v1529 = vperm.slane %v1526, 1
        %1530 = vrot.lane.b32.xlu0 %v1528, 90
        %v1531 = vpop.permute.xlu0 %1530
        %1532 = vrot.lane.b32.xlu0 %v1529, 90
        %v1533 = vpop.permute.xlu0 %1532
        %vm1534 = vcmask 736256
        %v1535 = vsel %vm1534, %v1531, %v1533
        %1537 = vst [vmem:[#allocation2 + $0x26] sm:$0x1] %v1535
        %v1538 = vld [vmem:[%s380] sm:$0x3]
        %v1540 = vperm.slane %v1538, 0
        %v1541 = vperm.slane %v1538, 1
        %1542 = vrot.lane.b32.xlu0 %v1540, 89
        %v1543 = vpop.permute.xlu0 %1542
        %1544 = vrot.lane.b32.xlu0 %v1541, 89
        %v1545 = vpop.permute.xlu0 %1544
        %vm1546 = vcmask 728064
        %v1547 = vsel %vm1546, %v1543, %v1545
        %1549 = vst [vmem:[#allocation2 + $0x27] sm:$0x1] %v1547
        %v1550 = vld [vmem:[%s4] sm:$0xf]
        %v1551 = vld [vmem:[%s4 + $0x4] sm:$0xf]
        %v1552 = vld [vmem:[%s4 + $0x8] sm:$0xf]
        %v1553 = vld [vmem:[%s4 + $0xc] sm:$0xf]
        %v1554 = vld [vmem:[%s4 + $0x10] sm:$0xf]
        %v1555 = vld [vmem:[%s4 + $0x14] sm:$0xf]
        %v1556 = vld [vmem:[%s4 + $0x18] sm:$0xf]
        %v1557 = vld [vmem:[%s4 + $0x1c] sm:$0xf]
        %v1558 = vld [vmem:[%s4 + $0x20] sm:$0xf]
        %v1559 = vld [vmem:[%s4 + $0x24] sm:$0xf]
        %v1560 = vld [vmem:[%s4 + $0x28] sm:$0xf]
        %v1561 = vld [vmem:[%s4 + $0x2c] sm:$0xf]
        %v1562 = vld [vmem:[%s4 + $0x30] sm:$0xf]
        %v1563 = vld [vmem:[%s4 + $0x34] sm:$0xf]
        %v1564 = vld [vmem:[%s4 + $0x38] sm:$0xf]
        %v1565 = vld [vmem:[%s4 + $0x3c] sm:$0xf]
        %v1566 = vld [vmem:[#allocation2] sm:$0xff]
        %v1567 = vld [vmem:[#allocation2 + $0x8] sm:$0xff]
        %v1568 = vld [vmem:[#allocation2 + $0x10] sm:$0xff]
        %v1569 = vld [vmem:[#allocation2 + $0x18] sm:$0xff]
        %v1570 = vld [vmem:[#allocation2 + $0x20] sm:$0xff]
        %v1571 = vld [vmem:[#allocation2 + $0x28] sm:$0xff]
        %v1572 = vld [vmem:[#allocation2 + $0x30] sm:$0xff]
        %v1573 = vld [vmem:[#allocation2 + $0x38] sm:$0xff]
        %v1574 = vpack.c.bf16 %v1567, %v1566
        %v1575 = vpack.c.bf16 %v1569, %v1568
        %v1576 = vpack.c.bf16 %v1571, %v1570
        %v1577 = vpack.c.bf16 %v1573, %v1572
        %v1578 = vld [vmem:[%s5] sm:$0xff]
        %v1579 = vld [vmem:[%s5 + $0x8] sm:$0xff]
        %v1580 = vld [vmem:[%s5 + $0x10] sm:$0xff]
        %v1581 = vld [vmem:[%s5 + $0x18] sm:$0xff]
        %v1582 = vld [vmem:[%s5 + $0x20] sm:$0xff]
        %v1583 = vld [vmem:[%s5 + $0x28] sm:$0xff]
        %v1584 = vld [vmem:[%s5 + $0x30] sm:$0xff]
        %v1585 = vld [vmem:[%s5 + $0x38] sm:$0xff]
        %v1586 = vld [vmem:[%s5 + $0x40] sm:$0xff]
        %v1587 = vld [vmem:[%s5 + $0x48] sm:$0xff]
        %v1588 = vld [vmem:[%s5 + $0x50] sm:$0xff]
        %v1589 = vld [vmem:[%s5 + $0x58] sm:$0xff]
        %v1590 = vld [vmem:[%s5 + $0x60] sm:$0xff]
        %v1591 = vld [vmem:[%s5 + $0x68] sm:$0xff]
        %v1592 = vld [vmem:[%s5 + $0x70] sm:$0xff]
        %v1593 = vld [vmem:[%s5 + $0x78] sm:$0xff]
        %1595 = vset.pattern.permute.xlu0 0
        %1596 = vperm.xlu0 %1595, %v1578
        %v1597 = vpop.permute.xlu0 %1596
        %1600 = vset.pattern.permute.xlu0 0
        %1601 = vperm.xlu0 %1600, %v1579
        %v1602 = vpop.permute.xlu0 %1601
        %1605 = vset.pattern.permute.xlu0 0
        %1606 = vperm.xlu0 %1605, %v1580
        %v1607 = vpop.permute.xlu0 %1606
        %1610 = vset.pattern.permute.xlu0 0
        %1611 = vperm.xlu0 %1610, %v1581
        %v1612 = vpop.permute.xlu0 %1611
        %1615 = vset.pattern.permute.xlu0 0
        %1616 = vperm.xlu0 %1615, %v1582
        %v1617 = vpop.permute.xlu0 %1616
        %1620 = vset.pattern.permute.xlu0 0
        %1621 = vperm.xlu0 %1620, %v1583
        %v1622 = vpop.permute.xlu0 %1621
        %1625 = vset.pattern.permute.xlu0 0
        %1626 = vperm.xlu0 %1625, %v1584
        %v1627 = vpop.permute.xlu0 %1626
        %1630 = vset.pattern.permute.xlu0 0
        %1631 = vperm.xlu0 %1630, %v1585
        %v1632 = vpop.permute.xlu0 %1631
        %1635 = vset.pattern.permute.xlu0 0
        %1636 = vperm.xlu0 %1635, %v1586
        %v1637 = vpop.permute.xlu0 %1636
        %1640 = vset.pattern.permute.xlu0 0
        %1641 = vperm.xlu0 %1640, %v1587
        %v1642 = vpop.permute.xlu0 %1641
        %1645 = vset.pattern.permute.xlu0 0
        %1646 = vperm.xlu0 %1645, %v1588
        %v1647 = vpop.permute.xlu0 %1646
        %1650 = vset.pattern.permute.xlu0 0
        %1651 = vperm.xlu0 %1650, %v1589
        %v1652 = vpop.permute.xlu0 %1651
        %1655 = vset.pattern.permute.xlu0 0
        %1656 = vperm.xlu0 %1655, %v1590
        %v1657 = vpop.permute.xlu0 %1656
        %1660 = vset.pattern.permute.xlu0 0
        %1661 = vperm.xlu0 %1660, %v1591
        %v1662 = vpop.permute.xlu0 %1661
        %1665 = vset.pattern.permute.xlu0 0
        %1666 = vperm.xlu0 %1665, %v1592
        %v1667 = vpop.permute.xlu0 %1666
        %1670 = vset.pattern.permute.xlu0 0
        %1671 = vperm.xlu0 %1670, %v1593
        %v1672 = vpop.permute.xlu0 %1671
        %v1690 = vunpack.c.l.b16 %v1550
        %v1691 = vunpack.c.l.b16 %v1551
        %v1692 = vunpack.c.l.b16 %v1552
        %v1693 = vunpack.c.l.b16 %v1553
        %v1694 = vunpack.c.l.b16 %v1554
        %v1695 = vunpack.c.l.b16 %v1555
        %v1696 = vunpack.c.l.b16 %v1556
        %v1697 = vunpack.c.l.b16 %v1557
        %v1698 = vunpack.c.l.b16 %v1558
        %v1699 = vunpack.c.l.b16 %v1559
        %v1700 = vunpack.c.l.b16 %v1560
        %v1701 = vunpack.c.l.b16 %v1561
        %v1702 = vunpack.c.l.b16 %v1562
        %v1703 = vunpack.c.l.b16 %v1563
        %v1704 = vunpack.c.l.b16 %v1564
        %v1705 = vunpack.c.l.b16 %v1565
        %v1706 = vpack.c.b16 %v1691, %v1690
        %v1707 = vpack.c.b16 %v1693, %v1692
        %v1708 = vpack.c.b16 %v1695, %v1694
        %v1709 = vpack.c.b16 %v1697, %v1696
        %v1710 = vpack.c.b16 %v1699, %v1698
        %v1711 = vpack.c.b16 %v1701, %v1700
        %v1712 = vpack.c.b16 %v1703, %v1702
        %v1713 = vpack.c.b16 %v1705, %v1704
        %v1715 = vsel %vm906, %v1706, 0
        %v1718 = vsel %vm906, %v1707, 0
        %v1721 = vsel %vm906, %v1708, 0
        %v1724 = vsel %vm906, %v1709, 0
        %v1727 = vsel %vm906, %v1710, 0
        %v1730 = vsel %vm906, %v1711, 0
        %v1733 = vsel %vm906, %v1712, 0
        %v1736 = vsel %vm906, %v1713, 0
        %1738 = vmatpush.bf16.msra.mxu0 0
        %1739 = vmatpush.bf16.msra.mxu0 0
        %1740 = vmatpush.bf16.msra.mxu0 0
        %1741 = vmatpush.bf16.msra.mxu0 0
        %1742 = vmatpush.bf16.msra.mxu0 %v1577
        %1743 = vmatpush.bf16.msra.mxu0 %v1576
        %1744 = vmatpush.bf16.msra.mxu0 %v1575
        %1745 = vmatpush.bf16.msra.mxu0 %v1574
        %1746 = vmatmul.bf16.gmra.mxu0 %v1715
        %v1747 = vpop.f32.mrf.mxu0
        %v1748 = vadd.f32 %v1597, %v1747
        %v1749 = vpop.f32.mrf.mxu0
        %v1750 = vadd.f32 %v1602, %v1749
        %1751 = vmatmul.bf16.gmra.mxu0 %v1718
        %v1752 = vpop.f32.mrf.mxu0
        %v1753 = vadd.f32 %v1607, %v1752
        %v1754 = vpop.f32.mrf.mxu0
        %v1755 = vadd.f32 %v1612, %v1754
        %1756 = vmatmul.bf16.gmra.mxu0 %v1721
        %v1757 = vpop.f32.mrf.mxu0
        %v1758 = vadd.f32 %v1617, %v1757
        %v1759 = vpop.f32.mrf.mxu0
        %v1760 = vadd.f32 %v1622, %v1759
        %1761 = vmatmul.bf16.gmra.mxu0 %v1724
        %v1762 = vpop.f32.mrf.mxu0
        %v1763 = vadd.f32 %v1627, %v1762
        %v1764 = vpop.f32.mrf.mxu0
        %v1765 = vadd.f32 %v1632, %v1764
        %1766 = vmatmul.bf16.gmra.mxu0 %v1727
        %v1767 = vpop.f32.mrf.mxu0
        %v1768 = vadd.f32 %v1637, %v1767
        %v1769 = vpop.f32.mrf.mxu0
        %v1770 = vadd.f32 %v1642, %v1769
        %1771 = vmatmul.bf16.gmra.mxu0 %v1730
        %v1772 = vpop.f32.mrf.mxu0
        %v1773 = vadd.f32 %v1647, %v1772
        %v1774 = vpop.f32.mrf.mxu0
        %v1775 = vadd.f32 %v1652, %v1774
        %1776 = vmatmul.bf16.gmra.mxu0 %v1733
        %v1777 = vpop.f32.mrf.mxu0
        %v1778 = vadd.f32 %v1657, %v1777
        %v1779 = vpop.f32.mrf.mxu0
        %v1780 = vadd.f32 %v1662, %v1779
        %1781 = vmatmul.bf16.gmra.mxu0 %v1736
        %v1782 = vpop.f32.mrf.mxu0
        %v1783 = vadd.f32 %v1667, %v1782
        %v1784 = vpop.f32.mrf.mxu0
        %v1785 = vadd.f32 %v1672, %v1784
        %1786 = vdwg.mxu0
        %v1787 = vmax.f32 %v1748, 0.0
        %v1788 = vmax.f32 %v1750, 0.0
        %v1789 = vmax.f32 %v1753, 0.0
        %v1790 = vmax.f32 %v1755, 0.0
        %v1791 = vmax.f32 %v1758, 0.0
        %v1792 = vmax.f32 %v1760, 0.0
        %v1793 = vmax.f32 %v1763, 0.0
        %v1794 = vmax.f32 %v1765, 0.0
        %v1795 = vmax.f32 %v1768, 0.0
        %v1796 = vmax.f32 %v1770, 0.0
        %v1797 = vmax.f32 %v1773, 0.0
        %v1798 = vmax.f32 %v1775, 0.0
        %v1799 = vmax.f32 %v1778, 0.0
        %v1800 = vmax.f32 %v1780, 0.0
        %v1801 = vmax.f32 %v1783, 0.0
        %v1802 = vmax.f32 %v1785, 0.0
        %vm1803 = vcmp.lt.s32.totalorder %v383, 25
        %v1804 = vsel %vm1803, 1, 0
        %vm1805 = vcmp.eq.s32.totalorder %v1804, 1
        %v1806 = vsel %vm1805, %v1787, 0.0
        %v1807 = vsel %vm1805, %v1788, 0.0
        %v1808 = vsel %vm1805, %v1789, 0.0
        %v1809 = vsel %vm1805, %v1790, 0.0
        %v1810 = vsel %vm1805, %v1791, 0.0
        %v1811 = vsel %vm1805, %v1792, 0.0
        %v1812 = vsel %vm1805, %v1793, 0.0
        %v1813 = vsel %vm1805, %v1794, 0.0
        %v1814 = vsel %vm1805, %v1795, 0.0
        %v1815 = vsel %vm1805, %v1796, 0.0
        %v1816 = vsel %vm1805, %v1797, 0.0
        %v1817 = vsel %vm1805, %v1798, 0.0
        %v1818 = vsel %vm1805, %v1799, 0.0
        %v1819 = vsel %vm1805, %v1800, 0.0
        %v1820 = vsel %vm1805, %v1801, 0.0
        %v1821 = vsel %vm1805, %v1802, 0.0
        %1822 = vmax.xlane.f32.xlu0 %v1806
        %v1823 = vpop.xlane.xlu0 %1822
        %1824 = vmax.xlane.f32.xlu0 %v1807
        %v1825 = vpop.xlane.xlu0 %1824
        %1826 = vmax.xlane.f32.xlu0 %v1808
        %v1827 = vpop.xlane.xlu0 %1826
        %1828 = vmax.xlane.f32.xlu0 %v1809
        %v1829 = vpop.xlane.xlu0 %1828
        %1830 = vmax.xlane.f32.xlu0 %v1810
        %v1831 = vpop.xlane.xlu0 %1830
        %1832 = vmax.xlane.f32.xlu0 %v1811
        %v1833 = vpop.xlane.xlu0 %1832
        %1834 = vmax.xlane.f32.xlu0 %v1812
        %v1835 = vpop.xlane.xlu0 %1834
        %1836 = vmax.xlane.f32.xlu0 %v1813
        %v1837 = vpop.xlane.xlu0 %1836
        %1838 = vmax.xlane.f32.xlu0 %v1814
        %v1839 = vpop.xlane.xlu0 %1838
        %1840 = vmax.xlane.f32.xlu0 %v1815
        %v1841 = vpop.xlane.xlu0 %1840
        %1842 = vmax.xlane.f32.xlu0 %v1816
        %v1843 = vpop.xlane.xlu0 %1842
        %1844 = vmax.xlane.f32.xlu0 %v1817
        %v1845 = vpop.xlane.xlu0 %1844
        %1846 = vmax.xlane.f32.xlu0 %v1818
        %v1847 = vpop.xlane.xlu0 %1846
        %1848 = vmax.xlane.f32.xlu0 %v1819
        %v1849 = vpop.xlane.xlu0 %1848
        %1850 = vmax.xlane.f32.xlu0 %v1820
        %v1851 = vpop.xlane.xlu0 %1850
        %1852 = vmax.xlane.f32.xlu0 %v1821
        %v1853 = vpop.xlane.xlu0 %1852
        %v1854 = vld [vmem:[%s6] sm:$0xff]
        %v1855 = vld [vmem:[%s6 + $0x8] sm:$0xff]
        %v1856 = vld [vmem:[%s6 + $0x10] sm:$0xff]
        %v1857 = vld [vmem:[%s6 + $0x18] sm:$0xff]
        %v1858 = vld [vmem:[%s6 + $0x20] sm:$0xff]
        %v1859 = vld [vmem:[%s6 + $0x28] sm:$0xff]
        %v1860 = vld [vmem:[%s6 + $0x30] sm:$0xff]
        %v1861 = vld [vmem:[%s6 + $0x38] sm:$0xff]
        %v1862 = vld [vmem:[%s6 + $0x40] sm:$0xff]
        %v1863 = vld [vmem:[%s6 + $0x48] sm:$0xff]
        %v1864 = vld [vmem:[%s6 + $0x50] sm:$0xff]
        %v1865 = vld [vmem:[%s6 + $0x58] sm:$0xff]
        %v1866 = vld [vmem:[%s6 + $0x60] sm:$0xff]
        %v1867 = vld [vmem:[%s6 + $0x68] sm:$0xff]
        %v1868 = vld [vmem:[%s6 + $0x70] sm:$0xff]
        %v1869 = vld [vmem:[%s6 + $0x78] sm:$0xff]
        %v1870 = vmul.f32 %v1823, %v1854
        %v1871 = vmul.f32 %v1825, %v1855
        %v1872 = vmul.f32 %v1827, %v1856
        %v1873 = vmul.f32 %v1829, %v1857
        %v1874 = vmul.f32 %v1831, %v1858
        %v1875 = vmul.f32 %v1833, %v1859
        %v1876 = vmul.f32 %v1835, %v1860
        %v1877 = vmul.f32 %v1837, %v1861
        %v1878 = vmul.f32 %v1839, %v1862
        %v1879 = vmul.f32 %v1841, %v1863
        %v1880 = vmul.f32 %v1843, %v1864
        %v1881 = vmul.f32 %v1845, %v1865
        %v1882 = vmul.f32 %v1847, %v1866
        %v1883 = vmul.f32 %v1849, %v1867
        %v1884 = vmul.f32 %v1851, %v1868
        %v1885 = vmul.f32 %v1853, %v1869
        %v1886 = vadd.f32 %v1870, %v1871
        %v1887 = vadd.f32 %v1886, %v1872
        %v1888 = vadd.f32 %v1887, %v1873
        %v1889 = vadd.f32 %v1888, %v1874
        %v1890 = vadd.f32 %v1889, %v1875
        %v1891 = vadd.f32 %v1890, %v1876
        %v1892 = vadd.f32 %v1891, %v1877
        %v1893 = vadd.f32 %v1892, %v1878
        %v1894 = vadd.f32 %v1893, %v1879
        %v1895 = vadd.f32 %v1894, %v1880
        %v1896 = vadd.f32 %v1895, %v1881
        %v1897 = vadd.f32 %v1896, %v1882
        %v1898 = vadd.f32 %v1897, %v1883
        %v1899 = vadd.f32 %v1898, %v1884
        %v1900 = vadd.f32 %v1899, %v1885
        %v1901 = vrot.slane %v1900, 4
        %v1902 = vadd.f32 %v1900, %v1901
        %v1903 = vrot.slane %v1902, 2
        %v1904 = vadd.f32 %v1902, %v1903
        %v1905 = vrot.slane %v1904, 1
        %v1906 = vadd.f32 %v1904, %v1905
        %v1907 = vadd.f32 %v1100, %v1906
        %1908 = vst [vmem:[#allocation2] sm:$0xff] 0.0
        %1909 = vst [vmem:[#allocation2 + $0x8] sm:$0xff] 0.0
        %1910 = vst [vmem:[#allocation2 + $0x10] sm:$0xff] 0.0
        %1911 = vst [vmem:[#allocation2 + $0x18] sm:$0xff] 0.0
        %1912 = vst [vmem:[#allocation2 + $0x20] sm:$0xff] 0.0
        %1913 = vst [vmem:[#allocation2 + $0x28] sm:$0xff] 0.0
        %1914 = vst [vmem:[#allocation2 + $0x30] sm:$0xff] 0.0
        %1915 = vst [vmem:[#allocation2 + $0x38] sm:$0xff] 0.0
        %v1916 = vld [vmem:[%s380] sm:$0x1]
        %1917 = vst [vmem:[#allocation2] sm:$0x1] %v1916
        %v1918 = vld [vmem:[%s380] sm:$0x3]
        %v1920 = vperm.slane %v1918, 0
        %v1921 = vperm.slane %v1918, 1
        %1922 = vrot.lane.b32.xlu0 %v1920, 127
        %v1923 = vpop.permute.xlu0 %1922
        %1924 = vrot.lane.b32.xlu0 %v1921, 127
        %v1925 = vpop.permute.xlu0 %1924
        %v1926 = vsel %vm402, %v1923, %v1925
        %1928 = vst [vmem:[#allocation2 + $0x1] sm:$0x1] %v1926
        %v1929 = vld [vmem:[%s380] sm:$0x3]
        %v1931 = vperm.slane %v1929, 0
        %v1932 = vperm.slane %v1929, 1
        %1933 = vrot.lane.b32.xlu0 %v1931, 126
        %v1934 = vpop.permute.xlu0 %1933
        %1935 = vrot.lane.b32.xlu0 %v1932, 126
        %v1936 = vpop.permute.xlu0 %1935
        %v1937 = vsel %vm414, %v1934, %v1936
        %1939 = vst [vmem:[#allocation2 + $0x2] sm:$0x1] %v1937
        %v1940 = vld [vmem:[%s380] sm:$0x3]
        %v1942 = vperm.slane %v1940, 0
        %v1943 = vperm.slane %v1940, 1
        %1944 = vrot.lane.b32.xlu0 %v1942, 125
        %v1945 = vpop.permute.xlu0 %1944
        %1946 = vrot.lane.b32.xlu0 %v1943, 125
        %v1947 = vpop.permute.xlu0 %1946
        %v1948 = vsel %vm426, %v1945, %v1947
        %1950 = vst [vmem:[#allocation2 + $0x3] sm:$0x1] %v1948
        %v1951 = vld [vmem:[%s380] sm:$0x3]
        %v1953 = vperm.slane %v1951, 0
        %v1954 = vperm.slane %v1951, 1
        %1955 = vrot.lane.b32.xlu0 %v1953, 124
        %v1956 = vpop.permute.xlu0 %1955
        %1957 = vrot.lane.b32.xlu0 %v1954, 124
        %v1958 = vpop.permute.xlu0 %1957
        %v1959 = vsel %vm438, %v1956, %v1958
        %1961 = vst [vmem:[#allocation2 + $0x4] sm:$0x1] %v1959
        %v1962 = vld [vmem:[%s380] sm:$0x3]
        %v1964 = vperm.slane %v1962, 0
        %v1965 = vperm.slane %v1962, 1
        %1966 = vrot.lane.b32.xlu0 %v1964, 123
        %v1967 = vpop.permute.xlu0 %1966
        %1968 = vrot.lane.b32.xlu0 %v1965, 123
        %v1969 = vpop.permute.xlu0 %1968
        %v1970 = vsel %vm450, %v1967, %v1969
        %1972 = vst [vmem:[#allocation2 + $0x5] sm:$0x1] %v1970
        %v1973 = vld [vmem:[%s380] sm:$0x3]
        %v1975 = vperm.slane %v1973, 0
        %v1976 = vperm.slane %v1973, 1
        %1977 = vrot.lane.b32.xlu0 %v1975, 122
        %v1978 = vpop.permute.xlu0 %1977
        %1979 = vrot.lane.b32.xlu0 %v1976, 122
        %v1980 = vpop.permute.xlu0 %1979
        %v1981 = vsel %vm462, %v1978, %v1980
        %1983 = vst [vmem:[#allocation2 + $0x6] sm:$0x1] %v1981
        %v1984 = vld [vmem:[%s380] sm:$0x3]
        %v1986 = vperm.slane %v1984, 0
        %v1987 = vperm.slane %v1984, 1
        %1988 = vrot.lane.b32.xlu0 %v1986, 121
        %v1989 = vpop.permute.xlu0 %1988
        %1990 = vrot.lane.b32.xlu0 %v1987, 121
        %v1991 = vpop.permute.xlu0 %1990
        %v1992 = vsel %vm474, %v1989, %v1991
        %1994 = vst [vmem:[#allocation2 + $0x7] sm:$0x1] %v1992
        %v1995 = vld [vmem:[%s380] sm:$0x3]
        %v1997 = vperm.slane %v1995, 0
        %v1998 = vperm.slane %v1995, 1
        %1999 = vrot.lane.b32.xlu0 %v1997, 120
        %v2000 = vpop.permute.xlu0 %1999
        %2001 = vrot.lane.b32.xlu0 %v1998, 120
        %v2002 = vpop.permute.xlu0 %2001
        %v2003 = vsel %vm486, %v2000, %v2002
        %2005 = vst [vmem:[#allocation2 + $0x8] sm:$0x1] %v2003
        %v2006 = vld [vmem:[%s380] sm:$0x3]
        %v2008 = vperm.slane %v2006, 0
        %v2009 = vperm.slane %v2006, 1
        %2010 = vrot.lane.b32.xlu0 %v2008, 119
        %v2011 = vpop.permute.xlu0 %2010
        %2012 = vrot.lane.b32.xlu0 %v2009, 119
        %v2013 = vpop.permute.xlu0 %2012
        %v2014 = vsel %vm498, %v2011, %v2013
        %2016 = vst [vmem:[#allocation2 + $0x9] sm:$0x1] %v2014
        %v2017 = vld [vmem:[%s380] sm:$0x3]
        %v2019 = vperm.slane %v2017, 0
        %v2020 = vperm.slane %v2017, 1
        %2021 = vrot.lane.b32.xlu0 %v2019, 118
        %v2022 = vpop.permute.xlu0 %2021
        %2023 = vrot.lane.b32.xlu0 %v2020, 118
        %v2024 = vpop.permute.xlu0 %2023
        %v2025 = vsel %vm510, %v2022, %v2024
        %2027 = vst [vmem:[#allocation2 + $0xa] sm:$0x1] %v2025
        %v2028 = vld [vmem:[%s380] sm:$0x3]
        %v2030 = vperm.slane %v2028, 0
        %v2031 = vperm.slane %v2028, 1
        %2032 = vrot.lane.b32.xlu0 %v2030, 117
        %v2033 = vpop.permute.xlu0 %2032
        %2034 = vrot.lane.b32.xlu0 %v2031, 117
        %v2035 = vpop.permute.xlu0 %2034
        %v2036 = vsel %vm522, %v2033, %v2035
        %2038 = vst [vmem:[#allocation2 + $0xb] sm:$0x1] %v2036
        %v2039 = vld [vmem:[%s380] sm:$0x3]
        %v2041 = vperm.slane %v2039, 0
        %v2042 = vperm.slane %v2039, 1
        %2043 = vrot.lane.b32.xlu0 %v2041, 116
        %v2044 = vpop.permute.xlu0 %2043
        %2045 = vrot.lane.b32.xlu0 %v2042, 116
        %v2046 = vpop.permute.xlu0 %2045
        %v2047 = vsel %vm534, %v2044, %v2046
        %2049 = vst [vmem:[#allocation2 + $0xc] sm:$0x1] %v2047
        %v2050 = vld [vmem:[%s380] sm:$0x3]
        %v2052 = vperm.slane %v2050, 0
        %v2053 = vperm.slane %v2050, 1
        %2054 = vrot.lane.b32.xlu0 %v2052, 115
        %v2055 = vpop.permute.xlu0 %2054
        %2056 = vrot.lane.b32.xlu0 %v2053, 115
        %v2057 = vpop.permute.xlu0 %2056
        %v2058 = vsel %vm546, %v2055, %v2057
        %2060 = vst [vmem:[#allocation2 + $0xd] sm:$0x1] %v2058
        %v2061 = vld [vmem:[%s380] sm:$0x3]
        %v2063 = vperm.slane %v2061, 0
        %v2064 = vperm.slane %v2061, 1
        %2065 = vrot.lane.b32.xlu0 %v2063, 114
        %v2066 = vpop.permute.xlu0 %2065
        %2067 = vrot.lane.b32.xlu0 %v2064, 114
        %v2068 = vpop.permute.xlu0 %2067
        %v2069 = vsel %vm558, %v2066, %v2068
        %2071 = vst [vmem:[#allocation2 + $0xe] sm:$0x1] %v2069
        %v2072 = vld [vmem:[%s380] sm:$0x3]
        %v2074 = vperm.slane %v2072, 0
        %v2075 = vperm.slane %v2072, 1
        %2076 = vrot.lane.b32.xlu0 %v2074, 113
        %v2077 = vpop.permute.xlu0 %2076
        %2078 = vrot.lane.b32.xlu0 %v2075, 113
        %v2079 = vpop.permute.xlu0 %2078
        %v2080 = vsel %vm570, %v2077, %v2079
        %2082 = vst [vmem:[#allocation2 + $0xf] sm:$0x1] %v2080
        %v2083 = vld [vmem:[%s380] sm:$0x3]
        %v2085 = vperm.slane %v2083, 0
        %v2086 = vperm.slane %v2083, 1
        %2087 = vrot.lane.b32.xlu0 %v2085, 112
        %v2088 = vpop.permute.xlu0 %2087
        %2089 = vrot.lane.b32.xlu0 %v2086, 112
        %v2090 = vpop.permute.xlu0 %2089
        %v2091 = vsel %vm582, %v2088, %v2090
        %2093 = vst [vmem:[#allocation2 + $0x10] sm:$0x1] %v2091
        %v2094 = vld [vmem:[%s380] sm:$0x3]
        %v2096 = vperm.slane %v2094, 0
        %v2097 = vperm.slane %v2094, 1
        %2098 = vrot.lane.b32.xlu0 %v2096, 111
        %v2099 = vpop.permute.xlu0 %2098
        %2100 = vrot.lane.b32.xlu0 %v2097, 111
        %v2101 = vpop.permute.xlu0 %2100
        %v2102 = vsel %vm594, %v2099, %v2101
        %2104 = vst [vmem:[#allocation2 + $0x11] sm:$0x1] %v2102
        %v2105 = vld [vmem:[%s380] sm:$0x3]
        %v2107 = vperm.slane %v2105, 0
        %v2108 = vperm.slane %v2105, 1
        %2109 = vrot.lane.b32.xlu0 %v2107, 110
        %v2110 = vpop.permute.xlu0 %2109
        %2111 = vrot.lane.b32.xlu0 %v2108, 110
        %v2112 = vpop.permute.xlu0 %2111
        %v2113 = vsel %vm606, %v2110, %v2112
        %2115 = vst [vmem:[#allocation2 + $0x12] sm:$0x1] %v2113
        %v2116 = vld [vmem:[%s380] sm:$0x3]
        %v2118 = vperm.slane %v2116, 0
        %v2119 = vperm.slane %v2116, 1
        %2120 = vrot.lane.b32.xlu0 %v2118, 109
        %v2121 = vpop.permute.xlu0 %2120
        %2122 = vrot.lane.b32.xlu0 %v2119, 109
        %v2123 = vpop.permute.xlu0 %2122
        %v2124 = vsel %vm618, %v2121, %v2123
        %2126 = vst [vmem:[#allocation2 + $0x13] sm:$0x1] %v2124
        %v2127 = vld [vmem:[%s380] sm:$0x3]
        %v2129 = vperm.slane %v2127, 0
        %v2130 = vperm.slane %v2127, 1
        %2131 = vrot.lane.b32.xlu0 %v2129, 108
        %v2132 = vpop.permute.xlu0 %2131
        %2133 = vrot.lane.b32.xlu0 %v2130, 108
        %v2134 = vpop.permute.xlu0 %2133
        %v2135 = vsel %vm630, %v2132, %v2134
        %2137 = vst [vmem:[#allocation2 + $0x14] sm:$0x1] %v2135
        %v2138 = vld [vmem:[%s380] sm:$0x3]
        %v2140 = vperm.slane %v2138, 0
        %v2141 = vperm.slane %v2138, 1
        %2142 = vrot.lane.b32.xlu0 %v2140, 107
        %v2143 = vpop.permute.xlu0 %2142
        %2144 = vrot.lane.b32.xlu0 %v2141, 107
        %v2145 = vpop.permute.xlu0 %2144
        %v2146 = vsel %vm642, %v2143, %v2145
        %2148 = vst [vmem:[#allocation2 + $0x15] sm:$0x1] %v2146
        %v2149 = vld [vmem:[%s380] sm:$0x3]
        %v2151 = vperm.slane %v2149, 0
        %v2152 = vperm.slane %v2149, 1
        %2153 = vrot.lane.b32.xlu0 %v2151, 106
        %v2154 = vpop.permute.xlu0 %2153
        %2155 = vrot.lane.b32.xlu0 %v2152, 106
        %v2156 = vpop.permute.xlu0 %2155
        %v2157 = vsel %vm654, %v2154, %v2156
        %2159 = vst [vmem:[#allocation2 + $0x16] sm:$0x1] %v2157
        %v2160 = vld [vmem:[%s380] sm:$0x3]
        %v2162 = vperm.slane %v2160, 0
        %v2163 = vperm.slane %v2160, 1
        %2164 = vrot.lane.b32.xlu0 %v2162, 105
        %v2165 = vpop.permute.xlu0 %2164
        %2166 = vrot.lane.b32.xlu0 %v2163, 105
        %v2167 = vpop.permute.xlu0 %2166
        %v2168 = vsel %vm666, %v2165, %v2167
        %2170 = vst [vmem:[#allocation2 + $0x17] sm:$0x1] %v2168
        %v2171 = vld [vmem:[%s380] sm:$0x3]
        %v2173 = vperm.slane %v2171, 0
        %v2174 = vperm.slane %v2171, 1
        %2175 = vrot.lane.b32.xlu0 %v2173, 104
        %v2176 = vpop.permute.xlu0 %2175
        %2177 = vrot.lane.b32.xlu0 %v2174, 104
        %v2178 = vpop.permute.xlu0 %2177
        %v2179 = vsel %vm678, %v2176, %v2178
        %2181 = vst [vmem:[#allocation2 + $0x18] sm:$0x1] %v2179
        %v2182 = vld [vmem:[%s380] sm:$0x3]
        %v2184 = vperm.slane %v2182, 0
        %v2185 = vperm.slane %v2182, 1
        %2186 = vrot.lane.b32.xlu0 %v2184, 103
        %v2187 = vpop.permute.xlu0 %2186
        %2188 = vrot.lane.b32.xlu0 %v2185, 103
        %v2189 = vpop.permute.xlu0 %2188
        %v2190 = vsel %vm690, %v2187, %v2189
        %2192 = vst [vmem:[#allocation2 + $0x19] sm:$0x1] %v2190
        %v2193 = vld [vmem:[%s380] sm:$0x3]
        %v2195 = vperm.slane %v2193, 0
        %v2196 = vperm.slane %v2193, 1
        %2197 = vrot.lane.b32.xlu0 %v2195, 102
        %v2198 = vpop.permute.xlu0 %2197
        %2199 = vrot.lane.b32.xlu0 %v2196, 102
        %v2200 = vpop.permute.xlu0 %2199
        %v2201 = vsel %vm702, %v2198, %v2200
        %2203 = vst [vmem:[#allocation2 + $0x1a] sm:$0x1] %v2201
        %v2204 = vld [vmem:[%s380] sm:$0x3]
        %v2206 = vperm.slane %v2204, 0
        %v2207 = vperm.slane %v2204, 1
        %2208 = vrot.lane.b32.xlu0 %v2206, 101
        %v2209 = vpop.permute.xlu0 %2208
        %2210 = vrot.lane.b32.xlu0 %v2207, 101
        %v2211 = vpop.permute.xlu0 %2210
        %v2212 = vsel %vm714, %v2209, %v2211
        %2214 = vst [vmem:[#allocation2 + $0x1b] sm:$0x1] %v2212
        %v2215 = vld [vmem:[%s380] sm:$0x3]
        %v2217 = vperm.slane %v2215, 0
        %v2218 = vperm.slane %v2215, 1
        %2219 = vrot.lane.b32.xlu0 %v2217, 100
        %v2220 = vpop.permute.xlu0 %2219
        %2221 = vrot.lane.b32.xlu0 %v2218, 100
        %v2222 = vpop.permute.xlu0 %2221
        %v2223 = vsel %vm726, %v2220, %v2222
        %2225 = vst [vmem:[#allocation2 + $0x1c] sm:$0x1] %v2223
        %v2226 = vld [vmem:[%s380] sm:$0x3]
        %v2228 = vperm.slane %v2226, 0
        %v2229 = vperm.slane %v2226, 1
        %2230 = vrot.lane.b32.xlu0 %v2228, 99
        %v2231 = vpop.permute.xlu0 %2230
        %2232 = vrot.lane.b32.xlu0 %v2229, 99
        %v2233 = vpop.permute.xlu0 %2232
        %v2234 = vsel %vm738, %v2231, %v2233
        %2236 = vst [vmem:[#allocation2 + $0x1d] sm:$0x1] %v2234
        %v2237 = vld [vmem:[%s380] sm:$0x3]
        %v2239 = vperm.slane %v2237, 0
        %v2240 = vperm.slane %v2237, 1
        %2241 = vrot.lane.b32.xlu0 %v2239, 98
        %v2242 = vpop.permute.xlu0 %2241
        %2243 = vrot.lane.b32.xlu0 %v2240, 98
        %v2244 = vpop.permute.xlu0 %2243
        %v2245 = vsel %vm1438, %v2242, %v2244
        %2247 = vst [vmem:[#allocation2 + $0x1e] sm:$0x1] %v2245
        %v2248 = vld [vmem:[%s380] sm:$0x3]
        %v2250 = vperm.slane %v2248, 0
        %v2251 = vperm.slane %v2248, 1
        %2252 = vrot.lane.b32.xlu0 %v2250, 97
        %v2253 = vpop.permute.xlu0 %2252
        %2254 = vrot.lane.b32.xlu0 %v2251, 97
        %v2255 = vpop.permute.xlu0 %2254
        %v2256 = vsel %vm1450, %v2253, %v2255
        %2258 = vst [vmem:[#allocation2 + $0x1f] sm:$0x1] %v2256
        %v2259 = vld [vmem:[%s380] sm:$0x3]
        %v2261 = vperm.slane %v2259, 0
        %v2262 = vperm.slane %v2259, 1
        %2263 = vrot.lane.b32.xlu0 %v2261, 96
        %v2264 = vpop.permute.xlu0 %2263
        %2265 = vrot.lane.b32.xlu0 %v2262, 96
        %v2266 = vpop.permute.xlu0 %2265
        %v2267 = vsel %vm1462, %v2264, %v2266
        %2269 = vst [vmem:[#allocation2 + $0x20] sm:$0x1] %v2267
        %v2270 = vld [vmem:[%s380] sm:$0x3]
        %v2272 = vperm.slane %v2270, 0
        %v2273 = vperm.slane %v2270, 1
        %2274 = vrot.lane.b32.xlu0 %v2272, 95
        %v2275 = vpop.permute.xlu0 %2274
        %2276 = vrot.lane.b32.xlu0 %v2273, 95
        %v2277 = vpop.permute.xlu0 %2276
        %v2278 = vsel %vm1474, %v2275, %v2277
        %2280 = vst [vmem:[#allocation2 + $0x21] sm:$0x1] %v2278
        %v2281 = vld [vmem:[%s380] sm:$0x3]
        %v2283 = vperm.slane %v2281, 0
        %v2284 = vperm.slane %v2281, 1
        %2285 = vrot.lane.b32.xlu0 %v2283, 94
        %v2286 = vpop.permute.xlu0 %2285
        %2287 = vrot.lane.b32.xlu0 %v2284, 94
        %v2288 = vpop.permute.xlu0 %2287
        %v2289 = vsel %vm1486, %v2286, %v2288
        %2291 = vst [vmem:[#allocation2 + $0x22] sm:$0x1] %v2289
        %v2292 = vld [vmem:[%s380] sm:$0x3]
        %v2294 = vperm.slane %v2292, 0
        %v2295 = vperm.slane %v2292, 1
        %2296 = vrot.lane.b32.xlu0 %v2294, 93
        %v2297 = vpop.permute.xlu0 %2296
        %2298 = vrot.lane.b32.xlu0 %v2295, 93
        %v2299 = vpop.permute.xlu0 %2298
        %v2300 = vsel %vm1498, %v2297, %v2299
        %2302 = vst [vmem:[#allocation2 + $0x23] sm:$0x1] %v2300
        %v2303 = vld [vmem:[%s380] sm:$0x3]
        %v2305 = vperm.slane %v2303, 0
        %v2306 = vperm.slane %v2303, 1
        %2307 = vrot.lane.b32.xlu0 %v2305, 92
        %v2308 = vpop.permute.xlu0 %2307
        %2309 = vrot.lane.b32.xlu0 %v2306, 92
        %v2310 = vpop.permute.xlu0 %2309
        %v2311 = vsel %vm1510, %v2308, %v2310
        %2313 = vst [vmem:[#allocation2 + $0x24] sm:$0x1] %v2311
        %v2314 = vld [vmem:[%s380] sm:$0x3]
        %v2316 = vperm.slane %v2314, 0
        %v2317 = vperm.slane %v2314, 1
        %2318 = vrot.lane.b32.xlu0 %v2316, 91
        %v2319 = vpop.permute.xlu0 %2318
        %2320 = vrot.lane.b32.xlu0 %v2317, 91
        %v2321 = vpop.permute.xlu0 %2320
        %v2322 = vsel %vm1522, %v2319, %v2321
        %2324 = vst [vmem:[#allocation2 + $0x25] sm:$0x1] %v2322
        %v2325 = vld [vmem:[%s380] sm:$0x3]
        %v2327 = vperm.slane %v2325, 0
        %v2328 = vperm.slane %v2325, 1
        %2329 = vrot.lane.b32.xlu0 %v2327, 90
        %v2330 = vpop.permute.xlu0 %2329
        %2331 = vrot.lane.b32.xlu0 %v2328, 90
        %v2332 = vpop.permute.xlu0 %2331
        %v2333 = vsel %vm1534, %v2330, %v2332
        %2335 = vst [vmem:[#allocation2 + $0x26] sm:$0x1] %v2333
        %v2336 = vld [vmem:[%s380] sm:$0x3]
        %v2338 = vperm.slane %v2336, 0
        %v2339 = vperm.slane %v2336, 1
        %2340 = vrot.lane.b32.xlu0 %v2338, 89
        %v2341 = vpop.permute.xlu0 %2340
        %2342 = vrot.lane.b32.xlu0 %v2339, 89
        %v2343 = vpop.permute.xlu0 %2342
        %v2344 = vsel %vm1546, %v2341, %v2343
        %2346 = vst [vmem:[#allocation2 + $0x27] sm:$0x1] %v2344
        %v2347 = vld [vmem:[%s380] sm:$0x3]
        %v2349 = vperm.slane %v2347, 0
        %v2350 = vperm.slane %v2347, 1
        %2351 = vrot.lane.b32.xlu0 %v2349, 88
        %v2352 = vpop.permute.xlu0 %2351
        %2353 = vrot.lane.b32.xlu0 %v2350, 88
        %v2354 = vpop.permute.xlu0 %2353
        %vm2355 = vcmask 719872
        %v2356 = vsel %vm2355, %v2352, %v2354
        %2358 = vst [vmem:[#allocation2 + $0x28] sm:$0x1] %v2356
        %v2359 = vld [vmem:[%s380] sm:$0x3]
        %v2361 = vperm.slane %v2359, 0
        %v2362 = vperm.slane %v2359, 1
        %2363 = vrot.lane.b32.xlu0 %v2361, 87
        %v2364 = vpop.permute.xlu0 %2363
        %2365 = vrot.lane.b32.xlu0 %v2362, 87
        %v2366 = vpop.permute.xlu0 %2365
        %vm2367 = vcmask 711680
        %v2368 = vsel %vm2367, %v2364, %v2366
        %2370 = vst [vmem:[#allocation2 + $0x29] sm:$0x1] %v2368
        %v2371 = vld [vmem:[%s380] sm:$0x3]
        %v2373 = vperm.slane %v2371, 0
        %v2374 = vperm.slane %v2371, 1
        %2375 = vrot.lane.b32.xlu0 %v2373, 86
        %v2376 = vpop.permute.xlu0 %2375
        %2377 = vrot.lane.b32.xlu0 %v2374, 86
        %v2378 = vpop.permute.xlu0 %2377
        %vm2379 = vcmask 703488
        %v2380 = vsel %vm2379, %v2376, %v2378
        %2382 = vst [vmem:[#allocation2 + $0x2a] sm:$0x1] %v2380
        %v2383 = vld [vmem:[%s380] sm:$0x3]
        %v2385 = vperm.slane %v2383, 0
        %v2386 = vperm.slane %v2383, 1
        %2387 = vrot.lane.b32.xlu0 %v2385, 85
        %v2388 = vpop.permute.xlu0 %2387
        %2389 = vrot.lane.b32.xlu0 %v2386, 85
        %v2390 = vpop.permute.xlu0 %2389
        %vm2391 = vcmask 695296
        %v2392 = vsel %vm2391, %v2388, %v2390
        %2394 = vst [vmem:[#allocation2 + $0x2b] sm:$0x1] %v2392
        %v2395 = vld [vmem:[%s380] sm:$0x3]
        %v2397 = vperm.slane %v2395, 0
        %v2398 = vperm.slane %v2395, 1
        %2399 = vrot.lane.b32.xlu0 %v2397, 84
        %v2400 = vpop.permute.xlu0 %2399
        %2401 = vrot.lane.b32.xlu0 %v2398, 84
        %v2402 = vpop.permute.xlu0 %2401
        %vm2403 = vcmask 687104
        %v2404 = vsel %vm2403, %v2400, %v2402
        %2406 = vst [vmem:[#allocation2 + $0x2c] sm:$0x1] %v2404
        %v2407 = vld [vmem:[%s380] sm:$0x3]
        %v2409 = vperm.slane %v2407, 0
        %v2410 = vperm.slane %v2407, 1
        %2411 = vrot.lane.b32.xlu0 %v2409, 83
        %v2412 = vpop.permute.xlu0 %2411
        %2413 = vrot.lane.b32.xlu0 %v2410, 83
        %v2414 = vpop.permute.xlu0 %2413
        %vm2415 = vcmask 678912
        %v2416 = vsel %vm2415, %v2412, %v2414
        %2418 = vst [vmem:[#allocation2 + $0x2d] sm:$0x1] %v2416
        %v2419 = vld [vmem:[%s380] sm:$0x3]
        %v2421 = vperm.slane %v2419, 0
        %v2422 = vperm.slane %v2419, 1
        %2423 = vrot.lane.b32.xlu0 %v2421, 82
        %v2424 = vpop.permute.xlu0 %2423
        %2425 = vrot.lane.b32.xlu0 %v2422, 82
        %v2426 = vpop.permute.xlu0 %2425
        %vm2427 = vcmask 670720
        %v2428 = vsel %vm2427, %v2424, %v2426
        %2430 = vst [vmem:[#allocation2 + $0x2e] sm:$0x1] %v2428
        %v2431 = vld [vmem:[%s380] sm:$0x3]
        %v2433 = vperm.slane %v2431, 0
        %v2434 = vperm.slane %v2431, 1
        %2435 = vrot.lane.b32.xlu0 %v2433, 81
        %v2436 = vpop.permute.xlu0 %2435
        %2437 = vrot.lane.b32.xlu0 %v2434, 81
        %v2438 = vpop.permute.xlu0 %2437
        %vm2439 = vcmask 662528
        %v2440 = vsel %vm2439, %v2436, %v2438
        %2442 = vst [vmem:[#allocation2 + $0x2f] sm:$0x1] %v2440
        %v2443 = vld [vmem:[%s380] sm:$0x3]
        %v2445 = vperm.slane %v2443, 0
        %v2446 = vperm.slane %v2443, 1
        %2447 = vrot.lane.b32.xlu0 %v2445, 80
        %v2448 = vpop.permute.xlu0 %2447
        %2449 = vrot.lane.b32.xlu0 %v2446, 80
        %v2450 = vpop.permute.xlu0 %2449
        %vm2451 = vcmask 654336
        %v2452 = vsel %vm2451, %v2448, %v2450
        %2454 = vst [vmem:[#allocation2 + $0x30] sm:$0x1] %v2452
        %v2455 = vld [vmem:[%s380] sm:$0x3]
        %v2457 = vperm.slane %v2455, 0
        %v2458 = vperm.slane %v2455, 1
        %2459 = vrot.lane.b32.xlu0 %v2457, 79
        %v2460 = vpop.permute.xlu0 %2459
        %2461 = vrot.lane.b32.xlu0 %v2458, 79
        %v2462 = vpop.permute.xlu0 %2461
        %vm2463 = vcmask 646144
        %v2464 = vsel %vm2463, %v2460, %v2462
        %2466 = vst [vmem:[#allocation2 + $0x31] sm:$0x1] %v2464
        %v2467 = vld [vmem:[%s7] sm:$0xf]
        %v2468 = vld [vmem:[%s7 + $0x4] sm:$0xf]
        %v2469 = vld [vmem:[%s7 + $0x8] sm:$0xf]
        %v2470 = vld [vmem:[%s7 + $0xc] sm:$0xf]
        %v2471 = vld [vmem:[%s7 + $0x10] sm:$0xf]
        %v2472 = vld [vmem:[%s7 + $0x14] sm:$0xf]
        %v2473 = vld [vmem:[%s7 + $0x18] sm:$0xf]
        %v2474 = vld [vmem:[%s7 + $0x1c] sm:$0xf]
        %v2475 = vld [vmem:[%s7 + $0x20] sm:$0xf]
        %v2476 = vld [vmem:[%s7 + $0x24] sm:$0xf]
        %v2477 = vld [vmem:[%s7 + $0x28] sm:$0xf]
        %v2478 = vld [vmem:[%s7 + $0x2c] sm:$0xf]
        %v2479 = vld [vmem:[%s7 + $0x30] sm:$0xf]
        %v2480 = vld [vmem:[%s7 + $0x34] sm:$0xf]
        %v2481 = vld [vmem:[%s7 + $0x38] sm:$0xf]
        %v2482 = vld [vmem:[%s7 + $0x3c] sm:$0xf]
        %v2483 = vld [vmem:[#allocation2] sm:$0xff]
        %v2484 = vld [vmem:[#allocation2 + $0x8] sm:$0xff]
        %v2485 = vld [vmem:[#allocation2 + $0x10] sm:$0xff]
        %v2486 = vld [vmem:[#allocation2 + $0x18] sm:$0xff]
        %v2487 = vld [vmem:[#allocation2 + $0x20] sm:$0xff]
        %v2488 = vld [vmem:[#allocation2 + $0x28] sm:$0xff]
        %v2489 = vld [vmem:[#allocation2 + $0x30] sm:$0xff]
        %v2490 = vld [vmem:[#allocation2 + $0x38] sm:$0xff]
        %v2491 = vpack.c.bf16 %v2484, %v2483
        %v2492 = vpack.c.bf16 %v2486, %v2485
        %v2493 = vpack.c.bf16 %v2488, %v2487
        %v2494 = vpack.c.bf16 %v2490, %v2489
        %v2495 = vld [vmem:[%s8] sm:$0xff]
        %v2496 = vld [vmem:[%s8 + $0x8] sm:$0xff]
        %v2497 = vld [vmem:[%s8 + $0x10] sm:$0xff]
        %v2498 = vld [vmem:[%s8 + $0x18] sm:$0xff]
        %v2499 = vld [vmem:[%s8 + $0x20] sm:$0xff]
        %v2500 = vld [vmem:[%s8 + $0x28] sm:$0xff]
        %v2501 = vld [vmem:[%s8 + $0x30] sm:$0xff]
        %v2502 = vld [vmem:[%s8 + $0x38] sm:$0xff]
        %v2503 = vld [vmem:[%s8 + $0x40] sm:$0xff]
        %v2504 = vld [vmem:[%s8 + $0x48] sm:$0xff]
        %v2505 = vld [vmem:[%s8 + $0x50] sm:$0xff]
        %v2506 = vld [vmem:[%s8 + $0x58] sm:$0xff]
        %v2507 = vld [vmem:[%s8 + $0x60] sm:$0xff]
        %v2508 = vld [vmem:[%s8 + $0x68] sm:$0xff]
        %v2509 = vld [vmem:[%s8 + $0x70] sm:$0xff]
        %v2510 = vld [vmem:[%s8 + $0x78] sm:$0xff]
        %2512 = vset.pattern.permute.xlu0 0
        %2513 = vperm.xlu0 %2512, %v2495
        %v2514 = vpop.permute.xlu0 %2513
        %2517 = vset.pattern.permute.xlu0 0
        %2518 = vperm.xlu0 %2517, %v2496
        %v2519 = vpop.permute.xlu0 %2518
        %2522 = vset.pattern.permute.xlu0 0
        %2523 = vperm.xlu0 %2522, %v2497
        %v2524 = vpop.permute.xlu0 %2523
        %2527 = vset.pattern.permute.xlu0 0
        %2528 = vperm.xlu0 %2527, %v2498
        %v2529 = vpop.permute.xlu0 %2528
        %2532 = vset.pattern.permute.xlu0 0
        %2533 = vperm.xlu0 %2532, %v2499
        %v2534 = vpop.permute.xlu0 %2533
        %2537 = vset.pattern.permute.xlu0 0
        %2538 = vperm.xlu0 %2537, %v2500
        %v2539 = vpop.permute.xlu0 %2538
        %2542 = vset.pattern.permute.xlu0 0
        %2543 = vperm.xlu0 %2542, %v2501
        %v2544 = vpop.permute.xlu0 %2543
        %2547 = vset.pattern.permute.xlu0 0
        %2548 = vperm.xlu0 %2547, %v2502
        %v2549 = vpop.permute.xlu0 %2548
        %2552 = vset.pattern.permute.xlu0 0
        %2553 = vperm.xlu0 %2552, %v2503
        %v2554 = vpop.permute.xlu0 %2553
        %2557 = vset.pattern.permute.xlu0 0
        %2558 = vperm.xlu0 %2557, %v2504
        %v2559 = vpop.permute.xlu0 %2558
        %2562 = vset.pattern.permute.xlu0 0
        %2563 = vperm.xlu0 %2562, %v2505
        %v2564 = vpop.permute.xlu0 %2563
        %2567 = vset.pattern.permute.xlu0 0
        %2568 = vperm.xlu0 %2567, %v2506
        %v2569 = vpop.permute.xlu0 %2568
        %2572 = vset.pattern.permute.xlu0 0
        %2573 = vperm.xlu0 %2572, %v2507
        %v2574 = vpop.permute.xlu0 %2573
        %2577 = vset.pattern.permute.xlu0 0
        %2578 = vperm.xlu0 %2577, %v2508
        %v2579 = vpop.permute.xlu0 %2578
        %2582 = vset.pattern.permute.xlu0 0
        %2583 = vperm.xlu0 %2582, %v2509
        %v2584 = vpop.permute.xlu0 %2583
        %2587 = vset.pattern.permute.xlu0 0
        %2588 = vperm.xlu0 %2587, %v2510
        %v2589 = vpop.permute.xlu0 %2588
        %v2607 = vunpack.c.l.b16 %v2467
        %v2608 = vunpack.c.l.b16 %v2468
        %v2609 = vunpack.c.l.b16 %v2469
        %v2610 = vunpack.c.l.b16 %v2470
        %v2611 = vunpack.c.l.b16 %v2471
        %v2612 = vunpack.c.l.b16 %v2472
        %v2613 = vunpack.c.l.b16 %v2473
        %v2614 = vunpack.c.l.b16 %v2474
        %v2615 = vunpack.c.l.b16 %v2475
        %v2616 = vunpack.c.l.b16 %v2476
        %v2617 = vunpack.c.l.b16 %v2477
        %v2618 = vunpack.c.l.b16 %v2478
        %v2619 = vunpack.c.l.b16 %v2479
        %v2620 = vunpack.c.l.b16 %v2480
        %v2621 = vunpack.c.l.b16 %v2481
        %v2622 = vunpack.c.l.b16 %v2482
        %v2623 = vpack.c.b16 %v2608, %v2607
        %v2624 = vpack.c.b16 %v2610, %v2609
        %v2625 = vpack.c.b16 %v2612, %v2611
        %v2626 = vpack.c.b16 %v2614, %v2613
        %v2627 = vpack.c.b16 %v2616, %v2615
        %v2628 = vpack.c.b16 %v2618, %v2617
        %v2629 = vpack.c.b16 %v2620, %v2619
        %v2630 = vpack.c.b16 %v2622, %v2621
        %v2632 = vsel %vm906, %v2623, 0
        %v2635 = vsel %vm906, %v2624, 0
        %v2638 = vsel %vm906, %v2625, 0
        %v2641 = vsel %vm906, %v2626, 0
        %v2644 = vsel %vm906, %v2627, 0
        %v2647 = vsel %vm906, %v2628, 0
        %v2650 = vsel %vm906, %v2629, 0
        %v2653 = vsel %vm906, %v2630, 0
        %2655 = vmatpush.bf16.msra.mxu0 0
        %2656 = vmatpush.bf16.msra.mxu0 0
        %2657 = vmatpush.bf16.msra.mxu0 0
        %2658 = vmatpush.bf16.msra.mxu0 0
        %2659 = vmatpush.bf16.msra.mxu0 %v2494
        %2660 = vmatpush.bf16.msra.mxu0 %v2493
        %2661 = vmatpush.bf16.msra.mxu0 %v2492
        %2662 = vmatpush.bf16.msra.mxu0 %v2491
        %2663 = vmatmul.bf16.gmra.mxu0 %v2632
        %v2664 = vpop.f32.mrf.mxu0
        %v2665 = vadd.f32 %v2514, %v2664
        %v2666 = vpop.f32.mrf.mxu0
        %v2667 = vadd.f32 %v2519, %v2666
        %2668 = vmatmul.bf16.gmra.mxu0 %v2635
        %v2669 = vpop.f32.mrf.mxu0
        %v2670 = vadd.f32 %v2524, %v2669
        %v2671 = vpop.f32.mrf.mxu0
        %v2672 = vadd.f32 %v2529, %v2671
        %2673 = vmatmul.bf16.gmra.mxu0 %v2638
        %v2674 = vpop.f32.mrf.mxu0
        %v2675 = vadd.f32 %v2534, %v2674
        %v2676 = vpop.f32.mrf.mxu0
        %v2677 = vadd.f32 %v2539, %v2676
        %2678 = vmatmul.bf16.gmra.mxu0 %v2641
        %v2679 = vpop.f32.mrf.mxu0
        %v2680 = vadd.f32 %v2544, %v2679
        %v2681 = vpop.f32.mrf.mxu0
        %v2682 = vadd.f32 %v2549, %v2681
        %2683 = vmatmul.bf16.gmra.mxu0 %v2644
        %v2684 = vpop.f32.mrf.mxu0
        %v2685 = vadd.f32 %v2554, %v2684
        %v2686 = vpop.f32.mrf.mxu0
        %v2687 = vadd.f32 %v2559, %v2686
        %2688 = vmatmul.bf16.gmra.mxu0 %v2647
        %v2689 = vpop.f32.mrf.mxu0
        %v2690 = vadd.f32 %v2564, %v2689
        %v2691 = vpop.f32.mrf.mxu0
        %v2692 = vadd.f32 %v2569, %v2691
        %2693 = vmatmul.bf16.gmra.mxu0 %v2650
        %v2694 = vpop.f32.mrf.mxu0
        %v2695 = vadd.f32 %v2574, %v2694
        %v2696 = vpop.f32.mrf.mxu0
        %v2697 = vadd.f32 %v2579, %v2696
        %2698 = vmatmul.bf16.gmra.mxu0 %v2653
        %v2699 = vpop.f32.mrf.mxu0
        %v2700 = vadd.f32 %v2584, %v2699
        %v2701 = vpop.f32.mrf.mxu0
        %v2702 = vadd.f32 %v2589, %v2701
        %2703 = vdwg.mxu0
        %v2704 = vmax.f32 %v2665, 0.0
        %v2705 = vmax.f32 %v2667, 0.0
        %v2706 = vmax.f32 %v2670, 0.0
        %v2707 = vmax.f32 %v2672, 0.0
        %v2708 = vmax.f32 %v2675, 0.0
        %v2709 = vmax.f32 %v2677, 0.0
        %v2710 = vmax.f32 %v2680, 0.0
        %v2711 = vmax.f32 %v2682, 0.0
        %v2712 = vmax.f32 %v2685, 0.0
        %v2713 = vmax.f32 %v2687, 0.0
        %v2714 = vmax.f32 %v2690, 0.0
        %v2715 = vmax.f32 %v2692, 0.0
        %v2716 = vmax.f32 %v2695, 0.0
        %v2717 = vmax.f32 %v2697, 0.0
        %v2718 = vmax.f32 %v2700, 0.0
        %v2719 = vmax.f32 %v2702, 0.0
        %vm2720 = vcmp.lt.s32.totalorder %v383, 15
        %v2721 = vsel %vm2720, 1, 0
        %vm2722 = vcmp.eq.s32.totalorder %v2721, 1
        %v2723 = vsel %vm2722, %v2704, 0.0
        %v2724 = vsel %vm2722, %v2705, 0.0
        %v2725 = vsel %vm2722, %v2706, 0.0
        %v2726 = vsel %vm2722, %v2707, 0.0
        %v2727 = vsel %vm2722, %v2708, 0.0
        %v2728 = vsel %vm2722, %v2709, 0.0
        %v2729 = vsel %vm2722, %v2710, 0.0
        %v2730 = vsel %vm2722, %v2711, 0.0
        %v2731 = vsel %vm2722, %v2712, 0.0
        %v2732 = vsel %vm2722, %v2713, 0.0
        %v2733 = vsel %vm2722, %v2714, 0.0
        %v2734 = vsel %vm2722, %v2715, 0.0
        %v2735 = vsel %vm2722, %v2716, 0.0
        %v2736 = vsel %vm2722, %v2717, 0.0
        %v2737 = vsel %vm2722, %v2718, 0.0
        %v2738 = vsel %vm2722, %v2719, 0.0
        %2739 = vmax.xlane.f32.xlu0 %v2723
        %v2740 = vpop.xlane.xlu0 %2739
        %2741 = vmax.xlane.f32.xlu0 %v2724
        %v2742 = vpop.xlane.xlu0 %2741
        %2743 = vmax.xlane.f32.xlu0 %v2725
        %v2744 = vpop.xlane.xlu0 %2743
        %2745 = vmax.xlane.f32.xlu0 %v2726
        %v2746 = vpop.xlane.xlu0 %2745
        %2747 = vmax.xlane.f32.xlu0 %v2727
        %v2748 = vpop.xlane.xlu0 %2747
        %2749 = vmax.xlane.f32.xlu0 %v2728
        %v2750 = vpop.xlane.xlu0 %2749
        %2751 = vmax.xlane.f32.xlu0 %v2729
        %v2752 = vpop.xlane.xlu0 %2751
        %2753 = vmax.xlane.f32.xlu0 %v2730
        %v2754 = vpop.xlane.xlu0 %2753
        %2755 = vmax.xlane.f32.xlu0 %v2731
        %v2756 = vpop.xlane.xlu0 %2755
        %2757 = vmax.xlane.f32.xlu0 %v2732
        %v2758 = vpop.xlane.xlu0 %2757
        %2759 = vmax.xlane.f32.xlu0 %v2733
        %v2760 = vpop.xlane.xlu0 %2759
        %2761 = vmax.xlane.f32.xlu0 %v2734
        %v2762 = vpop.xlane.xlu0 %2761
        %2763 = vmax.xlane.f32.xlu0 %v2735
        %v2764 = vpop.xlane.xlu0 %2763
        %2765 = vmax.xlane.f32.xlu0 %v2736
        %v2766 = vpop.xlane.xlu0 %2765
        %2767 = vmax.xlane.f32.xlu0 %v2737
        %v2768 = vpop.xlane.xlu0 %2767
        %2769 = vmax.xlane.f32.xlu0 %v2738
        %v2770 = vpop.xlane.xlu0 %2769
        %v2771 = vld [vmem:[%s9] sm:$0xff]
        %v2772 = vld [vmem:[%s9 + $0x8] sm:$0xff]
        %v2773 = vld [vmem:[%s9 + $0x10] sm:$0xff]
        %v2774 = vld [vmem:[%s9 + $0x18] sm:$0xff]
        %v2775 = vld [vmem:[%s9 + $0x20] sm:$0xff]
        %v2776 = vld [vmem:[%s9 + $0x28] sm:$0xff]
        %v2777 = vld [vmem:[%s9 + $0x30] sm:$0xff]
        %v2778 = vld [vmem:[%s9 + $0x38] sm:$0xff]
        %v2779 = vld [vmem:[%s9 + $0x40] sm:$0xff]
        %v2780 = vld [vmem:[%s9 + $0x48] sm:$0xff]
        %v2781 = vld [vmem:[%s9 + $0x50] sm:$0xff]
        %v2782 = vld [vmem:[%s9 + $0x58] sm:$0xff]
        %v2783 = vld [vmem:[%s9 + $0x60] sm:$0xff]
        %v2784 = vld [vmem:[%s9 + $0x68] sm:$0xff]
        %v2785 = vld [vmem:[%s9 + $0x70] sm:$0xff]
        %v2786 = vld [vmem:[%s9 + $0x78] sm:$0xff]
        %v2787 = vmul.f32 %v2740, %v2771
        %v2788 = vmul.f32 %v2742, %v2772
        %v2789 = vmul.f32 %v2744, %v2773
        %v2790 = vmul.f32 %v2746, %v2774
        %v2791 = vmul.f32 %v2748, %v2775
        %v2792 = vmul.f32 %v2750, %v2776
        %v2793 = vmul.f32 %v2752, %v2777
        %v2794 = vmul.f32 %v2754, %v2778
        %v2795 = vmul.f32 %v2756, %v2779
        %v2796 = vmul.f32 %v2758, %v2780
        %v2797 = vmul.f32 %v2760, %v2781
        %v2798 = vmul.f32 %v2762, %v2782
        %v2799 = vmul.f32 %v2764, %v2783
        %v2800 = vmul.f32 %v2766, %v2784
        %v2801 = vmul.f32 %v2768, %v2785
        %v2802 = vmul.f32 %v2770, %v2786
        %v2803 = vadd.f32 %v2787, %v2788
        %v2804 = vadd.f32 %v2803, %v2789
        %v2805 = vadd.f32 %v2804, %v2790
        %v2806 = vadd.f32 %v2805, %v2791
        %v2807 = vadd.f32 %v2806, %v2792
        %v2808 = vadd.f32 %v2807, %v2793
        %v2809 = vadd.f32 %v2808, %v2794
        %v2810 = vadd.f32 %v2809, %v2795
        %v2811 = vadd.f32 %v2810, %v2796
        %v2812 = vadd.f32 %v2811, %v2797
        %v2813 = vadd.f32 %v2812, %v2798
        %v2814 = vadd.f32 %v2813, %v2799
        %v2815 = vadd.f32 %v2814, %v2800
        %v2816 = vadd.f32 %v2815, %v2801
        %v2817 = vadd.f32 %v2816, %v2802
        %v2818 = vrot.slane %v2817, 4
        %v2819 = vadd.f32 %v2817, %v2818
        %v2820 = vrot.slane %v2819, 2
        %v2821 = vadd.f32 %v2819, %v2820
        %v2822 = vrot.slane %v2821, 1
        %v2823 = vadd.f32 %v2821, %v2822
        %v2824 = vadd.f32 %v1907, %v2823
        %v2825 = vld [vmem:[%s10] sm:$0x1]
        %v2826 = vadd.f32 %v2824, %v2825
        %2827 = vst [vmem:[%s376] sm:$0x1] %v2826
        %s2828 = sand.u32 %s269, 1
        %s2829 = scalar_lea.sflag [#allocation4], %s2828
        %s2830 = sand.u32 %s269, 1
        %s2831 = scalar_lea.vmem [#allocation3], %s2830
        // Predicated region
        $region65: #{tpu_custom_call.1} parent=63 // pred_check
          %p2832 = pneg %p279
        $region66: #{tpu_custom_call.1} parent=63 // pred_check_branch
          %2834 = sbr.rel (%p2832) target = $region68
        $region67: #{tpu_custom_call.1} parent=63 // pred_region
          %2836 = vsyncadd %s2829, 0
          %s2837 = scalar_lea.hbm %s11, %s25
          %s2839 = sshll.u32 %s2831, 4
          %s2840 = int_to_ptr.vmem [resolvable:$true] %s2839
          %s2841 = sshll.u32 %s2837, 4
          %s2842 = int_to_ptr.hbm [resolvable:$true] %s2841
          %2844 = dma.vmem_to_hbm [thread:$0]  %s2840, 16, %s2842, %s2829
        $region68: #{tpu_custom_call.1} parent=63 // pred_fallthru
          _
      $region64: #{tpu_custom_call.1} parent=5 // pred_fallthru
        _
      %p2845 = scmp.le.s32.totalorder 2, %s20
      // Predicated region
      $region69: #{tpu_custom_call.1} parent=5 // pred_check
        %p2846 = pneg %p2845
      $region70: #{tpu_custom_call.1} parent=5 // pred_check_branch
        %2848 = sbr.rel (%p2846) target = $region72
      $region71: #{tpu_custom_call.1} parent=5 // pred_region
        %s2849 = ssub.s32 %s20, 2
        // Predicated region
        $region73: #{tpu_custom_call.1} parent=71 // pred_check
          %p2850 = pneg %p285
        $region74: #{tpu_custom_call.1} parent=71 // pred_check_branch
          %2852 = sbr.rel (%p2850) target = $region76
        $region75: #{tpu_custom_call.1} parent=71 // pred_region
          %s2853 = sand.u32 %s270, 1
          %s2854 = scalar_lea.sflag [#allocation4], %s2853
          %s2855 = sand.u32 %s270, 1
          %s2856 = scalar_lea.vmem [#allocation3], %s2855
          %2858 = dma.done %s2854, 16
        $region76: #{tpu_custom_call.1} parent=71 // pred_fallthru
          _
      $region72: #{tpu_custom_call.1} parent=5 // pred_fallthru
        _
    $region6: #{tpu_custom_call.1} parent=1 // loop_footer
      %s24 = sadd.s32 1, %s20
    $region7: #{tpu_custom_call.1} parent=1 // loop_footer_branch
      %19 = sbr.rel target = $region3
    $region8: #{tpu_custom_call.1} parent=1 // loop_exit
      _
    %2859 = vsyncpa [#allocation4], 1
    %s2860 = scalar_lea.sflag [#allocation4], 1
    %2861 = vsyncpa %s2860, 1

</llo_original>
